<compile_context>
chip_gen: v5e
topology: v5e:2x2
jax: 0.10.0
libtpu: 0.0.40
codegen_flags: <defaults>
</compile_context>

<pallas_src>
import jax
import jax.numpy as jnp
from jax.experimental import pallas as pl
from jax.experimental.pallas import tpu as pltpu


def _round_up(x, m):
    return (x + m - 1) // m * m


# ------------------------- tiled dense (MXU) kernel ------------------------- #

def _dense_kernel(x_ref, w_ref, b_ref, o_ref, acc_ref):
    @pl.when(pl.program_id(2) == 0)
    def _():
        acc_ref[...] = jnp.zeros_like(acc_ref)

    acc_ref[...] += jnp.dot(
        x_ref[...].astype(jnp.bfloat16),
        w_ref[...].astype(jnp.bfloat16),
        preferred_element_type=jnp.float32,
    )

    @pl.when(pl.program_id(2) == pl.num_programs(2) - 1)
    def _():
        o_ref[...] = acc_ref[...] + b_ref[...]


def dense(x, w, b):
    """x: (M, K), w: (K, N), b: (N,) -> (M, N) f32. Tiled, bf16 MXU path."""
    M, K = x.shape
    Kw, N = w.shape
    assert K == Kw
    TM, TN, TK = 256, 512, 512
    Mp, Kp, Np = _round_up(M, 8), _round_up(K, 128), _round_up(N, 128)
    tm = Mp if Mp <= TM else TM
    tn = Np if Np <= TN else TN
    tk = Kp if Kp <= TK else TK
    Mp, Np, Kp = _round_up(Mp, tm), _round_up(Np, tn), _round_up(Kp, tk)

    xp = jnp.pad(x, ((0, Mp - M), (0, Kp - K)))
    wp = jnp.pad(w, ((0, Kp - K), (0, Np - N)))
    bp = jnp.pad(b.astype(jnp.float32).reshape(1, N), ((0, 0), (0, Np - N)))

    out = pl.pallas_call(
        _dense_kernel,
        grid=(Mp // tm, Np // tn, Kp // tk),
        in_specs=[
            pl.BlockSpec((tm, tk), lambda i, j, k: (i, k)),
            pl.BlockSpec((tk, tn), lambda i, j, k: (k, j)),
            pl.BlockSpec((1, tn), lambda i, j, k: (0, j)),
        ],
        out_specs=pl.BlockSpec((tm, tn), lambda i, j, k: (i, j)),
        out_shape=jax.ShapeDtypeStruct((Mp, Np), jnp.float32),
        scratch_shapes=[pltpu.VMEM((tm, tn), jnp.float32)],
        compiler_params=pltpu.CompilerParams(
            dimension_semantics=("parallel", "parallel", "arbitrary")),
    )(xp, wp, bp)
    return out[:M, :N]


# --------- fully fused kernel: input proj + LSTM recurrence + fc_out --------- #

def _fused_decoder_kernel(x_ref, wih_ref, b_ref, whh_ref, wout_ref, bout_ref,
                          out_ref, gx_scr, h_scr, c_scr):
    # x_ref:    (T*Bp, Inp)  f32   (time-major, batch padded to 8, input padded to 128)
    # wih_ref:  (Inp, 4*Hp)  bf16
    # b_ref:    (1, 4*Hp)    f32   (b_ih + b_hh)
    # whh_ref:  (Hp, 4*Hp)   bf16
    # wout_ref: (Hp, Vp)     bf16
    # bout_ref: (1, Vp)      f32
    # out_ref:  (T*Bp, Vp)   f32
    Bp, Hp = h_scr.shape
    T = x_ref.shape[0] // Bp

    # Hoisted input projection: one MXU matmul covering every timestep.
    gx_scr[...] = (
        jnp.dot(x_ref[...].astype(jnp.bfloat16), wih_ref[...],
                preferred_element_type=jnp.float32) + b_ref[...])

    h_scr[...] = jnp.zeros_like(h_scr)
    c_scr[...] = jnp.zeros_like(c_scr)

    @pl.loop(0, T, unroll=(T <= 32))
    def _(t):
        h = h_scr[...]
        c = c_scr[...]
        gates = gx_scr[pl.ds(t * Bp, Bp), :] + jnp.dot(
            h.astype(jnp.bfloat16), whh_ref[...],
            preferred_element_type=jnp.float32)            # (Bp, 4*Hp)
        # PyTorch gate order i, f, g, o; Hp is a 128-multiple -> aligned slices
        i = jax.nn.sigmoid(gates[:, 0 * Hp:1 * Hp])
        f = jax.nn.sigmoid(gates[:, 1 * Hp:2 * Hp])
        g = jnp.tanh(gates[:, 2 * Hp:3 * Hp])
        o = jax.nn.sigmoid(gates[:, 3 * Hp:4 * Hp])
        c_new = f * c + i * g
        h_new = o * jnp.tanh(c_new)
        c_scr[...] = c_new
        h_scr[...] = h_new
        out_ref[pl.ds(t * Bp, Bp), :] = (
            jnp.dot(h_new.astype(jnp.bfloat16), wout_ref[...],
                    preferred_element_type=jnp.float32) + bout_ref[...])


def fused_decoder(x_2d, w_ih, b, w_hh, w_out, b_out, Bp):
    """x_2d: (T*Bp, Inp) -> logits (T*Bp, Vp), single pallas_call."""
    TB, _ = x_2d.shape
    Hp = w_hh.shape[0]
    Vp = w_out.shape[1]
    return pl.pallas_call(
        _fused_decoder_kernel,
        out_shape=jax.ShapeDtypeStruct((TB, Vp), jnp.float32),
        scratch_shapes=[
            pltpu.VMEM((TB, 4 * Hp), jnp.float32),   # gate pre-activations
            pltpu.VMEM((Bp, Hp), jnp.float32),       # h carry
            pltpu.VMEM((Bp, Hp), jnp.float32),       # c carry
        ],
    )(x_2d, w_ih, b.reshape(1, -1), w_hh, w_out, b_out.reshape(1, -1))


# -------- fallback: LSTM recurrence + fc_out on precomputed projections ------ #

def _lstm_fc_kernel(gx_ref, whh_ref, wout_ref, bout_ref, out_ref, h_scr, c_scr):
    # gx_ref: (T, Bp, 4*Hp) f32 -- precomputed x @ W_ih + (b_ih + b_hh)
    T = gx_ref.shape[0]
    Hp = h_scr.shape[-1]

    h_scr[...] = jnp.zeros_like(h_scr)
    c_scr[...] = jnp.zeros_like(c_scr)

    @pl.loop(0, T, unroll=(T <= 16))
    def _(t):
        h = h_scr[...]
        c = c_scr[...]
        gates = gx_ref[t] + jnp.dot(
            h.astype(jnp.bfloat16), whh_ref[...],
            preferred_element_type=jnp.float32)
        i = jax.nn.sigmoid(gates[:, 0 * Hp:1 * Hp])
        f = jax.nn.sigmoid(gates[:, 1 * Hp:2 * Hp])
        g = jnp.tanh(gates[:, 2 * Hp:3 * Hp])
        o = jax.nn.sigmoid(gates[:, 3 * Hp:4 * Hp])
        c_new = f * c + i * g
        h_new = o * jnp.tanh(c_new)
        c_scr[...] = c_new
        h_scr[...] = h_new
        out_ref[t] = (
            jnp.dot(h_new.astype(jnp.bfloat16), wout_ref[...],
                    preferred_element_type=jnp.float32) + bout_ref[...])


def lstm_fc(gx_tbg, w_hh, w_out, b_out):
    T, Bp, _ = gx_tbg.shape
    Hp = w_hh.shape[0]
    Vp = w_out.shape[1]
    return pl.pallas_call(
        _lstm_fc_kernel,
        out_shape=jax.ShapeDtypeStruct((T, Bp, Vp), jnp.float32),
        scratch_shapes=[
            pltpu.VMEM((Bp, Hp), jnp.float32),
            pltpu.VMEM((Bp, Hp), jnp.float32),
        ],
    )(gx_tbg, w_hh, w_out, b_out.reshape(1, Vp))


# ------------------------------ model wrapper ------------------------------ #

class DecoderRNNV2Pallas:
    def __init__(self, embed_size, hidden_size, vocab_size, n_features, seed=0):
        self.embed_size = embed_size
        self.hidden_size = hidden_size
        self.vocab_size = vocab_size
        self.n_features = n_features

        E, H, V, F = embed_size, hidden_size, vocab_size, n_features
        In = F + E                                # torch.cat((features, embed), dim=2)
        self.In = In
        self.Hp = _round_up(H, 128)
        self.Inp = _round_up(In, 128)
        self.Vp = _round_up(V, 128)

        key = jax.random.PRNGKey(seed)
        ks = jax.random.split(key, 8)

        def init(k, shape, scale=0.1):
            return scale * jax.random.normal(k, shape, jnp.float32)

        # nn.Embedding(vocab_size, embed_size)
        self.embed_table = init(ks[0], (V, E), scale=1.0)

        # nn.LSTM(input_size=E+F, hidden_size=H, num_layers=1, batch_first=True)
        # synthetic weights; b = b_ih + b_hh combined, PyTorch gate order i,f,g,o
        w_ih = init(ks[1], (In, 4 * H))
        w_hh = init(ks[2], (H, 4 * H))
        b = init(ks[3], (4 * H,), scale=0.01) + init(ks[4], (4 * H,), scale=0.01)

        # nn.Linear(H, V)
        w_out = init(ks[5], (H, V))
        b_out = init(ks[6], (V,), scale=0.01)

        # Embed real weights into zero-padded, lane-aligned buffers.
        # Padded gate columns are all-zero => padded hidden units stay exactly 0.
        Hp, Inp, Vp = self.Hp, self.Inp, self.Vp
        w_ih_p = jnp.zeros((Inp, 4 * Hp), jnp.float32)
        w_hh_p = jnp.zeros((Hp, 4 * Hp), jnp.float32)
        b_p = jnp.zeros((4 * Hp,), jnp.float32)
        for g in range(4):
            w_ih_p = w_ih_p.at[:In, g * Hp:g * Hp + H].set(w_ih[:, g * H:(g + 1) * H])
            w_hh_p = w_hh_p.at[:H, g * Hp:g * Hp + H].set(w_hh[:, g * H:(g + 1) * H])
            b_p = b_p.at[g * Hp:g * Hp + H].set(b[g * H:(g + 1) * H])
        w_out_p = jnp.zeros((Hp, Vp), jnp.float32).at[:H, :V].set(w_out)
        b_out_p = jnp.zeros((Vp,), jnp.float32).at[:V].set(b_out)

        # bf16 storage for MXU operands; biases / activations stay f32.
        self.w_ih_p = w_ih_p.astype(jnp.bfloat16)
        self.w_hh_p = w_hh_p.astype(jnp.bfloat16)
        self.w_out_p = w_out_p.astype(jnp.bfloat16)
        self.b_p = b_p
        self.b_out_p = b_out_p

    # ---- DecoderRNNV2.forward(features, captions, len) ---- #
    def forward(self, features, captions, lengths=None):
        # `lengths` accepted for signature parity but (like the PyTorch forward) unused.
        B, L = captions.shape
        F, In = self.n_features, self.In
        Hp, Inp, Vp = self.Hp, self.Inp, self.Vp
        Bp = _round_up(B, 8)

        # TODO(synk): embedding gather + feature repeat/concat stay in plain JAX.
        emb = self.embed_table[captions]                          # (B, L, E)
        feat = jnp.broadcast_to(features[:, None, :], (B, L, F))  # repeat over time
        combined = jnp.concatenate([feat, emb], axis=-1)          # (B, L, F+E)

        # time-major, pad batch (sublane) and input (lane) dims once
        x = jnp.transpose(combined, (1, 0, 2))                    # (L, B, In)
        x = jnp.pad(x, ((0, 0), (0, Bp - B), (0, Inp - In)))      # (L, Bp, Inp)
        x2d = x.reshape(L * Bp, Inp)

        # Rough VMEM footprint of the fully fused path (I/O counted twice for
        # double-buffering slack).
        fused_bytes = (
            2 * x2d.size * 4 + 2 * (L * Bp) * Vp * 4
            + Inp * 4 * Hp * 2 + Hp * 4 * Hp * 2 + Hp * Vp * 2
            + (4 * Hp + Vp) * 4
            + (L * Bp) * 4 * Hp * 4 + 2 * Bp * Hp * 4)

        if fused_bytes <= 24 * 1024 * 1024:
            # Single pallas_call: projection + recurrence + fc_out.
            logits2d = fused_decoder(x2d, self.w_ih_p, self.b_p, self.w_hh_p,
                                     self.w_out_p, self.b_out_p, Bp)
        else:
            # Large shapes: tiled hoisted projection, then fused recurrence.
            gx = dense(x2d, self.w_ih_p, self.b_p).reshape(L, Bp, 4 * Hp)
            logits2d = lstm_fc(gx, self.w_hh_p, self.w_out_p,
                               self.b_out_p).reshape(L * Bp, Vp)

        logits = logits2d.reshape(L, Bp, Vp)
        out = jnp.transpose(logits, (1, 0, 2))[:B, :, :self.vocab_size]
        return out                                                # (B, L, vocab)


# ----------------------------------- main ----------------------------------- #

if __name__ == "__main__":
    B, L = 2, 8
    embed_size, hidden_size, vocab_size, n_features = 32, 32, 48, 16

    model = DecoderRNNV2Pallas(embed_size, hidden_size, vocab_size, n_features,
                               seed=0)

    key = jax.random.PRNGKey(0)
    k_feat, k_cap = jax.random.split(key)
    features = jax.random.normal(k_feat, (B, n_features), jnp.float32)   # CNN features
    captions = jax.random.randint(k_cap, (B, L), 0, vocab_size, dtype=jnp.int32)
    lengths = [L, L]   # unused by forward (parity with the PyTorch signature)

    out = model.forward(features, captions, lengths)
    out = jax.block_until_ready(out)
    assert out.shape == (B, L, vocab_size), out.shape
    assert bool(jnp.all(jnp.isfinite(out)))
    print("KERNEL_OK")
</pallas_src>

<mosaic_0001>
module attributes {stable_mosaic.version = 11 : i64} {
  func.func @_fused_decoder_kernel(%arg0: memref<64x128xf32, #tpu.memory_space<vmem>>, %arg1: memref<128x512xbf16, #tpu.memory_space<vmem>>, %arg2: memref<1x512xf32, #tpu.memory_space<vmem>>, %arg3: memref<128x512xbf16, #tpu.memory_space<vmem>>, %arg4: memref<128x128xbf16, #tpu.memory_space<vmem>>, %arg5: memref<1x128xf32, #tpu.memory_space<vmem>>, %arg6: memref<64x128xf32, #tpu.memory_space<vmem>>, %arg7: memref<64x512xf32, #tpu.memory_space<vmem>>, %arg8: memref<8x128xf32, #tpu.memory_space<vmem>>, %arg9: memref<8x128xf32, #tpu.memory_space<vmem>>) attributes {dimension_semantics = [], scalar_prefetch = 0 : i64, scratch_operands = 3 : i64, tpu.core_type = #tpu.core_type<tc>} {
    %c0 = arith.constant 0 : index
    %c0_0 = arith.constant 0 : index
    %0 = vector.load %arg0[%c0, %c0_0] : memref<64x128xf32, #tpu.memory_space<vmem>>, vector<64x128xf32>
    %1 = arith.truncf %0 : vector<64x128xf32> to vector<64x128xbf16>
    %c0_1 = arith.constant 0 : index
    %c0_2 = arith.constant 0 : index
    %2 = vector.load %arg1[%c0_1, %c0_2] : memref<128x512xbf16, #tpu.memory_space<vmem>>, vector<128x512xbf16>
    %cst = arith.constant dense<0.000000e+00> : vector<64x512xf32>
    %3 = tpu.matmul %1, %2, %cst {dimension_numbers = #tpu.dot_dimension_numbers<[1], [0], [0], [1], [0, 0, 1, 1], [], []>} : vector<64x128xbf16>, vector<128x512xbf16>, vector<64x512xf32> -> vector<64x512xf32>
    %c0_3 = arith.constant 0 : index
    %c0_4 = arith.constant 0 : index
    %4 = vector.load %arg2[%c0_3, %c0_4] : memref<1x512xf32, #tpu.memory_space<vmem>>, vector<1x512xf32>
    %5 = vector.broadcast %4 : vector<1x512xf32> to vector<64x512xf32>
    %6 = arith.addf %3, %5 : vector<64x512xf32>
    %c0_5 = arith.constant 0 : index
    %c0_6 = arith.constant 0 : index
    %7 = vector.load %arg7[%c0_5, %c0_6] : memref<64x512xf32, #tpu.memory_space<vmem>>, vector<64x512xf32>
    tpu.vector_store %arg7[%c0_5, %c0_6], %6 {strides = array<i32>} : memref<64x512xf32, #tpu.memory_space<vmem>>, vector<64x512xf32>,
    %cst_7 = arith.constant 0.000000e+00 : f32
    %8 = vector.broadcast %cst_7 : f32 to vector<8x128xf32>
    %c0_8 = arith.constant 0 : index
    %c0_9 = arith.constant 0 : index
    %9 = vector.load %arg8[%c0_8, %c0_9] : memref<8x128xf32, #tpu.memory_space<vmem>>, vector<8x128xf32>
    tpu.vector_store %arg8[%c0_8, %c0_9], %8 {strides = array<i32>} : memref<8x128xf32, #tpu.memory_space<vmem>>, vector<8x128xf32>,
    %cst_10 = arith.constant 0.000000e+00 : f32
    %10 = vector.broadcast %cst_10 : f32 to vector<8x128xf32>
    %c0_11 = arith.constant 0 : index
    %c0_12 = arith.constant 0 : index
    %11 = vector.load %arg9[%c0_11, %c0_12] : memref<8x128xf32, #tpu.memory_space<vmem>>, vector<8x128xf32>
    tpu.vector_store %arg9[%c0_11, %c0_12], %10 {strides = array<i32>} : memref<8x128xf32, #tpu.memory_space<vmem>>, vector<8x128xf32>,
    %c0_i32 = arith.constant 0 : i32
    %c1_i32 = arith.constant 1 : i32
    %12 = arith.muli %c0_i32, %c1_i32 : i32
    %c0_i32_13 = arith.constant 0 : i32
    %13 = arith.addi %c0_i32_13, %12 : i32
    %c0_14 = arith.constant 0 : index
    %c0_15 = arith.constant 0 : index
    %14 = vector.load %arg8[%c0_14, %c0_15] : memref<8x128xf32, #tpu.memory_space<vmem>>, vector<8x128xf32>
    %c0_16 = arith.constant 0 : index
    %c0_17 = arith.constant 0 : index
    %15 = vector.load %arg9[%c0_16, %c0_17] : memref<8x128xf32, #tpu.memory_space<vmem>>, vector<8x128xf32>
    %c8_i32 = arith.constant 8 : i32
    %16 = arith.muli %13, %c8_i32 : i32
    %17 = arith.index_cast %16 : i32 to index
    %c0_18 = arith.constant 0 : index
    %18 = vector.load %arg7[%17, %c0_18] : memref<64x512xf32, #tpu.memory_space<vmem>>, vector<8x512xf32>
    %19 = arith.truncf %14 : vector<8x128xf32> to vector<8x128xbf16>
    %c0_19 = arith.constant 0 : index
    %c0_20 = arith.constant 0 : index
    %20 = vector.load %arg3[%c0_19, %c0_20] : memref<128x512xbf16, #tpu.memory_space<vmem>>, vector<128x512xbf16>
    %cst_21 = arith.constant dense<0.000000e+00> : vector<8x512xf32>
    %21 = tpu.matmul %19, %20, %cst_21 {dimension_numbers = #tpu.dot_dimension_numbers<[1], [0], [0], [1], [0, 0, 1, 1], [], []>} : vector<8x128xbf16>, vector<128x512xbf16>, vector<8x512xf32> -> vector<8x512xf32>
    %22 = arith.addf %18, %21 : vector<8x512xf32>
    %23 = vector.extract_strided_slice %22 {offsets = [0, 0], sizes = [8, 128], strides = [1, 1]} : vector<8x512xf32> to vector<8x128xf32>
    %24 = arith.negf %23 : vector<8x128xf32>
    %25 = math.exp %24 : vector<8x128xf32>
    %cst_22 = arith.constant 1.000000e+00 : f32
    %26 = vector.broadcast %cst_22 : f32 to vector<8x128xf32>
    %27 = arith.addf %26, %25 : vector<8x128xf32>
    %28 = arith.divf %26, %27 : vector<8x128xf32>
    %29 = vector.extract_strided_slice %22 {offsets = [0, 128], sizes = [8, 128], strides = [1, 1]} : vector<8x512xf32> to vector<8x128xf32>
    %30 = arith.negf %29 : vector<8x128xf32>
    %31 = math.exp %30 : vector<8x128xf32>
    %cst_23 = arith.constant 1.000000e+00 : f32
    %32 = vector.broadcast %cst_23 : f32 to vector<8x128xf32>
    %33 = arith.addf %32, %31 : vector<8x128xf32>
    %34 = arith.divf %32, %33 : vector<8x128xf32>
    %35 = vector.extract_strided_slice %22 {offsets = [0, 256], sizes = [8, 128], strides = [1, 1]} : vector<8x512xf32> to vector<8x128xf32>
    %36 = math.tanh %35 : vector<8x128xf32>
    %37 = vector.extract_strided_slice %22 {offsets = [0, 384], sizes = [8, 128], strides = [1, 1]} : vector<8x512xf32> to vector<8x128xf32>
    %38 = arith.negf %37 : vector<8x128xf32>
    %39 = math.exp %38 : vector<8x128xf32>
    %cst_24 = arith.constant 1.000000e+00 : f32
    %40 = vector.broadcast %cst_24 : f32 to vector<8x128xf32>
    %41 = arith.addf %40, %39 : vector<8x128xf32>
    %42 = arith.divf %40, %41 : vector<8x128xf32>
    %43 = arith.mulf %34, %15 : vector<8x128xf32>
    %44 = arith.mulf %28, %36 : vector<8x128xf32>
    %45 = arith.addf %43, %44 : vector<8x128xf32>
    %46 = math.tanh %45 : vector<8x128xf32>
    %47 = arith.mulf %42, %46 : vector<8x128xf32>
    %c0_25 = arith.constant 0 : index
    %c0_26 = arith.constant 0 : index
    %48 = vector.load %arg9[%c0_25, %c0_26] : memref<8x128xf32, #tpu.memory_space<vmem>>, vector<8x128xf32>
    tpu.vector_store %arg9[%c0_25, %c0_26], %45 {strides = array<i32>} : memref<8x128xf32, #tpu.memory_space<vmem>>, vector<8x128xf32>,
    %c0_27 = arith.constant 0 : index
    %c0_28 = arith.constant 0 : index
    %49 = vector.load %arg8[%c0_27, %c0_28] : memref<8x128xf32, #tpu.memory_space<vmem>>, vector<8x128xf32>
    tpu.vector_store %arg8[%c0_27, %c0_28], %47 {strides = array<i32>} : memref<8x128xf32, #tpu.memory_space<vmem>>, vector<8x128xf32>,
    %50 = arith.truncf %47 : vector<8x128xf32> to vector<8x128xbf16>
    %c0_29 = arith.constant 0 : index
    %c0_30 = arith.constant 0 : index
    %51 = vector.load %arg4[%c0_29, %c0_30] : memref<128x128xbf16, #tpu.memory_space<vmem>>, vector<128x128xbf16>
    %cst_31 = arith.constant dense<0.000000e+00> : vector<8x128xf32>
    %52 = tpu.matmul %50, %51, %cst_31 {dimension_numbers = #tpu.dot_dimension_numbers<[1], [0], [0], [1], [0, 0, 1, 1], [], []>} : vector<8x128xbf16>, vector<128x128xbf16>, vector<8x128xf32> -> vector<8x128xf32>
    %c0_32 = arith.constant 0 : index
    %c0_33 = arith.constant 0 : index
    %53 = vector.load %arg5[%c0_32, %c0_33] : memref<1x128xf32, #tpu.memory_space<vmem>>, vector<1x128xf32>
    %54 = vector.broadcast %53 : vector<1x128xf32> to vector<8x128xf32>
    %55 = arith.addf %52, %54 : vector<8x128xf32>
    %c8_i32_34 = arith.constant 8 : i32
    %56 = arith.muli %13, %c8_i32_34 : i32
    %57 = arith.index_cast %56 : i32 to index
    %c0_35 = arith.constant 0 : index
    %58 = vector.load %arg6[%57, %c0_35] : memref<64x128xf32, #tpu.memory_space<vmem>>, vector<8x128xf32>
    tpu.vector_store %arg6[%57, %c0_35], %55 {strides = array<i32>} : memref<64x128xf32, #tpu.memory_space<vmem>>, vector<8x128xf32>,
    %c1_i32_36 = arith.constant 1 : i32
    %c1_i32_37 = arith.constant 1 : i32
    %59 = arith.muli %c1_i32_36, %c1_i32_37 : i32
    %c0_i32_38 = arith.constant 0 : i32
    %60 = arith.addi %c0_i32_38, %59 : i32
    %c0_39 = arith.constant 0 : index
    %c0_40 = arith.constant 0 : index
    %61 = vector.load %arg8[%c0_39, %c0_40] : memref<8x128xf32, #tpu.memory_space<vmem>>, vector<8x128xf32>
    %c0_41 = arith.constant 0 : index
    %c0_42 = arith.constant 0 : index
    %62 = vector.load %arg9[%c0_41, %c0_42] : memref<8x128xf32, #tpu.memory_space<vmem>>, vector<8x128xf32>
    %c8_i32_43 = arith.constant 8 : i32
    %63 = arith.muli %60, %c8_i32_43 : i32
    %64 = arith.index_cast %63 : i32 to index
    %c0_44 = arith.constant 0 : index
    %65 = vector.load %arg7[%64, %c0_44] : memref<64x512xf32, #tpu.memory_space<vmem>>, vector<8x512xf32>
    %66 = arith.truncf %61 : vector<8x128xf32> to vector<8x128xbf16>
    %c0_45 = arith.constant 0 : index
    %c0_46 = arith.constant 0 : index
    %67 = vector.load %arg3[%c0_45, %c0_46] : memref<128x512xbf16, #tpu.memory_space<vmem>>, vector<128x512xbf16>
    %cst_47 = arith.constant dense<0.000000e+00> : vector<8x512xf32>
    %68 = tpu.matmul %66, %67, %cst_47 {dimension_numbers = #tpu.dot_dimension_numbers<[1], [0], [0], [1], [0, 0, 1, 1], [], []>} : vector<8x128xbf16>, vector<128x512xbf16>, vector<8x512xf32> -> vector<8x512xf32>
    %69 = arith.addf %65, %68 : vector<8x512xf32>
    %70 = vector.extract_strided_slice %69 {offsets = [0, 0], sizes = [8, 128], strides = [1, 1]} : vector<8x512xf32> to vector<8x128xf32>
    %71 = arith.negf %70 : vector<8x128xf32>
    %72 = math.exp %71 : vector<8x128xf32>
    %cst_48 = arith.constant 1.000000e+00 : f32
    %73 = vector.broadcast %cst_48 : f32 to vector<8x128xf32>
    %74 = arith.addf %73, %72 : vector<8x128xf32>
    %75 = arith.divf %73, %74 : vector<8x128xf32>
    %76 = vector.extract_strided_slice %69 {offsets = [0, 128], sizes = [8, 128], strides = [1, 1]} : vector<8x512xf32> to vector<8x128xf32>
    %77 = arith.negf %76 : vector<8x128xf32>
    %78 = math.exp %77 : vector<8x128xf32>
    %cst_49 = arith.constant 1.000000e+00 : f32
    %79 = vector.broadcast %cst_49 : f32 to vector<8x128xf32>
    %80 = arith.addf %79, %78 : vector<8x128xf32>
    %81 = arith.divf %79, %80 : vector<8x128xf32>
    %82 = vector.extract_strided_slice %69 {offsets = [0, 256], sizes = [8, 128], strides = [1, 1]} : vector<8x512xf32> to vector<8x128xf32>
    %83 = math.tanh %82 : vector<8x128xf32>
    %84 = vector.extract_strided_slice %69 {offsets = [0, 384], sizes = [8, 128], strides = [1, 1]} : vector<8x512xf32> to vector<8x128xf32>
    %85 = arith.negf %84 : vector<8x128xf32>
    %86 = math.exp %85 : vector<8x128xf32>
    %cst_50 = arith.constant 1.000000e+00 : f32
    %87 = vector.broadcast %cst_50 : f32 to vector<8x128xf32>
    %88 = arith.addf %87, %86 : vector<8x128xf32>
    %89 = arith.divf %87, %88 : vector<8x128xf32>
    %90 = arith.mulf %81, %62 : vector<8x128xf32>
    %91 = arith.mulf %75, %83 : vector<8x128xf32>
    %92 = arith.addf %90, %91 : vector<8x128xf32>
    %93 = math.tanh %92 : vector<8x128xf32>
    %94 = arith.mulf %89, %93 : vector<8x128xf32>
    %c0_51 = arith.constant 0 : index
    %c0_52 = arith.constant 0 : index
    %95 = vector.load %arg9[%c0_51, %c0_52] : memref<8x128xf32, #tpu.memory_space<vmem>>, vector<8x128xf32>
    tpu.vector_store %arg9[%c0_51, %c0_52], %92 {strides = array<i32>} : memref<8x128xf32, #tpu.memory_space<vmem>>, vector<8x128xf32>,
    %c0_53 = arith.constant 0 : index
    %c0_54 = arith.constant 0 : index
    %96 = vector.load %arg8[%c0_53, %c0_54] : memref<8x128xf32, #tpu.memory_space<vmem>>, vector<8x128xf32>
    tpu.vector_store %arg8[%c0_53, %c0_54], %94 {strides = array<i32>} : memref<8x128xf32, #tpu.memory_space<vmem>>, vector<8x128xf32>,
    %97 = arith.truncf %94 : vector<8x128xf32> to vector<8x128xbf16>
    %c0_55 = arith.constant 0 : index
    %c0_56 = arith.constant 0 : index
    %98 = vector.load %arg4[%c0_55, %c0_56] : memref<128x128xbf16, #tpu.memory_space<vmem>>, vector<128x128xbf16>
    %cst_57 = arith.constant dense<0.000000e+00> : vector<8x128xf32>
    %99 = tpu.matmul %97, %98, %cst_57 {dimension_numbers = #tpu.dot_dimension_numbers<[1], [0], [0], [1], [0, 0, 1, 1], [], []>} : vector<8x128xbf16>, vector<128x128xbf16>, vector<8x128xf32> -> vector<8x128xf32>
    %c0_58 = arith.constant 0 : index
    %c0_59 = arith.constant 0 : index
    %100 = vector.load %arg5[%c0_58, %c0_59] : memref<1x128xf32, #tpu.memory_space<vmem>>, vector<1x128xf32>
    %101 = vector.broadcast %100 : vector<1x128xf32> to vector<8x128xf32>
    %102 = arith.addf %99, %101 : vector<8x128xf32>
    %c8_i32_60 = arith.constant 8 : i32
    %103 = arith.muli %60, %c8_i32_60 : i32
    %104 = arith.index_cast %103 : i32 to index
    %c0_61 = arith.constant 0 : index
    %105 = vector.load %arg6[%104, %c0_61] : memref<64x128xf32, #tpu.memory_space<vmem>>, vector<8x128xf32>
    tpu.vector_store %arg6[%104, %c0_61], %102 {strides = array<i32>} : memref<64x128xf32, #tpu.memory_space<vmem>>, vector<8x128xf32>,
    %c2_i32 = arith.constant 2 : i32
    %c1_i32_62 = arith.constant 1 : i32
    %106 = arith.muli %c2_i32, %c1_i32_62 : i32
    %c0_i32_63 = arith.constant 0 : i32
    %107 = arith.addi %c0_i32_63, %106 : i32
    %c0_64 = arith.constant 0 : index
    %c0_65 = arith.constant 0 : index
    %108 = vector.load %arg8[%c0_64, %c0_65] : memref<8x128xf32, #tpu.memory_space<vmem>>, vector<8x128xf32>
    %c0_66 = arith.constant 0 : index
    %c0_67 = arith.constant 0 : index
    %109 = vector.load %arg9[%c0_66, %c0_67] : memref<8x128xf32, #tpu.memory_space<vmem>>, vector<8x128xf32>
    %c8_i32_68 = arith.constant 8 : i32
    %110 = arith.muli %107, %c8_i32_68 : i32
    %111 = arith.index_cast %110 : i32 to index
    %c0_69 = arith.constant 0 : index
    %112 = vector.load %arg7[%111, %c0_69] : memref<64x512xf32, #tpu.memory_space<vmem>>, vector<8x512xf32>
    %113 = arith.truncf %108 : vector<8x128xf32> to vector<8x128xbf16>
    %c0_70 = arith.constant 0 : index
    %c0_71 = arith.constant 0 : index
    %114 = vector.load %arg3[%c0_70, %c0_71] : memref<128x512xbf16, #tpu.memory_space<vmem>>, vector<128x512xbf16>
    %cst_72 = arith.constant dense<0.000000e+00> : vector<8x512xf32>
    %115 = tpu.matmul %113, %114, %cst_72 {dimension_numbers = #tpu.dot_dimension_numbers<[1], [0], [0], [1], [0, 0, 1, 1], [], []>} : vector<8x128xbf16>, vector<128x512xbf16>, vector<8x512xf32> -> vector<8x512xf32>
    %116 = arith.addf %112, %115 : vector<8x512xf32>
    %117 = vector.extract_strided_slice %116 {offsets = [0, 0], sizes = [8, 128], strides = [1, 1]} : vector<8x512xf32> to vector<8x128xf32>
    %118 = arith.negf %117 : vector<8x128xf32>
    %119 = math.exp %118 : vector<8x128xf32>
    %cst_73 = arith.constant 1.000000e+00 : f32
    %120 = vector.broadcast %cst_73 : f32 to vector<8x128xf32>
    %121 = arith.addf %120, %119 : vector<8x128xf32>
    %122 = arith.divf %120, %121 : vector<8x128xf32>
    %123 = vector.extract_strided_slice %116 {offsets = [0, 128], sizes = [8, 128], strides = [1, 1]} : vector<8x512xf32> to vector<8x128xf32>
    %124 = arith.negf %123 : vector<8x128xf32>
    %125 = math.exp %124 : vector<8x128xf32>
    %cst_74 = arith.constant 1.000000e+00 : f32
    %126 = vector.broadcast %cst_74 : f32 to vector<8x128xf32>
    %127 = arith.addf %126, %125 : vector<8x128xf32>
    %128 = arith.divf %126, %127 : vector<8x128xf32>
    %129 = vector.extract_strided_slice %116 {offsets = [0, 256], sizes = [8, 128], strides = [1, 1]} : vector<8x512xf32> to vector<8x128xf32>
    %130 = math.tanh %129 : vector<8x128xf32>
    %131 = vector.extract_strided_slice %116 {offsets = [0, 384], sizes = [8, 128], strides = [1, 1]} : vector<8x512xf32> to vector<8x128xf32>
    %132 = arith.negf %131 : vector<8x128xf32>
    %133 = math.exp %132 : vector<8x128xf32>
    %cst_75 = arith.constant 1.000000e+00 : f32
    %134 = vector.broadcast %cst_75 : f32 to vector<8x128xf32>
    %135 = arith.addf %134, %133 : vector<8x128xf32>
    %136 = arith.divf %134, %135 : vector<8x128xf32>
    %137 = arith.mulf %128, %109 : vector<8x128xf32>
    %138 = arith.mulf %122, %130 : vector<8x128xf32>
    %139 = arith.addf %137, %138 : vector<8x128xf32>
    %140 = math.tanh %139 : vector<8x128xf32>
    %141 = arith.mulf %136, %140 : vector<8x128xf32>
    %c0_76 = arith.constant 0 : index
    %c0_77 = arith.constant 0 : index
    %142 = vector.load %arg9[%c0_76, %c0_77] : memref<8x128xf32, #tpu.memory_space<vmem>>, vector<8x128xf32>
    tpu.vector_store %arg9[%c0_76, %c0_77], %139 {strides = array<i32>} : memref<8x128xf32, #tpu.memory_space<vmem>>, vector<8x128xf32>,
    %c0_78 = arith.constant 0 : index
    %c0_79 = arith.constant 0 : index
    %143 = vector.load %arg8[%c0_78, %c0_79] : memref<8x128xf32, #tpu.memory_space<vmem>>, vector<8x128xf32>
    tpu.vector_store %arg8[%c0_78, %c0_79], %141 {strides = array<i32>} : memref<8x128xf32, #tpu.memory_space<vmem>>, vector<8x128xf32>,
    %144 = arith.truncf %141 : vector<8x128xf32> to vector<8x128xbf16>
    %c0_80 = arith.constant 0 : index
    %c0_81 = arith.constant 0 : index
    %145 = vector.load %arg4[%c0_80, %c0_81] : memref<128x128xbf16, #tpu.memory_space<vmem>>, vector<128x128xbf16>
    %cst_82 = arith.constant dense<0.000000e+00> : vector<8x128xf32>
    %146 = tpu.matmul %144, %145, %cst_82 {dimension_numbers = #tpu.dot_dimension_numbers<[1], [0], [0], [1], [0, 0, 1, 1], [], []>} : vector<8x128xbf16>, vector<128x128xbf16>, vector<8x128xf32> -> vector<8x128xf32>
    %c0_83 = arith.constant 0 : index
    %c0_84 = arith.constant 0 : index
    %147 = vector.load %arg5[%c0_83, %c0_84] : memref<1x128xf32, #tpu.memory_space<vmem>>, vector<1x128xf32>
    %148 = vector.broadcast %147 : vector<1x128xf32> to vector<8x128xf32>
    %149 = arith.addf %146, %148 : vector<8x128xf32>
    %c8_i32_85 = arith.constant 8 : i32
    %150 = arith.muli %107, %c8_i32_85 : i32
    %151 = arith.index_cast %150 : i32 to index
    %c0_86 = arith.constant 0 : index
    %152 = vector.load %arg6[%151, %c0_86] : memref<64x128xf32, #tpu.memory_space<vmem>>, vector<8x128xf32>
    tpu.vector_store %arg6[%151, %c0_86], %149 {strides = array<i32>} : memref<64x128xf32, #tpu.memory_space<vmem>>, vector<8x128xf32>,
    %c3_i32 = arith.constant 3 : i32
    %c1_i32_87 = arith.constant 1 : i32
    %153 = arith.muli %c3_i32, %c1_i32_87 : i32
    %c0_i32_88 = arith.constant 0 : i32
    %154 = arith.addi %c0_i32_88, %153 : i32
    %c0_89 = arith.constant 0 : index
    %c0_90 = arith.constant 0 : index
    %155 = vector.load %arg8[%c0_89, %c0_90] : memref<8x128xf32, #tpu.memory_space<vmem>>, vector<8x128xf32>
    %c0_91 = arith.constant 0 : index
    %c0_92 = arith.constant 0 : index
    %156 = vector.load %arg9[%c0_91, %c0_92] : memref<8x128xf32, #tpu.memory_space<vmem>>, vector<8x128xf32>
    %c8_i32_93 = arith.constant 8 : i32
    %157 = arith.muli %154, %c8_i32_93 : i32
    %158 = arith.index_cast %157 : i32 to index
    %c0_94 = arith.constant 0 : index
    %159 = vector.load %arg7[%158, %c0_94] : memref<64x512xf32, #tpu.memory_space<vmem>>, vector<8x512xf32>
    %160 = arith.truncf %155 : vector<8x128xf32> to vector<8x128xbf16>
    %c0_95 = arith.constant 0 : index
    %c0_96 = arith.constant 0 : index
    %161 = vector.load %arg3[%c0_95, %c0_96] : memref<128x512xbf16, #tpu.memory_space<vmem>>, vector<128x512xbf16>
    %cst_97 = arith.constant dense<0.000000e+00> : vector<8x512xf32>
    %162 = tpu.matmul %160, %161, %cst_97 {dimension_numbers = #tpu.dot_dimension_numbers<[1], [0], [0], [1], [0, 0, 1, 1], [], []>} : vector<8x128xbf16>, vector<128x512xbf16>, vector<8x512xf32> -> vector<8x512xf32>
    %163 = arith.addf %159, %162 : vector<8x512xf32>
    %164 = vector.extract_strided_slice %163 {offsets = [0, 0], sizes = [8, 128], strides = [1, 1]} : vector<8x512xf32> to vector<8x128xf32>
    %165 = arith.negf %164 : vector<8x128xf32>
    %166 = math.exp %165 : vector<8x128xf32>
    %cst_98 = arith.constant 1.000000e+00 : f32
    %167 = vector.broadcast %cst_98 : f32 to vector<8x128xf32>
    %168 = arith.addf %167, %166 : vector<8x128xf32>
    %169 = arith.divf %167, %168 : vector<8x128xf32>
    %170 = vector.extract_strided_slice %163 {offsets = [0, 128], sizes = [8, 128], strides = [1, 1]} : vector<8x512xf32> to vector<8x128xf32>
    %171 = arith.negf %170 : vector<8x128xf32>
    %172 = math.exp %171 : vector<8x128xf32>
    %cst_99 = arith.constant 1.000000e+00 : f32
    %173 = vector.broadcast %cst_99 : f32 to vector<8x128xf32>
    %174 = arith.addf %173, %172 : vector<8x128xf32>
    %175 = arith.divf %173, %174 : vector<8x128xf32>
    %176 = vector.extract_strided_slice %163 {offsets = [0, 256], sizes = [8, 128], strides = [1, 1]} : vector<8x512xf32> to vector<8x128xf32>
    %177 = math.tanh %176 : vector<8x128xf32>
    %178 = vector.extract_strided_slice %163 {offsets = [0, 384], sizes = [8, 128], strides = [1, 1]} : vector<8x512xf32> to vector<8x128xf32>
    %179 = arith.negf %178 : vector<8x128xf32>
    %180 = math.exp %179 : vector<8x128xf32>
    %cst_100 = arith.constant 1.000000e+00 : f32
    %181 = vector.broadcast %cst_100 : f32 to vector<8x128xf32>
    %182 = arith.addf %181, %180 : vector<8x128xf32>
    %183 = arith.divf %181, %182 : vector<8x128xf32>
    %184 = arith.mulf %175, %156 : vector<8x128xf32>
    %185 = arith.mulf %169, %177 : vector<8x128xf32>
    %186 = arith.addf %184, %185 : vector<8x128xf32>
    %187 = math.tanh %186 : vector<8x128xf32>
    %188 = arith.mulf %183, %187 : vector<8x128xf32>
    %c0_101 = arith.constant 0 : index
    %c0_102 = arith.constant 0 : index
    %189 = vector.load %arg9[%c0_101, %c0_102] : memref<8x128xf32, #tpu.memory_space<vmem>>, vector<8x128xf32>
    tpu.vector_store %arg9[%c0_101, %c0_102], %186 {strides = array<i32>} : memref<8x128xf32, #tpu.memory_space<vmem>>, vector<8x128xf32>,
    %c0_103 = arith.constant 0 : index
    %c0_104 = arith.constant 0 : index
    %190 = vector.load %arg8[%c0_103, %c0_104] : memref<8x128xf32, #tpu.memory_space<vmem>>, vector<8x128xf32>
    tpu.vector_store %arg8[%c0_103, %c0_104], %188 {strides = array<i32>} : memref<8x128xf32, #tpu.memory_space<vmem>>, vector<8x128xf32>,
    %191 = arith.truncf %188 : vector<8x128xf32> to vector<8x128xbf16>
    %c0_105 = arith.constant 0 : index
    %c0_106 = arith.constant 0 : index
    %192 = vector.load %arg4[%c0_105, %c0_106] : memref<128x128xbf16, #tpu.memory_space<vmem>>, vector<128x128xbf16>
    %cst_107 = arith.constant dense<0.000000e+00> : vector<8x128xf32>
    %193 = tpu.matmul %191, %192, %cst_107 {dimension_numbers = #tpu.dot_dimension_numbers<[1], [0], [0], [1], [0, 0, 1, 1], [], []>} : vector<8x128xbf16>, vector<128x128xbf16>, vector<8x128xf32> -> vector<8x128xf32>
    %c0_108 = arith.constant 0 : index
    %c0_109 = arith.constant 0 : index
    %194 = vector.load %arg5[%c0_108, %c0_109] : memref<1x128xf32, #tpu.memory_space<vmem>>, vector<1x128xf32>
    %195 = vector.broadcast %194 : vector<1x128xf32> to vector<8x128xf32>
    %196 = arith.addf %193, %195 : vector<8x128xf32>
    %c8_i32_110 = arith.constant 8 : i32
    %197 = arith.muli %154, %c8_i32_110 : i32
    %198 = arith.index_cast %197 : i32 to index
    %c0_111 = arith.constant 0 : index
    %199 = vector.load %arg6[%198, %c0_111] : memref<64x128xf32, #tpu.memory_space<vmem>>, vector<8x128xf32>
    tpu.vector_store %arg6[%198, %c0_111], %196 {strides = array<i32>} : memref<64x128xf32, #tpu.memory_space<vmem>>, vector<8x128xf32>,
    %c4_i32 = arith.constant 4 : i32
    %c1_i32_112 = arith.constant 1 : i32
    %200 = arith.muli %c4_i32, %c1_i32_112 : i32
    %c0_i32_113 = arith.constant 0 : i32
    %201 = arith.addi %c0_i32_113, %200 : i32
    %c0_114 = arith.constant 0 : index
    %c0_115 = arith.constant 0 : index
    %202 = vector.load %arg8[%c0_114, %c0_115] : memref<8x128xf32, #tpu.memory_space<vmem>>, vector<8x128xf32>
    %c0_116 = arith.constant 0 : index
    %c0_117 = arith.constant 0 : index
    %203 = vector.load %arg9[%c0_116, %c0_117] : memref<8x128xf32, #tpu.memory_space<vmem>>, vector<8x128xf32>
    %c8_i32_118 = arith.constant 8 : i32
    %204 = arith.muli %201, %c8_i32_118 : i32
    %205 = arith.index_cast %204 : i32 to index
    %c0_119 = arith.constant 0 : index
    %206 = vector.load %arg7[%205, %c0_119] : memref<64x512xf32, #tpu.memory_space<vmem>>, vector<8x512xf32>
    %207 = arith.truncf %202 : vector<8x128xf32> to vector<8x128xbf16>
    %c0_120 = arith.constant 0 : index
    %c0_121 = arith.constant 0 : index
    %208 = vector.load %arg3[%c0_120, %c0_121] : memref<128x512xbf16, #tpu.memory_space<vmem>>, vector<128x512xbf16>
    %cst_122 = arith.constant dense<0.000000e+00> : vector<8x512xf32>
    %209 = tpu.matmul %207, %208, %cst_122 {dimension_numbers = #tpu.dot_dimension_numbers<[1], [0], [0], [1], [0, 0, 1, 1], [], []>} : vector<8x128xbf16>, vector<128x512xbf16>, vector<8x512xf32> -> vector<8x512xf32>
    %210 = arith.addf %206, %209 : vector<8x512xf32>
    %211 = vector.extract_strided_slice %210 {offsets = [0, 0], sizes = [8, 128], strides = [1, 1]} : vector<8x512xf32> to vector<8x128xf32>
    %212 = arith.negf %211 : vector<8x128xf32>
    %213 = math.exp %212 : vector<8x128xf32>
    %cst_123 = arith.constant 1.000000e+00 : f32
    %214 = vector.broadcast %cst_123 : f32 to vector<8x128xf32>
    %215 = arith.addf %214, %213 : vector<8x128xf32>
    %216 = arith.divf %214, %215 : vector<8x128xf32>
    %217 = vector.extract_strided_slice %210 {offsets = [0, 128], sizes = [8, 128], strides = [1, 1]} : vector<8x512xf32> to vector<8x128xf32>
    %218 = arith.negf %217 : vector<8x128xf32>
    %219 = math.exp %218 : vector<8x128xf32>
    %cst_124 = arith.constant 1.000000e+00 : f32
    %220 = vector.broadcast %cst_124 : f32 to vector<8x128xf32>
    %221 = arith.addf %220, %219 : vector<8x128xf32>
    %222 = arith.divf %220, %221 : vector<8x128xf32>
    %223 = vector.extract_strided_slice %210 {offsets = [0, 256], sizes = [8, 128], strides = [1, 1]} : vector<8x512xf32> to vector<8x128xf32>
    %224 = math.tanh %223 : vector<8x128xf32>
    %225 = vector.extract_strided_slice %210 {offsets = [0, 384], sizes = [8, 128], strides = [1, 1]} : vector<8x512xf32> to vector<8x128xf32>
    %226 = arith.negf %225 : vector<8x128xf32>
    %227 = math.exp %226 : vector<8x128xf32>
    %cst_125 = arith.constant 1.000000e+00 : f32
    %228 = vector.broadcast %cst_125 : f32 to vector<8x128xf32>
    %229 = arith.addf %228, %227 : vector<8x128xf32>
    %230 = arith.divf %228, %229 : vector<8x128xf32>
    %231 = arith.mulf %222, %203 : vector<8x128xf32>
    %232 = arith.mulf %216, %224 : vector<8x128xf32>
    %233 = arith.addf %231, %232 : vector<8x128xf32>
    %234 = math.tanh %233 : vector<8x128xf32>
    %235 = arith.mulf %230, %234 : vector<8x128xf32>
    %c0_126 = arith.constant 0 : index
    %c0_127 = arith.constant 0 : index
    %236 = vector.load %arg9[%c0_126, %c0_127] : memref<8x128xf32, #tpu.memory_space<vmem>>, vector<8x128xf32>
    tpu.vector_store %arg9[%c0_126, %c0_127], %233 {strides = array<i32>} : memref<8x128xf32, #tpu.memory_space<vmem>>, vector<8x128xf32>,
    %c0_128 = arith.constant 0 : index
    %c0_129 = arith.constant 0 : index
    %237 = vector.load %arg8[%c0_128, %c0_129] : memref<8x128xf32, #tpu.memory_space<vmem>>, vector<8x128xf32>
    tpu.vector_store %arg8[%c0_128, %c0_129], %235 {strides = array<i32>} : memref<8x128xf32, #tpu.memory_space<vmem>>, vector<8x128xf32>,
    %238 = arith.truncf %235 : vector<8x128xf32> to vector<8x128xbf16>
    %c0_130 = arith.constant 0 : index
    %c0_131 = arith.constant 0 : index
    %239 = vector.load %arg4[%c0_130, %c0_131] : memref<128x128xbf16, #tpu.memory_space<vmem>>, vector<128x128xbf16>
    %cst_132 = arith.constant dense<0.000000e+00> : vector<8x128xf32>
    %240 = tpu.matmul %238, %239, %cst_132 {dimension_numbers = #tpu.dot_dimension_numbers<[1], [0], [0], [1], [0, 0, 1, 1], [], []>} : vector<8x128xbf16>, vector<128x128xbf16>, vector<8x128xf32> -> vector<8x128xf32>
    %c0_133 = arith.constant 0 : index
    %c0_134 = arith.constant 0 : index
    %241 = vector.load %arg5[%c0_133, %c0_134] : memref<1x128xf32, #tpu.memory_space<vmem>>, vector<1x128xf32>
    %242 = vector.broadcast %241 : vector<1x128xf32> to vector<8x128xf32>
    %243 = arith.addf %240, %242 : vector<8x128xf32>
    %c8_i32_135 = arith.constant 8 : i32
    %244 = arith.muli %201, %c8_i32_135 : i32
    %245 = arith.index_cast %244 : i32 to index
    %c0_136 = arith.constant 0 : index
    %246 = vector.load %arg6[%245, %c0_136] : memref<64x128xf32, #tpu.memory_space<vmem>>, vector<8x128xf32>
    tpu.vector_store %arg6[%245, %c0_136], %243 {strides = array<i32>} : memref<64x128xf32, #tpu.memory_space<vmem>>, vector<8x128xf32>,
    %c5_i32 = arith.constant 5 : i32
    %c1_i32_137 = arith.constant 1 : i32
    %247 = arith.muli %c5_i32, %c1_i32_137 : i32
    %c0_i32_138 = arith.constant 0 : i32
    %248 = arith.addi %c0_i32_138, %247 : i32
    %c0_139 = arith.constant 0 : index
    %c0_140 = arith.constant 0 : index
    %249 = vector.load %arg8[%c0_139, %c0_140] : memref<8x128xf32, #tpu.memory_space<vmem>>, vector<8x128xf32>
    %c0_141 = arith.constant 0 : index
    %c0_142 = arith.constant 0 : index
    %250 = vector.load %arg9[%c0_141, %c0_142] : memref<8x128xf32, #tpu.memory_space<vmem>>, vector<8x128xf32>
    %c8_i32_143 = arith.constant 8 : i32
    %251 = arith.muli %248, %c8_i32_143 : i32
    %252 = arith.index_cast %251 : i32 to index
    %c0_144 = arith.constant 0 : index
    %253 = vector.load %arg7[%252, %c0_144] : memref<64x512xf32, #tpu.memory_space<vmem>>, vector<8x512xf32>
    %254 = arith.truncf %249 : vector<8x128xf32> to vector<8x128xbf16>
    %c0_145 = arith.constant 0 : index
    %c0_146 = arith.constant 0 : index
    %255 = vector.load %arg3[%c0_145, %c0_146] : memref<128x512xbf16, #tpu.memory_space<vmem>>, vector<128x512xbf16>
    %cst_147 = arith.constant dense<0.000000e+00> : vector<8x512xf32>
    %256 = tpu.matmul %254, %255, %cst_147 {dimension_numbers = #tpu.dot_dimension_numbers<[1], [0], [0], [1], [0, 0, 1, 1], [], []>} : vector<8x128xbf16>, vector<128x512xbf16>, vector<8x512xf32> -> vector<8x512xf32>
    %257 = arith.addf %253, %256 : vector<8x512xf32>
    %258 = vector.extract_strided_slice %257 {offsets = [0, 0], sizes = [8, 128], strides = [1, 1]} : vector<8x512xf32> to vector<8x128xf32>
    %259 = arith.negf %258 : vector<8x128xf32>
    %260 = math.exp %259 : vector<8x128xf32>
    %cst_148 = arith.constant 1.000000e+00 : f32
    %261 = vector.broadcast %cst_148 : f32 to vector<8x128xf32>
    %262 = arith.addf %261, %260 : vector<8x128xf32>
    %263 = arith.divf %261, %262 : vector<8x128xf32>
    %264 = vector.extract_strided_slice %257 {offsets = [0, 128], sizes = [8, 128], strides = [1, 1]} : vector<8x512xf32> to vector<8x128xf32>
    %265 = arith.negf %264 : vector<8x128xf32>
    %266 = math.exp %265 : vector<8x128xf32>
    %cst_149 = arith.constant 1.000000e+00 : f32
    %267 = vector.broadcast %cst_149 : f32 to vector<8x128xf32>
    %268 = arith.addf %267, %266 : vector<8x128xf32>
    %269 = arith.divf %267, %268 : vector<8x128xf32>
    %270 = vector.extract_strided_slice %257 {offsets = [0, 256], sizes = [8, 128], strides = [1, 1]} : vector<8x512xf32> to vector<8x128xf32>
    %271 = math.tanh %270 : vector<8x128xf32>
    %272 = vector.extract_strided_slice %257 {offsets = [0, 384], sizes = [8, 128], strides = [1, 1]} : vector<8x512xf32> to vector<8x128xf32>
    %273 = arith.negf %272 : vector<8x128xf32>
    %274 = math.exp %273 : vector<8x128xf32>
    %cst_150 = arith.constant 1.000000e+00 : f32
    %275 = vector.broadcast %cst_150 : f32 to vector<8x128xf32>
    %276 = arith.addf %275, %274 : vector<8x128xf32>
    %277 = arith.divf %275, %276 : vector<8x128xf32>
    %278 = arith.mulf %269, %250 : vector<8x128xf32>
    %279 = arith.mulf %263, %271 : vector<8x128xf32>
    %280 = arith.addf %278, %279 : vector<8x128xf32>
    %281 = math.tanh %280 : vector<8x128xf32>
    %282 = arith.mulf %277, %281 : vector<8x128xf32>
    %c0_151 = arith.constant 0 : index
    %c0_152 = arith.constant 0 : index
    %283 = vector.load %arg9[%c0_151, %c0_152] : memref<8x128xf32, #tpu.memory_space<vmem>>, vector<8x128xf32>
    tpu.vector_store %arg9[%c0_151, %c0_152], %280 {strides = array<i32>} : memref<8x128xf32, #tpu.memory_space<vmem>>, vector<8x128xf32>,
    %c0_153 = arith.constant 0 : index
    %c0_154 = arith.constant 0 : index
    %284 = vector.load %arg8[%c0_153, %c0_154] : memref<8x128xf32, #tpu.memory_space<vmem>>, vector<8x128xf32>
    tpu.vector_store %arg8[%c0_153, %c0_154], %282 {strides = array<i32>} : memref<8x128xf32, #tpu.memory_space<vmem>>, vector<8x128xf32>,
    %285 = arith.truncf %282 : vector<8x128xf32> to vector<8x128xbf16>
    %c0_155 = arith.constant 0 : index
    %c0_156 = arith.constant 0 : index
    %286 = vector.load %arg4[%c0_155, %c0_156] : memref<128x128xbf16, #tpu.memory_space<vmem>>, vector<128x128xbf16>
    %cst_157 = arith.constant dense<0.000000e+00> : vector<8x128xf32>
    %287 = tpu.matmul %285, %286, %cst_157 {dimension_numbers = #tpu.dot_dimension_numbers<[1], [0], [0], [1], [0, 0, 1, 1], [], []>} : vector<8x128xbf16>, vector<128x128xbf16>, vector<8x128xf32> -> vector<8x128xf32>
    %c0_158 = arith.constant 0 : index
    %c0_159 = arith.constant 0 : index
    %288 = vector.load %arg5[%c0_158, %c0_159] : memref<1x128xf32, #tpu.memory_space<vmem>>, vector<1x128xf32>
    %289 = vector.broadcast %288 : vector<1x128xf32> to vector<8x128xf32>
    %290 = arith.addf %287, %289 : vector<8x128xf32>
    %c8_i32_160 = arith.constant 8 : i32
    %291 = arith.muli %248, %c8_i32_160 : i32
    %292 = arith.index_cast %291 : i32 to index
    %c0_161 = arith.constant 0 : index
    %293 = vector.load %arg6[%292, %c0_161] : memref<64x128xf32, #tpu.memory_space<vmem>>, vector<8x128xf32>
    tpu.vector_store %arg6[%292, %c0_161], %290 {strides = array<i32>} : memref<64x128xf32, #tpu.memory_space<vmem>>, vector<8x128xf32>,
    %c6_i32 = arith.constant 6 : i32
    %c1_i32_162 = arith.constant 1 : i32
    %294 = arith.muli %c6_i32, %c1_i32_162 : i32
    %c0_i32_163 = arith.constant 0 : i32
    %295 = arith.addi %c0_i32_163, %294 : i32
    %c0_164 = arith.constant 0 : index
    %c0_165 = arith.constant 0 : index
    %296 = vector.load %arg8[%c0_164, %c0_165] : memref<8x128xf32, #tpu.memory_space<vmem>>, vector<8x128xf32>
    %c0_166 = arith.constant 0 : index
    %c0_167 = arith.constant 0 : index
    %297 = vector.load %arg9[%c0_166, %c0_167] : memref<8x128xf32, #tpu.memory_space<vmem>>, vector<8x128xf32>
    %c8_i32_168 = arith.constant 8 : i32
    %298 = arith.muli %295, %c8_i32_168 : i32
    %299 = arith.index_cast %298 : i32 to index
    %c0_169 = arith.constant 0 : index
    %300 = vector.load %arg7[%299, %c0_169] : memref<64x512xf32, #tpu.memory_space<vmem>>, vector<8x512xf32>
    %301 = arith.truncf %296 : vector<8x128xf32> to vector<8x128xbf16>
    %c0_170 = arith.constant 0 : index
    %c0_171 = arith.constant 0 : index
    %302 = vector.load %arg3[%c0_170, %c0_171] : memref<128x512xbf16, #tpu.memory_space<vmem>>, vector<128x512xbf16>
    %cst_172 = arith.constant dense<0.000000e+00> : vector<8x512xf32>
    %303 = tpu.matmul %301, %302, %cst_172 {dimension_numbers = #tpu.dot_dimension_numbers<[1], [0], [0], [1], [0, 0, 1, 1], [], []>} : vector<8x128xbf16>, vector<128x512xbf16>, vector<8x512xf32> -> vector<8x512xf32>
    %304 = arith.addf %300, %303 : vector<8x512xf32>
    %305 = vector.extract_strided_slice %304 {offsets = [0, 0], sizes = [8, 128], strides = [1, 1]} : vector<8x512xf32> to vector<8x128xf32>
    %306 = arith.negf %305 : vector<8x128xf32>
    %307 = math.exp %306 : vector<8x128xf32>
    %cst_173 = arith.constant 1.000000e+00 : f32
    %308 = vector.broadcast %cst_173 : f32 to vector<8x128xf32>
    %309 = arith.addf %308, %307 : vector<8x128xf32>
    %310 = arith.divf %308, %309 : vector<8x128xf32>
    %311 = vector.extract_strided_slice %304 {offsets = [0, 128], sizes = [8, 128], strides = [1, 1]} : vector<8x512xf32> to vector<8x128xf32>
    %312 = arith.negf %311 : vector<8x128xf32>
    %313 = math.exp %312 : vector<8x128xf32>
    %cst_174 = arith.constant 1.000000e+00 : f32
    %314 = vector.broadcast %cst_174 : f32 to vector<8x128xf32>
    %315 = arith.addf %314, %313 : vector<8x128xf32>
    %316 = arith.divf %314, %315 : vector<8x128xf32>
    %317 = vector.extract_strided_slice %304 {offsets = [0, 256], sizes = [8, 128], strides = [1, 1]} : vector<8x512xf32> to vector<8x128xf32>
    %318 = math.tanh %317 : vector<8x128xf32>
    %319 = vector.extract_strided_slice %304 {offsets = [0, 384], sizes = [8, 128], strides = [1, 1]} : vector<8x512xf32> to vector<8x128xf32>
    %320 = arith.negf %319 : vector<8x128xf32>
    %321 = math.exp %320 : vector<8x128xf32>
    %cst_175 = arith.constant 1.000000e+00 : f32
    %322 = vector.broadcast %cst_175 : f32 to vector<8x128xf32>
    %323 = arith.addf %322, %321 : vector<8x128xf32>
    %324 = arith.divf %322, %323 : vector<8x128xf32>
    %325 = arith.mulf %316, %297 : vector<8x128xf32>
    %326 = arith.mulf %310, %318 : vector<8x128xf32>
    %327 = arith.addf %325, %326 : vector<8x128xf32>
    %328 = math.tanh %327 : vector<8x128xf32>
    %329 = arith.mulf %324, %328 : vector<8x128xf32>
    %c0_176 = arith.constant 0 : index
    %c0_177 = arith.constant 0 : index
    %330 = vector.load %arg9[%c0_176, %c0_177] : memref<8x128xf32, #tpu.memory_space<vmem>>, vector<8x128xf32>
    tpu.vector_store %arg9[%c0_176, %c0_177], %327 {strides = array<i32>} : memref<8x128xf32, #tpu.memory_space<vmem>>, vector<8x128xf32>,
    %c0_178 = arith.constant 0 : index
    %c0_179 = arith.constant 0 : index
    %331 = vector.load %arg8[%c0_178, %c0_179] : memref<8x128xf32, #tpu.memory_space<vmem>>, vector<8x128xf32>
    tpu.vector_store %arg8[%c0_178, %c0_179], %329 {strides = array<i32>} : memref<8x128xf32, #tpu.memory_space<vmem>>, vector<8x128xf32>,
    %332 = arith.truncf %329 : vector<8x128xf32> to vector<8x128xbf16>
    %c0_180 = arith.constant 0 : index
    %c0_181 = arith.constant 0 : index
    %333 = vector.load %arg4[%c0_180, %c0_181] : memref<128x128xbf16, #tpu.memory_space<vmem>>, vector<128x128xbf16>
    %cst_182 = arith.constant dense<0.000000e+00> : vector<8x128xf32>
    %334 = tpu.matmul %332, %333, %cst_182 {dimension_numbers = #tpu.dot_dimension_numbers<[1], [0], [0], [1], [0, 0, 1, 1], [], []>} : vector<8x128xbf16>, vector<128x128xbf16>, vector<8x128xf32> -> vector<8x128xf32>
    %c0_183 = arith.constant 0 : index
    %c0_184 = arith.constant 0 : index
    %335 = vector.load %arg5[%c0_183, %c0_184] : memref<1x128xf32, #tpu.memory_space<vmem>>, vector<1x128xf32>
    %336 = vector.broadcast %335 : vector<1x128xf32> to vector<8x128xf32>
    %337 = arith.addf %334, %336 : vector<8x128xf32>
    %c8_i32_185 = arith.constant 8 : i32
    %338 = arith.muli %295, %c8_i32_185 : i32
    %339 = arith.index_cast %338 : i32 to index
    %c0_186 = arith.constant 0 : index
    %340 = vector.load %arg6[%339, %c0_186] : memref<64x128xf32, #tpu.memory_space<vmem>>, vector<8x128xf32>
    tpu.vector_store %arg6[%339, %c0_186], %337 {strides = array<i32>} : memref<64x128xf32, #tpu.memory_space<vmem>>, vector<8x128xf32>,
    %c7_i32 = arith.constant 7 : i32
    %c1_i32_187 = arith.constant 1 : i32
    %341 = arith.muli %c7_i32, %c1_i32_187 : i32
    %c0_i32_188 = arith.constant 0 : i32
    %342 = arith.addi %c0_i32_188, %341 : i32
    %c0_189 = arith.constant 0 : index
    %c0_190 = arith.constant 0 : index
    %343 = vector.load %arg8[%c0_189, %c0_190] : memref<8x128xf32, #tpu.memory_space<vmem>>, vector<8x128xf32>
    %c0_191 = arith.constant 0 : index
    %c0_192 = arith.constant 0 : index
    %344 = vector.load %arg9[%c0_191, %c0_192] : memref<8x128xf32, #tpu.memory_space<vmem>>, vector<8x128xf32>
    %c8_i32_193 = arith.constant 8 : i32
    %345 = arith.muli %342, %c8_i32_193 : i32
    %346 = arith.index_cast %345 : i32 to index
    %c0_194 = arith.constant 0 : index
    %347 = vector.load %arg7[%346, %c0_194] : memref<64x512xf32, #tpu.memory_space<vmem>>, vector<8x512xf32>
    %348 = arith.truncf %343 : vector<8x128xf32> to vector<8x128xbf16>
    %c0_195 = arith.constant 0 : index
    %c0_196 = arith.constant 0 : index
    %349 = vector.load %arg3[%c0_195, %c0_196] : memref<128x512xbf16, #tpu.memory_space<vmem>>, vector<128x512xbf16>
    %cst_197 = arith.constant dense<0.000000e+00> : vector<8x512xf32>
    %350 = tpu.matmul %348, %349, %cst_197 {dimension_numbers = #tpu.dot_dimension_numbers<[1], [0], [0], [1], [0, 0, 1, 1], [], []>} : vector<8x128xbf16>, vector<128x512xbf16>, vector<8x512xf32> -> vector<8x512xf32>
    %351 = arith.addf %347, %350 : vector<8x512xf32>
    %352 = vector.extract_strided_slice %351 {offsets = [0, 0], sizes = [8, 128], strides = [1, 1]} : vector<8x512xf32> to vector<8x128xf32>
    %353 = arith.negf %352 : vector<8x128xf32>
    %354 = math.exp %353 : vector<8x128xf32>
    %cst_198 = arith.constant 1.000000e+00 : f32
    %355 = vector.broadcast %cst_198 : f32 to vector<8x128xf32>
    %356 = arith.addf %355, %354 : vector<8x128xf32>
    %357 = arith.divf %355, %356 : vector<8x128xf32>
    %358 = vector.extract_strided_slice %351 {offsets = [0, 128], sizes = [8, 128], strides = [1, 1]} : vector<8x512xf32> to vector<8x128xf32>
    %359 = arith.negf %358 : vector<8x128xf32>
    %360 = math.exp %359 : vector<8x128xf32>
    %cst_199 = arith.constant 1.000000e+00 : f32
    %361 = vector.broadcast %cst_199 : f32 to vector<8x128xf32>
    %362 = arith.addf %361, %360 : vector<8x128xf32>
    %363 = arith.divf %361, %362 : vector<8x128xf32>
    %364 = vector.extract_strided_slice %351 {offsets = [0, 256], sizes = [8, 128], strides = [1, 1]} : vector<8x512xf32> to vector<8x128xf32>
    %365 = math.tanh %364 : vector<8x128xf32>
    %366 = vector.extract_strided_slice %351 {offsets = [0, 384], sizes = [8, 128], strides = [1, 1]} : vector<8x512xf32> to vector<8x128xf32>
    %367 = arith.negf %366 : vector<8x128xf32>
    %368 = math.exp %367 : vector<8x128xf32>
    %cst_200 = arith.constant 1.000000e+00 : f32
    %369 = vector.broadcast %cst_200 : f32 to vector<8x128xf32>
    %370 = arith.addf %369, %368 : vector<8x128xf32>
    %371 = arith.divf %369, %370 : vector<8x128xf32>
    %372 = arith.mulf %363, %344 : vector<8x128xf32>
    %373 = arith.mulf %357, %365 : vector<8x128xf32>
    %374 = arith.addf %372, %373 : vector<8x128xf32>
    %375 = math.tanh %374 : vector<8x128xf32>
    %376 = arith.mulf %371, %375 : vector<8x128xf32>
    %c0_201 = arith.constant 0 : index
    %c0_202 = arith.constant 0 : index
    %377 = vector.load %arg9[%c0_201, %c0_202] : memref<8x128xf32, #tpu.memory_space<vmem>>, vector<8x128xf32>
    tpu.vector_store %arg9[%c0_201, %c0_202], %374 {strides = array<i32>} : memref<8x128xf32, #tpu.memory_space<vmem>>, vector<8x128xf32>,
    %c0_203 = arith.constant 0 : index
    %c0_204 = arith.constant 0 : index
    %378 = vector.load %arg8[%c0_203, %c0_204] : memref<8x128xf32, #tpu.memory_space<vmem>>, vector<8x128xf32>
    tpu.vector_store %arg8[%c0_203, %c0_204], %376 {strides = array<i32>} : memref<8x128xf32, #tpu.memory_space<vmem>>, vector<8x128xf32>,
    %379 = arith.truncf %376 : vector<8x128xf32> to vector<8x128xbf16>
    %c0_205 = arith.constant 0 : index
    %c0_206 = arith.constant 0 : index
    %380 = vector.load %arg4[%c0_205, %c0_206] : memref<128x128xbf16, #tpu.memory_space<vmem>>, vector<128x128xbf16>
    %cst_207 = arith.constant dense<0.000000e+00> : vector<8x128xf32>
    %381 = tpu.matmul %379, %380, %cst_207 {dimension_numbers = #tpu.dot_dimension_numbers<[1], [0], [0], [1], [0, 0, 1, 1], [], []>} : vector<8x128xbf16>, vector<128x128xbf16>, vector<8x128xf32> -> vector<8x128xf32>
    %c0_208 = arith.constant 0 : index
    %c0_209 = arith.constant 0 : index
    %382 = vector.load %arg5[%c0_208, %c0_209] : memref<1x128xf32, #tpu.memory_space<vmem>>, vector<1x128xf32>
    %383 = vector.broadcast %382 : vector<1x128xf32> to vector<8x128xf32>
    %384 = arith.addf %381, %383 : vector<8x128xf32>
    %c8_i32_210 = arith.constant 8 : i32
    %385 = arith.muli %342, %c8_i32_210 : i32
    %386 = arith.index_cast %385 : i32 to index
    %c0_211 = arith.constant 0 : index
    %387 = vector.load %arg6[%386, %c0_211] : memref<64x128xf32, #tpu.memory_space<vmem>>, vector<8x128xf32>
    tpu.vector_store %arg6[%386, %c0_211], %384 {strides = array<i32>} : memref<64x128xf32, #tpu.memory_space<vmem>>, vector<8x128xf32>,
    %c8_i32_212 = arith.constant 8 : i32
    return
  }
}

</mosaic_0001>

<llo_original>
// kernel: tpu_custom_call.1
$region0: #{tpu_custom_call.1}
  #allocation0 [shape = 'u32[]', space=smem, size = 0x4, offset = 0x4, fixed_abs, tag = 'smem constant byte address 0x4 - core index']
  #allocation1 [shape = 'u32[72,128]{1,0:T(1,128)}', space=vmem, size = 0x9000, scoped, tag = 'internal scratch']
  #allocation2 [shape = 'f32[64,512]{1,0:T(8,128)}', space=vmem, size = 0x20000, scoped, tag = 'scratch operand']
  #allocation3 [shape = 'f32[8,128]{1,0:T(8,128)}', space=vmem, size = 0x1000, scoped, tag = 'scratch operand']
  #allocation4 [shape = 'f32[8,128]{1,0:T(8,128)}', space=vmem, size = 0x1000, scoped, tag = 'scratch operand']
  %s0 = inlined_call_operand.hbm [shape: f32[64,128], index: 0, kind: input, shape index: {}]
  %s1 = inlined_call_operand.hbm [shape: bf16[128,512], index: 1, kind: input, shape index: {}]
  %s2 = inlined_call_operand.hbm [shape: f32[1,512], index: 2, kind: input, shape index: {}]
  %s3 = inlined_call_operand.hbm [shape: bf16[128,512], index: 3, kind: input, shape index: {}]
  %s4 = inlined_call_operand.hbm [shape: bf16[128,128], index: 4, kind: input, shape index: {}]
  %s5 = inlined_call_operand.vmem [shape: f32[1,128], index: 5, kind: input, shape index: {}]
  %s6 = inlined_call_operand.hbm [shape: f32[64,128], index: 6, kind: output, shape index: {}]
  %s7 = sld [smem:[#allocation0]]
  $region54: #{tpu_custom_call.1} parent=0
    _
  %s9 = ssub.s32 1, %s7
  %s10 = scalar_select 0, %s9, %s7
  $region1: #{tpu_custom_call.1} parent=0
    #allocation5 [shape = 'u8[32768]{0}', space=vmem, size = 0x8000, scoped, tag = 'input window, operand 0, single buffered']
    #allocation6 [shape = 's32[1]{0}', space=sflag, size = 0x4, scoped, tag = 'scoped memory for tpu_custom_call.1']
    #allocation7 [shape = 's32[1]{0}', space=sflag, size = 0x4, scoped, tag = 'scoped memory for tpu_custom_call.1']
    #allocation8 [shape = 'u8[131072]{0}', space=vmem, size = 0x20000, scoped, tag = 'input window, operand 1, single buffered']
    #allocation9 [shape = 's32[1]{0}', space=sflag, size = 0x4, scoped, tag = 'scoped memory for tpu_custom_call.1']
    #allocation10 [shape = 'u8[2048]{0}', space=vmem, size = 0x800, scoped, tag = 'input window, operand 2, single buffered']
    #allocation11 [shape = 'u8[131072]{0}', space=vmem, size = 0x20000, scoped, tag = 'input window, operand 3, single buffered']
    #allocation12 [shape = 's32[1]{0}', space=sflag, size = 0x4, scoped, tag = 'scoped memory for tpu_custom_call.1']
    #allocation13 [shape = 'u8[32768]{0}', space=vmem, size = 0x8000, scoped, tag = 'input window, operand 4, single buffered']
    #allocation14 [shape = 'u8[32768]{0}', space=vmem, size = 0x8000, scoped, tag = 'output window, operand 0, single buffered']
    %11 = vsyncpa [#allocation6], 0
    %12 = vsyncpa [#allocation9], 0
    %13 = vsyncpa [#allocation12], 0
    %14 = vsyncpa [#allocation7], 0
    // Predicated region
    $region2: #{tpu_custom_call.1} parent=1 // pred_check
      _
    $region3: #{tpu_custom_call.1} parent=1 // pred_check_branch
      %16 = sbr.rel (0) target = $region5
    $region4: #{tpu_custom_call.1} parent=1 // pred_region
      %18 = vsyncadd [#allocation6], 0
      %s19 = sshll.u32 %s0, 4
      %s20 = int_to_ptr.hbm [resolvable:$true] %s19
      %s21 = sshll.u32 [#allocation5], 4
      %s22 = int_to_ptr.vmem [resolvable:$true] %s21
      %27 = dma.hbm_to_vmem [thread:$0]  %s20, 1024, %s22, [#allocation6], 128, 128, 8
    $region5: #{tpu_custom_call.1} parent=1 // pred_fallthru
      _
    // Predicated region
    $region6: #{tpu_custom_call.1} parent=1 // pred_check
      _
    $region7: #{tpu_custom_call.1} parent=1 // pred_check_branch
      %29 = sbr.rel (0) target = $region9
    $region8: #{tpu_custom_call.1} parent=1 // pred_region
      %31 = vsyncadd [#allocation9], 0
      %s32 = sshll.u32 %s1, 4
      %s33 = int_to_ptr.hbm [resolvable:$true] %s32
      %s34 = sshll.u32 [#allocation8], 4
      %s35 = int_to_ptr.vmem [resolvable:$true] %s34
      %40 = dma.hbm_to_vmem [thread:$0]  %s33, 4096, %s35, [#allocation9], 256, 256, 16
    $region9: #{tpu_custom_call.1} parent=1 // pred_fallthru
      _
    // Predicated region
    $region10: #{tpu_custom_call.1} parent=1 // pred_check
      _
    $region11: #{tpu_custom_call.1} parent=1 // pred_check_branch
      %42 = sbr.rel (0) target = $region13
    $region12: #{tpu_custom_call.1} parent=1 // pred_region
      %44 = vsyncadd [#allocation9], 0
      %s46 = sshll.u32 %s2, 4
      %s47 = int_to_ptr.hbm [resolvable:$true] %s46
      %s48 = sshll.u32 [#allocation10], 4
      %s49 = int_to_ptr.vmem [resolvable:$true] %s48
      %51 = dma.hbm_to_vmem [thread:$0]  %s47, 64, %s49, [#allocation9]
    $region13: #{tpu_custom_call.1} parent=1 // pred_fallthru
      _
    // Predicated region
    $region14: #{tpu_custom_call.1} parent=1 // pred_check
      _
    $region15: #{tpu_custom_call.1} parent=1 // pred_check_branch
      %53 = sbr.rel (0) target = $region17
    $region16: #{tpu_custom_call.1} parent=1 // pred_region
      %55 = vsyncadd [#allocation12], 0
      %s56 = sshll.u32 %s3, 4
      %s57 = int_to_ptr.hbm [resolvable:$true] %s56
      %s58 = sshll.u32 [#allocation11], 4
      %s59 = int_to_ptr.vmem [resolvable:$true] %s58
      %64 = dma.hbm_to_vmem [thread:$0]  %s57, 4096, %s59, [#allocation12], 256, 256, 16
    $region17: #{tpu_custom_call.1} parent=1 // pred_fallthru
      _
    // Predicated region
    $region18: #{tpu_custom_call.1} parent=1 // pred_check
      _
    $region19: #{tpu_custom_call.1} parent=1 // pred_check_branch
      %66 = sbr.rel (0) target = $region21
    $region20: #{tpu_custom_call.1} parent=1 // pred_region
      %68 = vsyncadd [#allocation12], 0
      %s69 = sshll.u32 %s4, 4
      %s70 = int_to_ptr.hbm [resolvable:$true] %s69
      %s71 = sshll.u32 [#allocation13], 4
      %s72 = int_to_ptr.vmem [resolvable:$true] %s71
      %77 = dma.hbm_to_vmem [thread:$0]  %s70, 1024, %s72, [#allocation12], 64, 64, 4
    $region21: #{tpu_custom_call.1} parent=1 // pred_fallthru
      _
    // Predicated region
    $region22: #{tpu_custom_call.1} parent=1 // pred_check
      _
    $region23: #{tpu_custom_call.1} parent=1 // pred_check_branch
      %79 = sbr.rel (0) target = $region25
    $region24: #{tpu_custom_call.1} parent=1 // pred_region
      _
    $region25: #{tpu_custom_call.1} parent=1 // pred_fallthru
      _
    // Predicated region
    $region26: #{tpu_custom_call.1} parent=1 // pred_check
      _
    $region27: #{tpu_custom_call.1} parent=1 // pred_check_branch
      %81 = sbr.rel (0) target = $region29
    $region28: #{tpu_custom_call.1} parent=1 // pred_region
      %83 = dma.done [#allocation6], 1024
    $region29: #{tpu_custom_call.1} parent=1 // pred_fallthru
      _
    // Predicated region
    $region30: #{tpu_custom_call.1} parent=1 // pred_check
      _
    $region31: #{tpu_custom_call.1} parent=1 // pred_check_branch
      %85 = sbr.rel (0) target = $region33
    $region32: #{tpu_custom_call.1} parent=1 // pred_region
      %87 = dma.done [#allocation9], 4096
    $region33: #{tpu_custom_call.1} parent=1 // pred_fallthru
      _
    // Predicated region
    $region34: #{tpu_custom_call.1} parent=1 // pred_check
      _
    $region35: #{tpu_custom_call.1} parent=1 // pred_check_branch
      %89 = sbr.rel (0) target = $region37
    $region36: #{tpu_custom_call.1} parent=1 // pred_region
      %91 = dma.done [#allocation9], 64
    $region37: #{tpu_custom_call.1} parent=1 // pred_fallthru
      _
    // Predicated region
    $region38: #{tpu_custom_call.1} parent=1 // pred_check
      _
    $region39: #{tpu_custom_call.1} parent=1 // pred_check_branch
      %93 = sbr.rel (0) target = $region41
    $region40: #{tpu_custom_call.1} parent=1 // pred_region
      %95 = dma.done [#allocation12], 4096
    $region41: #{tpu_custom_call.1} parent=1 // pred_fallthru
      _
    // Predicated region
    $region42: #{tpu_custom_call.1} parent=1 // pred_check
      _
    $region43: #{tpu_custom_call.1} parent=1 // pred_check_branch
      %97 = sbr.rel (0) target = $region45
    $region44: #{tpu_custom_call.1} parent=1 // pred_region
      %99 = dma.done [#allocation12], 1024
    $region45: #{tpu_custom_call.1} parent=1 // pred_fallthru
      _
    %v100 = vld [vmem:[#allocation5] sm:$0xff]
    %v101 = vld [vmem:[#allocation5 + $0x8] sm:$0xff]
    %v102 = vld [vmem:[#allocation5 + $0x10] sm:$0xff]
    %v103 = vld [vmem:[#allocation5 + $0x18] sm:$0xff]
    %v104 = vld [vmem:[#allocation5 + $0x20] sm:$0xff]
    %v105 = vld [vmem:[#allocation5 + $0x28] sm:$0xff]
    %v106 = vld [vmem:[#allocation5 + $0x30] sm:$0xff]
    %v107 = vld [vmem:[#allocation5 + $0x38] sm:$0xff]
    %v108 = vpack.c.bf16 %v101, %v100
    %v109 = vpack.c.bf16 %v103, %v102
    %v110 = vpack.c.bf16 %v105, %v104
    %v111 = vpack.c.bf16 %v107, %v106
    %v112 = vld [vmem:[#allocation8] sm:$0xff]
    %v113 = vld [vmem:[#allocation8 + $0x8] sm:$0xff]
    %v114 = vld [vmem:[#allocation8 + $0x10] sm:$0xff]
    %v115 = vld [vmem:[#allocation8 + $0x18] sm:$0xff]
    %v116 = vld [vmem:[#allocation8 + $0x20] sm:$0xff]
    %v117 = vld [vmem:[#allocation8 + $0x28] sm:$0xff]
    %v118 = vld [vmem:[#allocation8 + $0x30] sm:$0xff]
    %v119 = vld [vmem:[#allocation8 + $0x38] sm:$0xff]
    %v120 = vld [vmem:[#allocation8 + $0x40] sm:$0xff]
    %v121 = vld [vmem:[#allocation8 + $0x48] sm:$0xff]
    %v122 = vld [vmem:[#allocation8 + $0x50] sm:$0xff]
    %v123 = vld [vmem:[#allocation8 + $0x58] sm:$0xff]
    %v124 = vld [vmem:[#allocation8 + $0x60] sm:$0xff]
    %v125 = vld [vmem:[#allocation8 + $0x68] sm:$0xff]
    %v126 = vld [vmem:[#allocation8 + $0x70] sm:$0xff]
    %v127 = vld [vmem:[#allocation8 + $0x78] sm:$0xff]
    %v128 = vld [vmem:[#allocation8 + $0x80] sm:$0xff]
    %v129 = vld [vmem:[#allocation8 + $0x88] sm:$0xff]
    %v130 = vld [vmem:[#allocation8 + $0x90] sm:$0xff]
    %v131 = vld [vmem:[#allocation8 + $0x98] sm:$0xff]
    %v132 = vld [vmem:[#allocation8 + $0xa0] sm:$0xff]
    %v133 = vld [vmem:[#allocation8 + $0xa8] sm:$0xff]
    %v134 = vld [vmem:[#allocation8 + $0xb0] sm:$0xff]
    %v135 = vld [vmem:[#allocation8 + $0xb8] sm:$0xff]
    %v136 = vld [vmem:[#allocation8 + $0xc0] sm:$0xff]
    %v137 = vld [vmem:[#allocation8 + $0xc8] sm:$0xff]
    %v138 = vld [vmem:[#allocation8 + $0xd0] sm:$0xff]
    %v139 = vld [vmem:[#allocation8 + $0xd8] sm:$0xff]
    %v140 = vld [vmem:[#allocation8 + $0xe0] sm:$0xff]
    %v141 = vld [vmem:[#allocation8 + $0xe8] sm:$0xff]
    %v142 = vld [vmem:[#allocation8 + $0xf0] sm:$0xff]
    %v143 = vld [vmem:[#allocation8 + $0xf8] sm:$0xff]
    %v144 = vld [vmem:[#allocation10] sm:$0xf]
    %v146 = vperm.slane %v144, 0
    %v147 = vperm.slane %v144, 1
    %v148 = vperm.slane %v144, 2
    %v149 = vperm.slane %v144, 3
    %v186 = vunpack.c.l.b16 %v112
    %v187 = vunpack.c.h.b16 %v112
    %v188 = vunpack.c.l.b16 %v113
    %v189 = vunpack.c.h.b16 %v113
    %v190 = vunpack.c.l.b16 %v114
    %v191 = vunpack.c.h.b16 %v114
    %v192 = vunpack.c.l.b16 %v115
    %v193 = vunpack.c.h.b16 %v115
    %v194 = vunpack.c.l.b16 %v116
    %v195 = vunpack.c.h.b16 %v116
    %v196 = vunpack.c.l.b16 %v117
    %v197 = vunpack.c.h.b16 %v117
    %v198 = vunpack.c.l.b16 %v118
    %v199 = vunpack.c.h.b16 %v118
    %v200 = vunpack.c.l.b16 %v119
    %v201 = vunpack.c.h.b16 %v119
    %v202 = vunpack.c.l.b16 %v120
    %v203 = vunpack.c.h.b16 %v120
    %v204 = vunpack.c.l.b16 %v121
    %v205 = vunpack.c.h.b16 %v121
    %v206 = vunpack.c.l.b16 %v122
    %v207 = vunpack.c.h.b16 %v122
    %v208 = vunpack.c.l.b16 %v123
    %v209 = vunpack.c.h.b16 %v123
    %v210 = vunpack.c.l.b16 %v124
    %v211 = vunpack.c.h.b16 %v124
    %v212 = vunpack.c.l.b16 %v125
    %v213 = vunpack.c.h.b16 %v125
    %v214 = vunpack.c.l.b16 %v126
    %v215 = vunpack.c.h.b16 %v126
    %v216 = vunpack.c.l.b16 %v127
    %v217 = vunpack.c.h.b16 %v127
    %v218 = vunpack.c.l.b16 %v128
    %v219 = vunpack.c.h.b16 %v128
    %v220 = vunpack.c.l.b16 %v129
    %v221 = vunpack.c.h.b16 %v129
    %v222 = vunpack.c.l.b16 %v130
    %v223 = vunpack.c.h.b16 %v130
    %v224 = vunpack.c.l.b16 %v131
    %v225 = vunpack.c.h.b16 %v131
    %v226 = vunpack.c.l.b16 %v132
    %v227 = vunpack.c.h.b16 %v132
    %v228 = vunpack.c.l.b16 %v133
    %v229 = vunpack.c.h.b16 %v133
    %v230 = vunpack.c.l.b16 %v134
    %v231 = vunpack.c.h.b16 %v134
    %v232 = vunpack.c.l.b16 %v135
    %v233 = vunpack.c.h.b16 %v135
    %v234 = vunpack.c.l.b16 %v136
    %v235 = vunpack.c.h.b16 %v136
    %v236 = vunpack.c.l.b16 %v137
    %v237 = vunpack.c.h.b16 %v137
    %v238 = vunpack.c.l.b16 %v138
    %v239 = vunpack.c.h.b16 %v138
    %v240 = vunpack.c.l.b16 %v139
    %v241 = vunpack.c.h.b16 %v139
    %v242 = vunpack.c.l.b16 %v140
    %v243 = vunpack.c.h.b16 %v140
    %v244 = vunpack.c.l.b16 %v141
    %v245 = vunpack.c.h.b16 %v141
    %v246 = vunpack.c.l.b16 %v142
    %v247 = vunpack.c.h.b16 %v142
    %v248 = vunpack.c.l.b16 %v143
    %v249 = vunpack.c.h.b16 %v143
    %v250 = vpack.c.b16 %v190, %v186
    %v251 = vpack.c.b16 %v191, %v187
    %v252 = vpack.c.b16 %v192, %v188
    %v253 = vpack.c.b16 %v193, %v189
    %v254 = vpack.c.b16 %v198, %v194
    %v255 = vpack.c.b16 %v199, %v195
    %v256 = vpack.c.b16 %v200, %v196
    %v257 = vpack.c.b16 %v201, %v197
    %v258 = vpack.c.b16 %v206, %v202
    %v259 = vpack.c.b16 %v207, %v203
    %v260 = vpack.c.b16 %v208, %v204
    %v261 = vpack.c.b16 %v209, %v205
    %v262 = vpack.c.b16 %v214, %v210
    %v263 = vpack.c.b16 %v215, %v211
    %v264 = vpack.c.b16 %v216, %v212
    %v265 = vpack.c.b16 %v217, %v213
    %v266 = vpack.c.b16 %v222, %v218
    %v267 = vpack.c.b16 %v223, %v219
    %v268 = vpack.c.b16 %v224, %v220
    %v269 = vpack.c.b16 %v225, %v221
    %v270 = vpack.c.b16 %v230, %v226
    %v271 = vpack.c.b16 %v231, %v227
    %v272 = vpack.c.b16 %v232, %v228
    %v273 = vpack.c.b16 %v233, %v229
    %v274 = vpack.c.b16 %v238, %v234
    %v275 = vpack.c.b16 %v239, %v235
    %v276 = vpack.c.b16 %v240, %v236
    %v277 = vpack.c.b16 %v241, %v237
    %v278 = vpack.c.b16 %v246, %v242
    %v279 = vpack.c.b16 %v247, %v243
    %v280 = vpack.c.b16 %v248, %v244
    %v281 = vpack.c.b16 %v249, %v245
    %314 = vmatpush.bf16.msra.mxu0 %v278
    %315 = vmatpush.bf16.msra.mxu0 %v274
    %316 = vmatpush.bf16.msra.mxu0 %v270
    %317 = vmatpush.bf16.msra.mxu0 %v266
    %318 = vmatpush.bf16.msra.mxu0 %v262
    %319 = vmatpush.bf16.msra.mxu0 %v258
    %320 = vmatpush.bf16.msra.mxu0 %v254
    %321 = vmatpush.bf16.msra.mxu0 %v250
    %322 = vmatmul.bf16.gmra.mxu0 %v108
    %v323 = vpop.f32.mrf.mxu0
    %v324 = vadd.f32 %v146, %v323
    %v325 = vpop.f32.mrf.mxu0
    %v326 = vadd.f32 %v146, %v325
    %327 = vmatmul.bf16.gmra.mxu0 %v109
    %v328 = vpop.f32.mrf.mxu0
    %v329 = vadd.f32 %v146, %v328
    %v330 = vpop.f32.mrf.mxu0
    %v331 = vadd.f32 %v146, %v330
    %332 = vmatmul.bf16.gmra.mxu0 %v110
    %v333 = vpop.f32.mrf.mxu0
    %v334 = vadd.f32 %v146, %v333
    %v335 = vpop.f32.mrf.mxu0
    %v336 = vadd.f32 %v146, %v335
    %337 = vmatmul.bf16.gmra.mxu0 %v111
    %v338 = vpop.f32.mrf.mxu0
    %v339 = vadd.f32 %v146, %v338
    %v340 = vpop.f32.mrf.mxu0
    %v341 = vadd.f32 %v146, %v340
    %342 = vdwg.mxu0
    %343 = vmatpush.bf16.msra.mxu0 %v279
    %344 = vmatpush.bf16.msra.mxu0 %v275
    %345 = vmatpush.bf16.msra.mxu0 %v271
    %346 = vmatpush.bf16.msra.mxu0 %v267
    %347 = vmatpush.bf16.msra.mxu0 %v263
    %348 = vmatpush.bf16.msra.mxu0 %v259
    %349 = vmatpush.bf16.msra.mxu0 %v255
    %350 = vmatpush.bf16.msra.mxu0 %v251
    %351 = vmatmul.bf16.gmra.mxu0 %v108
    %v352 = vpop.f32.mrf.mxu0
    %v353 = vadd.f32 %v147, %v352
    %v354 = vpop.f32.mrf.mxu0
    %v355 = vadd.f32 %v147, %v354
    %356 = vmatmul.bf16.gmra.mxu0 %v109
    %v357 = vpop.f32.mrf.mxu0
    %v358 = vadd.f32 %v147, %v357
    %v359 = vpop.f32.mrf.mxu0
    %v360 = vadd.f32 %v147, %v359
    %361 = vmatmul.bf16.gmra.mxu0 %v110
    %v362 = vpop.f32.mrf.mxu0
    %v363 = vadd.f32 %v147, %v362
    %v364 = vpop.f32.mrf.mxu0
    %v365 = vadd.f32 %v147, %v364
    %366 = vmatmul.bf16.gmra.mxu0 %v111
    %v367 = vpop.f32.mrf.mxu0
    %v368 = vadd.f32 %v147, %v367
    %v369 = vpop.f32.mrf.mxu0
    %v370 = vadd.f32 %v147, %v369
    %371 = vdwg.mxu0
    %372 = vmatpush.bf16.msra.mxu0 %v280
    %373 = vmatpush.bf16.msra.mxu0 %v276
    %374 = vmatpush.bf16.msra.mxu0 %v272
    %375 = vmatpush.bf16.msra.mxu0 %v268
    %376 = vmatpush.bf16.msra.mxu0 %v264
    %377 = vmatpush.bf16.msra.mxu0 %v260
    %378 = vmatpush.bf16.msra.mxu0 %v256
    %379 = vmatpush.bf16.msra.mxu0 %v252
    %380 = vmatmul.bf16.gmra.mxu0 %v108
    %v381 = vpop.f32.mrf.mxu0
    %v382 = vadd.f32 %v148, %v381
    %v383 = vpop.f32.mrf.mxu0
    %v384 = vadd.f32 %v148, %v383
    %385 = vmatmul.bf16.gmra.mxu0 %v109
    %v386 = vpop.f32.mrf.mxu0
    %v387 = vadd.f32 %v148, %v386
    %v388 = vpop.f32.mrf.mxu0
    %v389 = vadd.f32 %v148, %v388
    %390 = vmatmul.bf16.gmra.mxu0 %v110
    %v391 = vpop.f32.mrf.mxu0
    %v392 = vadd.f32 %v148, %v391
    %v393 = vpop.f32.mrf.mxu0
    %v394 = vadd.f32 %v148, %v393
    %395 = vmatmul.bf16.gmra.mxu0 %v111
    %v396 = vpop.f32.mrf.mxu0
    %v397 = vadd.f32 %v148, %v396
    %v398 = vpop.f32.mrf.mxu0
    %v399 = vadd.f32 %v148, %v398
    %400 = vdwg.mxu0
    %401 = vmatpush.bf16.msra.mxu0 %v281
    %402 = vmatpush.bf16.msra.mxu0 %v277
    %403 = vmatpush.bf16.msra.mxu0 %v273
    %404 = vmatpush.bf16.msra.mxu0 %v269
    %405 = vmatpush.bf16.msra.mxu0 %v265
    %406 = vmatpush.bf16.msra.mxu0 %v261
    %407 = vmatpush.bf16.msra.mxu0 %v257
    %408 = vmatpush.bf16.msra.mxu0 %v253
    %409 = vmatmul.bf16.gmra.mxu0 %v108
    %v410 = vpop.f32.mrf.mxu0
    %v411 = vadd.f32 %v149, %v410
    %v412 = vpop.f32.mrf.mxu0
    %v413 = vadd.f32 %v149, %v412
    %414 = vmatmul.bf16.gmra.mxu0 %v109
    %v415 = vpop.f32.mrf.mxu0
    %v416 = vadd.f32 %v149, %v415
    %v417 = vpop.f32.mrf.mxu0
    %v418 = vadd.f32 %v149, %v417
    %419 = vmatmul.bf16.gmra.mxu0 %v110
    %v420 = vpop.f32.mrf.mxu0
    %v421 = vadd.f32 %v149, %v420
    %v422 = vpop.f32.mrf.mxu0
    %v423 = vadd.f32 %v149, %v422
    %424 = vmatmul.bf16.gmra.mxu0 %v111
    %v425 = vpop.f32.mrf.mxu0
    %v426 = vadd.f32 %v149, %v425
    %v427 = vpop.f32.mrf.mxu0
    %v428 = vadd.f32 %v149, %v427
    %429 = vdwg.mxu0
    %430 = vst [vmem:[#allocation2] sm:$0xff] %v324
    %431 = vst [vmem:[#allocation2 + $0x8] sm:$0xff] %v353
    %432 = vst [vmem:[#allocation2 + $0x10] sm:$0xff] %v382
    %433 = vst [vmem:[#allocation2 + $0x18] sm:$0xff] %v411
    %434 = vst [vmem:[#allocation2 + $0x20] sm:$0xff] %v326
    %435 = vst [vmem:[#allocation2 + $0x28] sm:$0xff] %v355
    %436 = vst [vmem:[#allocation2 + $0x30] sm:$0xff] %v384
    %437 = vst [vmem:[#allocation2 + $0x38] sm:$0xff] %v413
    %438 = vst [vmem:[#allocation2 + $0x40] sm:$0xff] %v329
    %439 = vst [vmem:[#allocation2 + $0x48] sm:$0xff] %v358
    %440 = vst [vmem:[#allocation2 + $0x50] sm:$0xff] %v387
    %441 = vst [vmem:[#allocation2 + $0x58] sm:$0xff] %v416
    %442 = vst [vmem:[#allocation2 + $0x60] sm:$0xff] %v331
    %443 = vst [vmem:[#allocation2 + $0x68] sm:$0xff] %v360
    %444 = vst [vmem:[#allocation2 + $0x70] sm:$0xff] %v389
    %445 = vst [vmem:[#allocation2 + $0x78] sm:$0xff] %v418
    %446 = vst [vmem:[#allocation2 + $0x80] sm:$0xff] %v334
    %447 = vst [vmem:[#allocation2 + $0x88] sm:$0xff] %v363
    %448 = vst [vmem:[#allocation2 + $0x90] sm:$0xff] %v392
    %449 = vst [vmem:[#allocation2 + $0x98] sm:$0xff] %v421
    %450 = vst [vmem:[#allocation2 + $0xa0] sm:$0xff] %v336
    %451 = vst [vmem:[#allocation2 + $0xa8] sm:$0xff] %v365
    %452 = vst [vmem:[#allocation2 + $0xb0] sm:$0xff] %v394
    %453 = vst [vmem:[#allocation2 + $0xb8] sm:$0xff] %v423
    %454 = vst [vmem:[#allocation2 + $0xc0] sm:$0xff] %v339
    %455 = vst [vmem:[#allocation2 + $0xc8] sm:$0xff] %v368
    %456 = vst [vmem:[#allocation2 + $0xd0] sm:$0xff] %v397
    %457 = vst [vmem:[#allocation2 + $0xd8] sm:$0xff] %v426
    %458 = vst [vmem:[#allocation2 + $0xe0] sm:$0xff] %v341
    %459 = vst [vmem:[#allocation2 + $0xe8] sm:$0xff] %v370
    %460 = vst [vmem:[#allocation2 + $0xf0] sm:$0xff] %v399
    %461 = vst [vmem:[#allocation2 + $0xf8] sm:$0xff] %v428
    %462 = vst [vmem:[#allocation3] sm:$0xff] 0.0
    %463 = vst [vmem:[#allocation4] sm:$0xff] 0.0
    %v464 = vld [vmem:[#allocation3] sm:$0xff]
    %v465 = vld [vmem:[#allocation4] sm:$0xff]
    %v466 = vld [vmem:[#allocation2] sm:$0xff]
    %v467 = vld [vmem:[#allocation2 + $0x8] sm:$0xff]
    %v468 = vld [vmem:[#allocation2 + $0x10] sm:$0xff]
    %v469 = vld [vmem:[#allocation2 + $0x18] sm:$0xff]
    %v470 = vpack.c.bf16 %v464, %v464
    %v471 = vld [vmem:[#allocation11] sm:$0xff]
    %v472 = vld [vmem:[#allocation11 + $0x8] sm:$0xff]
    %v473 = vld [vmem:[#allocation11 + $0x10] sm:$0xff]
    %v474 = vld [vmem:[#allocation11 + $0x18] sm:$0xff]
    %v475 = vld [vmem:[#allocation11 + $0x20] sm:$0xff]
    %v476 = vld [vmem:[#allocation11 + $0x28] sm:$0xff]
    %v477 = vld [vmem:[#allocation11 + $0x30] sm:$0xff]
    %v478 = vld [vmem:[#allocation11 + $0x38] sm:$0xff]
    %v479 = vld [vmem:[#allocation11 + $0x40] sm:$0xff]
    %v480 = vld [vmem:[#allocation11 + $0x48] sm:$0xff]
    %v481 = vld [vmem:[#allocation11 + $0x50] sm:$0xff]
    %v482 = vld [vmem:[#allocation11 + $0x58] sm:$0xff]
    %v483 = vld [vmem:[#allocation11 + $0x60] sm:$0xff]
    %v484 = vld [vmem:[#allocation11 + $0x68] sm:$0xff]
    %v485 = vld [vmem:[#allocation11 + $0x70] sm:$0xff]
    %v486 = vld [vmem:[#allocation11 + $0x78] sm:$0xff]
    %v487 = vld [vmem:[#allocation11 + $0x80] sm:$0xff]
    %v488 = vld [vmem:[#allocation11 + $0x88] sm:$0xff]
    %v489 = vld [vmem:[#allocation11 + $0x90] sm:$0xff]
    %v490 = vld [vmem:[#allocation11 + $0x98] sm:$0xff]
    %v491 = vld [vmem:[#allocation11 + $0xa0] sm:$0xff]
    %v492 = vld [vmem:[#allocation11 + $0xa8] sm:$0xff]
    %v493 = vld [vmem:[#allocation11 + $0xb0] sm:$0xff]
    %v494 = vld [vmem:[#allocation11 + $0xb8] sm:$0xff]
    %v495 = vld [vmem:[#allocation11 + $0xc0] sm:$0xff]
    %v496 = vld [vmem:[#allocation11 + $0xc8] sm:$0xff]
    %v497 = vld [vmem:[#allocation11 + $0xd0] sm:$0xff]
    %v498 = vld [vmem:[#allocation11 + $0xd8] sm:$0xff]
    %v499 = vld [vmem:[#allocation11 + $0xe0] sm:$0xff]
    %v500 = vld [vmem:[#allocation11 + $0xe8] sm:$0xff]
    %v501 = vld [vmem:[#allocation11 + $0xf0] sm:$0xff]
    %v502 = vld [vmem:[#allocation11 + $0xf8] sm:$0xff]
    %v535 = vunpack.c.l.b16 %v471
    %v536 = vunpack.c.h.b16 %v471
    %v537 = vunpack.c.l.b16 %v472
    %v538 = vunpack.c.h.b16 %v472
    %v539 = vunpack.c.l.b16 %v473
    %v540 = vunpack.c.h.b16 %v473
    %v541 = vunpack.c.l.b16 %v474
    %v542 = vunpack.c.h.b16 %v474
    %v543 = vunpack.c.l.b16 %v475
    %v544 = vunpack.c.h.b16 %v475
    %v545 = vunpack.c.l.b16 %v476
    %v546 = vunpack.c.h.b16 %v476
    %v547 = vunpack.c.l.b16 %v477
    %v548 = vunpack.c.h.b16 %v477
    %v549 = vunpack.c.l.b16 %v478
    %v550 = vunpack.c.h.b16 %v478
    %v551 = vunpack.c.l.b16 %v479
    %v552 = vunpack.c.h.b16 %v479
    %v553 = vunpack.c.l.b16 %v480
    %v554 = vunpack.c.h.b16 %v480
    %v555 = vunpack.c.l.b16 %v481
    %v556 = vunpack.c.h.b16 %v481
    %v557 = vunpack.c.l.b16 %v482
    %v558 = vunpack.c.h.b16 %v482
    %v559 = vunpack.c.l.b16 %v483
    %v560 = vunpack.c.h.b16 %v483
    %v561 = vunpack.c.l.b16 %v484
    %v562 = vunpack.c.h.b16 %v484
    %v563 = vunpack.c.l.b16 %v485
    %v564 = vunpack.c.h.b16 %v485
    %v565 = vunpack.c.l.b16 %v486
    %v566 = vunpack.c.h.b16 %v486
    %v567 = vunpack.c.l.b16 %v487
    %v568 = vunpack.c.h.b16 %v487
    %v569 = vunpack.c.l.b16 %v488
    %v570 = vunpack.c.h.b16 %v488
    %v571 = vunpack.c.l.b16 %v489
    %v572 = vunpack.c.h.b16 %v489
    %v573 = vunpack.c.l.b16 %v490
    %v574 = vunpack.c.h.b16 %v490
    %v575 = vunpack.c.l.b16 %v491
    %v576 = vunpack.c.h.b16 %v491
    %v577 = vunpack.c.l.b16 %v492
    %v578 = vunpack.c.h.b16 %v492
    %v579 = vunpack.c.l.b16 %v493
    %v580 = vunpack.c.h.b16 %v493
    %v581 = vunpack.c.l.b16 %v494
    %v582 = vunpack.c.h.b16 %v494
    %v583 = vunpack.c.l.b16 %v495
    %v584 = vunpack.c.h.b16 %v495
    %v585 = vunpack.c.l.b16 %v496
    %v586 = vunpack.c.h.b16 %v496
    %v587 = vunpack.c.l.b16 %v497
    %v588 = vunpack.c.h.b16 %v497
    %v589 = vunpack.c.l.b16 %v498
    %v590 = vunpack.c.h.b16 %v498
    %v591 = vunpack.c.l.b16 %v499
    %v592 = vunpack.c.h.b16 %v499
    %v593 = vunpack.c.l.b16 %v500
    %v594 = vunpack.c.h.b16 %v500
    %v595 = vunpack.c.l.b16 %v501
    %v596 = vunpack.c.h.b16 %v501
    %v597 = vunpack.c.l.b16 %v502
    %v598 = vunpack.c.h.b16 %v502
    %v599 = vpack.c.b16 %v539, %v535
    %v600 = vpack.c.b16 %v540, %v536
    %v601 = vpack.c.b16 %v541, %v537
    %v602 = vpack.c.b16 %v542, %v538
    %v603 = vpack.c.b16 %v547, %v543
    %v604 = vpack.c.b16 %v548, %v544
    %v605 = vpack.c.b16 %v549, %v545
    %v606 = vpack.c.b16 %v550, %v546
    %v607 = vpack.c.b16 %v555, %v551
    %v608 = vpack.c.b16 %v556, %v552
    %v609 = vpack.c.b16 %v557, %v553
    %v610 = vpack.c.b16 %v558, %v554
    %v611 = vpack.c.b16 %v563, %v559
    %v612 = vpack.c.b16 %v564, %v560
    %v613 = vpack.c.b16 %v565, %v561
    %v614 = vpack.c.b16 %v566, %v562
    %v615 = vpack.c.b16 %v571, %v567
    %v616 = vpack.c.b16 %v572, %v568
    %v617 = vpack.c.b16 %v573, %v569
    %v618 = vpack.c.b16 %v574, %v570
    %v619 = vpack.c.b16 %v579, %v575
    %v620 = vpack.c.b16 %v580, %v576
    %v621 = vpack.c.b16 %v581, %v577
    %v622 = vpack.c.b16 %v582, %v578
    %v623 = vpack.c.b16 %v587, %v583
    %v624 = vpack.c.b16 %v588, %v584
    %v625 = vpack.c.b16 %v589, %v585
    %v626 = vpack.c.b16 %v590, %v586
    %v627 = vpack.c.b16 %v595, %v591
    %v628 = vpack.c.b16 %v596, %v592
    %v629 = vpack.c.b16 %v597, %v593
    %v630 = vpack.c.b16 %v598, %v594
    %663 = vmatpush.bf16.msra.mxu0 %v627
    %664 = vmatpush.bf16.msra.mxu0 %v623
    %665 = vmatpush.bf16.msra.mxu0 %v619
    %666 = vmatpush.bf16.msra.mxu0 %v615
    %667 = vmatpush.bf16.msra.mxu0 %v611
    %668 = vmatpush.bf16.msra.mxu0 %v607
    %669 = vmatpush.bf16.msra.mxu0 %v603
    %670 = vmatpush.bf16.msra.mxu0 %v599
    %671 = vmatmul.bf16.gmra.mxu0 %v470
    %v672 = vpop.f32.mrf.mxu0
    %v673 = vadd.f32 0.0, %v672
    %v674 = vpop.f32.mrf.mxu0
    %675 = vdwg.mxu0
    %676 = vmatpush.bf16.msra.mxu0 %v628
    %677 = vmatpush.bf16.msra.mxu0 %v624
    %678 = vmatpush.bf16.msra.mxu0 %v620
    %679 = vmatpush.bf16.msra.mxu0 %v616
    %680 = vmatpush.bf16.msra.mxu0 %v612
    %681 = vmatpush.bf16.msra.mxu0 %v608
    %682 = vmatpush.bf16.msra.mxu0 %v604
    %683 = vmatpush.bf16.msra.mxu0 %v600
    %684 = vmatmul.bf16.gmra.mxu0 %v470
    %v685 = vpop.f32.mrf.mxu0
    %v686 = vadd.f32 0.0, %v685
    %v687 = vpop.f32.mrf.mxu0
    %688 = vdwg.mxu0
    %689 = vmatpush.bf16.msra.mxu0 %v629
    %690 = vmatpush.bf16.msra.mxu0 %v625
    %691 = vmatpush.bf16.msra.mxu0 %v621
    %692 = vmatpush.bf16.msra.mxu0 %v617
    %693 = vmatpush.bf16.msra.mxu0 %v613
    %694 = vmatpush.bf16.msra.mxu0 %v609
    %695 = vmatpush.bf16.msra.mxu0 %v605
    %696 = vmatpush.bf16.msra.mxu0 %v601
    %697 = vmatmul.bf16.gmra.mxu0 %v470
    %v698 = vpop.f32.mrf.mxu0
    %v699 = vadd.f32 0.0, %v698
    %v700 = vpop.f32.mrf.mxu0
    %701 = vdwg.mxu0
    %702 = vmatpush.bf16.msra.mxu0 %v630
    %703 = vmatpush.bf16.msra.mxu0 %v626
    %704 = vmatpush.bf16.msra.mxu0 %v622
    %705 = vmatpush.bf16.msra.mxu0 %v618
    %706 = vmatpush.bf16.msra.mxu0 %v614
    %707 = vmatpush.bf16.msra.mxu0 %v610
    %708 = vmatpush.bf16.msra.mxu0 %v606
    %709 = vmatpush.bf16.msra.mxu0 %v602
    %710 = vmatmul.bf16.gmra.mxu0 %v470
    %v711 = vpop.f32.mrf.mxu0
    %v712 = vadd.f32 0.0, %v711
    %v713 = vpop.f32.mrf.mxu0
    %714 = vdwg.mxu0
    %v715 = vadd.f32 %v466, %v673
    %v716 = vadd.f32 %v467, %v686
    %v717 = vadd.f32 %v468, %v699
    %v718 = vadd.f32 %v469, %v712
    %v719 = vxor.u32 %v715, 2147483648
    %v720 = vmul.f32 %v719, 1.442695
    %v721 = vpow.pop %v720
    %v722 = vadd.f32 %v721, 1.0
    %v723 = vrcp.pop %v722
    %v724 = vmul.f32 %v722, %v723
    %v725 = vsub.f32 1.0, %v724
    %v726 = vmul.f32 %v723, %v725
    %v727 = vadd.f32 %v723, %v726
    %vm728 = vweird.f32 %v722
    %vm729 = vweird.f32 %v723
    %vm730 = vmor %vm728, %vm729
    %v731 = vsel %vm730, %v723, %v727
    %v732 = vand.u32 2147483647, %v722
    %vm733 = vcmp.eq.f32.partialorder %v732, 8.507059e+37
    %v734 = vand.u32 %v722, 2147483648
    %v735 = vor.u32 1.1754944e-38, %v734
    %v736 = vsel %vm733, %v735, %v731
    %v737 = vmul.f32 1.0, %v736
    %v738 = vxor.u32 %v716, 2147483648
    %v739 = vmul.f32 %v738, 1.442695
    %v740 = vpow.pop %v739
    %v741 = vadd.f32 %v740, 1.0
    %v742 = vrcp.pop %v741
    %v743 = vmul.f32 %v741, %v742
    %v744 = vsub.f32 1.0, %v743
    %v745 = vmul.f32 %v742, %v744
    %v746 = vadd.f32 %v742, %v745
    %vm747 = vweird.f32 %v741
    %vm748 = vweird.f32 %v742
    %vm749 = vmor %vm747, %vm748
    %v750 = vsel %vm749, %v742, %v746
    %v751 = vand.u32 2147483647, %v741
    %vm752 = vcmp.eq.f32.partialorder %v751, 8.507059e+37
    %v753 = vand.u32 %v741, 2147483648
    %v754 = vor.u32 1.1754944e-38, %v753
    %v755 = vsel %vm752, %v754, %v750
    %v756 = vmul.f32 1.0, %v755
    %v757 = vtanh.pop %v717
    %v758 = vxor.u32 %v718, 2147483648
    %v759 = vmul.f32 %v758, 1.442695
    %v760 = vpow.pop %v759
    %v761 = vadd.f32 %v760, 1.0
    %v762 = vrcp.pop %v761
    %v763 = vmul.f32 %v761, %v762
    %v764 = vsub.f32 1.0, %v763
    %v765 = vmul.f32 %v762, %v764
    %v766 = vadd.f32 %v762, %v765
    %vm767 = vweird.f32 %v761
    %vm768 = vweird.f32 %v762
    %vm769 = vmor %vm767, %vm768
    %v770 = vsel %vm769, %v762, %v766
    %v771 = vand.u32 2147483647, %v761
    %vm772 = vcmp.eq.f32.partialorder %v771, 8.507059e+37
    %v773 = vand.u32 %v761, 2147483648
    %v774 = vor.u32 1.1754944e-38, %v773
    %v775 = vsel %vm772, %v774, %v770
    %v776 = vmul.f32 1.0, %v775
    %v777 = vmul.f32 %v756, %v465
    %v778 = vmul.f32 %v737, %v757
    %v779 = vadd.f32 %v777, %v778
    %v780 = vtanh.pop %v779
    %v781 = vmul.f32 %v776, %v780
    %782 = vst [vmem:[#allocation4] sm:$0xff] %v779
    %783 = vst [vmem:[#allocation3] sm:$0xff] %v781
    %v784 = vpack.c.bf16 %v781, %v781
    %v785 = vld [vmem:[#allocation13] sm:$0xf]
    %v786 = vld [vmem:[#allocation13 + $0x4] sm:$0xf]
    %v787 = vld [vmem:[#allocation13 + $0x8] sm:$0xf]
    %v788 = vld [vmem:[#allocation13 + $0xc] sm:$0xf]
    %v789 = vld [vmem:[#allocation13 + $0x10] sm:$0xf]
    %v790 = vld [vmem:[#allocation13 + $0x14] sm:$0xf]
    %v791 = vld [vmem:[#allocation13 + $0x18] sm:$0xf]
    %v792 = vld [vmem:[#allocation13 + $0x1c] sm:$0xf]
    %v793 = vld [vmem:[#allocation13 + $0x20] sm:$0xf]
    %v794 = vld [vmem:[#allocation13 + $0x24] sm:$0xf]
    %v795 = vld [vmem:[#allocation13 + $0x28] sm:$0xf]
    %v796 = vld [vmem:[#allocation13 + $0x2c] sm:$0xf]
    %v797 = vld [vmem:[#allocation13 + $0x30] sm:$0xf]
    %v798 = vld [vmem:[#allocation13 + $0x34] sm:$0xf]
    %v799 = vld [vmem:[#allocation13 + $0x38] sm:$0xf]
    %v800 = vld [vmem:[#allocation13 + $0x3c] sm:$0xf]
    %v801 = vld [vmem:[%s5] sm:$0x1]
    %v803 = vperm.slane %v801, 0
    %v821 = vunpack.c.l.b16 %v785
    %v822 = vunpack.c.l.b16 %v786
    %v823 = vunpack.c.l.b16 %v787
    %v824 = vunpack.c.l.b16 %v788
    %v825 = vunpack.c.l.b16 %v789
    %v826 = vunpack.c.l.b16 %v790
    %v827 = vunpack.c.l.b16 %v791
    %v828 = vunpack.c.l.b16 %v792
    %v829 = vunpack.c.l.b16 %v793
    %v830 = vunpack.c.l.b16 %v794
    %v831 = vunpack.c.l.b16 %v795
    %v832 = vunpack.c.l.b16 %v796
    %v833 = vunpack.c.l.b16 %v797
    %v834 = vunpack.c.l.b16 %v798
    %v835 = vunpack.c.l.b16 %v799
    %v836 = vunpack.c.l.b16 %v800
    %v837 = vpack.c.b16 %v822, %v821
    %v838 = vpack.c.b16 %v824, %v823
    %v839 = vpack.c.b16 %v826, %v825
    %v840 = vpack.c.b16 %v828, %v827
    %v841 = vpack.c.b16 %v830, %v829
    %v842 = vpack.c.b16 %v832, %v831
    %v843 = vpack.c.b16 %v834, %v833
    %v844 = vpack.c.b16 %v836, %v835
    %853 = vmatpush.bf16.msra.mxu0 %v844
    %854 = vmatpush.bf16.msra.mxu0 %v843
    %855 = vmatpush.bf16.msra.mxu0 %v842
    %856 = vmatpush.bf16.msra.mxu0 %v841
    %857 = vmatpush.bf16.msra.mxu0 %v840
    %858 = vmatpush.bf16.msra.mxu0 %v839
    %859 = vmatpush.bf16.msra.mxu0 %v838
    %860 = vmatpush.bf16.msra.mxu0 %v837
    %861 = vmatmul.bf16.gmra.mxu0 %v784
    %v862 = vpop.f32.mrf.mxu0
    %v863 = vadd.f32 %v803, %v862
    %v864 = vpop.f32.mrf.mxu0
    %865 = vdwg.mxu0
    %866 = vst [vmem:[#allocation14] sm:$0xff] %v863
    %v867 = vld [vmem:[#allocation3] sm:$0xff]
    %v868 = vld [vmem:[#allocation4] sm:$0xff]
    %v869 = vld [vmem:[#allocation2 + $0x20] sm:$0xff]
    %v870 = vld [vmem:[#allocation2 + $0x28] sm:$0xff]
    %v871 = vld [vmem:[#allocation2 + $0x30] sm:$0xff]
    %v872 = vld [vmem:[#allocation2 + $0x38] sm:$0xff]
    %v873 = vpack.c.bf16 %v867, %v867
    %v874 = vld [vmem:[#allocation11] sm:$0xff]
    %v875 = vld [vmem:[#allocation11 + $0x8] sm:$0xff]
    %v876 = vld [vmem:[#allocation11 + $0x10] sm:$0xff]
    %v877 = vld [vmem:[#allocation11 + $0x18] sm:$0xff]
    %v878 = vld [vmem:[#allocation11 + $0x20] sm:$0xff]
    %v879 = vld [vmem:[#allocation11 + $0x28] sm:$0xff]
    %v880 = vld [vmem:[#allocation11 + $0x30] sm:$0xff]
    %v881 = vld [vmem:[#allocation11 + $0x38] sm:$0xff]
    %v882 = vld [vmem:[#allocation11 + $0x40] sm:$0xff]
    %v883 = vld [vmem:[#allocation11 + $0x48] sm:$0xff]
    %v884 = vld [vmem:[#allocation11 + $0x50] sm:$0xff]
    %v885 = vld [vmem:[#allocation11 + $0x58] sm:$0xff]
    %v886 = vld [vmem:[#allocation11 + $0x60] sm:$0xff]
    %v887 = vld [vmem:[#allocation11 + $0x68] sm:$0xff]
    %v888 = vld [vmem:[#allocation11 + $0x70] sm:$0xff]
    %v889 = vld [vmem:[#allocation11 + $0x78] sm:$0xff]
    %v890 = vld [vmem:[#allocation11 + $0x80] sm:$0xff]
    %v891 = vld [vmem:[#allocation11 + $0x88] sm:$0xff]
    %v892 = vld [vmem:[#allocation11 + $0x90] sm:$0xff]
    %v893 = vld [vmem:[#allocation11 + $0x98] sm:$0xff]
    %v894 = vld [vmem:[#allocation11 + $0xa0] sm:$0xff]
    %v895 = vld [vmem:[#allocation11 + $0xa8] sm:$0xff]
    %v896 = vld [vmem:[#allocation11 + $0xb0] sm:$0xff]
    %v897 = vld [vmem:[#allocation11 + $0xb8] sm:$0xff]
    %v898 = vld [vmem:[#allocation11 + $0xc0] sm:$0xff]
    %v899 = vld [vmem:[#allocation11 + $0xc8] sm:$0xff]
    %v900 = vld [vmem:[#allocation11 + $0xd0] sm:$0xff]
    %v901 = vld [vmem:[#allocation11 + $0xd8] sm:$0xff]
    %v902 = vld [vmem:[#allocation11 + $0xe0] sm:$0xff]
    %v903 = vld [vmem:[#allocation11 + $0xe8] sm:$0xff]
    %v904 = vld [vmem:[#allocation11 + $0xf0] sm:$0xff]
    %v905 = vld [vmem:[#allocation11 + $0xf8] sm:$0xff]
    %v938 = vunpack.c.l.b16 %v874
    %v939 = vunpack.c.h.b16 %v874
    %v940 = vunpack.c.l.b16 %v875
    %v941 = vunpack.c.h.b16 %v875
    %v942 = vunpack.c.l.b16 %v876
    %v943 = vunpack.c.h.b16 %v876
    %v944 = vunpack.c.l.b16 %v877
    %v945 = vunpack.c.h.b16 %v877
    %v946 = vunpack.c.l.b16 %v878
    %v947 = vunpack.c.h.b16 %v878
    %v948 = vunpack.c.l.b16 %v879
    %v949 = vunpack.c.h.b16 %v879
    %v950 = vunpack.c.l.b16 %v880
    %v951 = vunpack.c.h.b16 %v880
    %v952 = vunpack.c.l.b16 %v881
    %v953 = vunpack.c.h.b16 %v881
    %v954 = vunpack.c.l.b16 %v882
    %v955 = vunpack.c.h.b16 %v882
    %v956 = vunpack.c.l.b16 %v883
    %v957 = vunpack.c.h.b16 %v883
    %v958 = vunpack.c.l.b16 %v884
    %v959 = vunpack.c.h.b16 %v884
    %v960 = vunpack.c.l.b16 %v885
    %v961 = vunpack.c.h.b16 %v885
    %v962 = vunpack.c.l.b16 %v886
    %v963 = vunpack.c.h.b16 %v886
    %v964 = vunpack.c.l.b16 %v887
    %v965 = vunpack.c.h.b16 %v887
    %v966 = vunpack.c.l.b16 %v888
    %v967 = vunpack.c.h.b16 %v888
    %v968 = vunpack.c.l.b16 %v889
    %v969 = vunpack.c.h.b16 %v889
    %v970 = vunpack.c.l.b16 %v890
    %v971 = vunpack.c.h.b16 %v890
    %v972 = vunpack.c.l.b16 %v891
    %v973 = vunpack.c.h.b16 %v891
    %v974 = vunpack.c.l.b16 %v892
    %v975 = vunpack.c.h.b16 %v892
    %v976 = vunpack.c.l.b16 %v893
    %v977 = vunpack.c.h.b16 %v893
    %v978 = vunpack.c.l.b16 %v894
    %v979 = vunpack.c.h.b16 %v894
    %v980 = vunpack.c.l.b16 %v895
    %v981 = vunpack.c.h.b16 %v895
    %v982 = vunpack.c.l.b16 %v896
    %v983 = vunpack.c.h.b16 %v896
    %v984 = vunpack.c.l.b16 %v897
    %v985 = vunpack.c.h.b16 %v897
    %v986 = vunpack.c.l.b16 %v898
    %v987 = vunpack.c.h.b16 %v898
    %v988 = vunpack.c.l.b16 %v899
    %v989 = vunpack.c.h.b16 %v899
    %v990 = vunpack.c.l.b16 %v900
    %v991 = vunpack.c.h.b16 %v900
    %v992 = vunpack.c.l.b16 %v901
    %v993 = vunpack.c.h.b16 %v901
    %v994 = vunpack.c.l.b16 %v902
    %v995 = vunpack.c.h.b16 %v902
    %v996 = vunpack.c.l.b16 %v903
    %v997 = vunpack.c.h.b16 %v903
    %v998 = vunpack.c.l.b16 %v904
    %v999 = vunpack.c.h.b16 %v904
    %v1000 = vunpack.c.l.b16 %v905
    %v1001 = vunpack.c.h.b16 %v905
    %v1002 = vpack.c.b16 %v942, %v938
    %v1003 = vpack.c.b16 %v943, %v939
    %v1004 = vpack.c.b16 %v944, %v940
    %v1005 = vpack.c.b16 %v945, %v941
    %v1006 = vpack.c.b16 %v950, %v946
    %v1007 = vpack.c.b16 %v951, %v947
    %v1008 = vpack.c.b16 %v952, %v948
    %v1009 = vpack.c.b16 %v953, %v949
    %v1010 = vpack.c.b16 %v958, %v954
    %v1011 = vpack.c.b16 %v959, %v955
    %v1012 = vpack.c.b16 %v960, %v956
    %v1013 = vpack.c.b16 %v961, %v957
    %v1014 = vpack.c.b16 %v966, %v962
    %v1015 = vpack.c.b16 %v967, %v963
    %v1016 = vpack.c.b16 %v968, %v964
    %v1017 = vpack.c.b16 %v969, %v965
    %v1018 = vpack.c.b16 %v974, %v970
    %v1019 = vpack.c.b16 %v975, %v971
    %v1020 = vpack.c.b16 %v976, %v972
    %v1021 = vpack.c.b16 %v977, %v973
    %v1022 = vpack.c.b16 %v982, %v978
    %v1023 = vpack.c.b16 %v983, %v979
    %v1024 = vpack.c.b16 %v984, %v980
    %v1025 = vpack.c.b16 %v985, %v981
    %v1026 = vpack.c.b16 %v990, %v986
    %v1027 = vpack.c.b16 %v991, %v987
    %v1028 = vpack.c.b16 %v992, %v988
    %v1029 = vpack.c.b16 %v993, %v989
    %v1030 = vpack.c.b16 %v998, %v994
    %v1031 = vpack.c.b16 %v999, %v995
    %v1032 = vpack.c.b16 %v1000, %v996
    %v1033 = vpack.c.b16 %v1001, %v997
    %1066 = vmatpush.bf16.msra.mxu0 %v1030
    %1067 = vmatpush.bf16.msra.mxu0 %v1026
    %1068 = vmatpush.bf16.msra.mxu0 %v1022
    %1069 = vmatpush.bf16.msra.mxu0 %v1018
    %1070 = vmatpush.bf16.msra.mxu0 %v1014
    %1071 = vmatpush.bf16.msra.mxu0 %v1010
    %1072 = vmatpush.bf16.msra.mxu0 %v1006
    %1073 = vmatpush.bf16.msra.mxu0 %v1002
    %1074 = vmatmul.bf16.gmra.mxu0 %v873
    %v1075 = vpop.f32.mrf.mxu0
    %v1076 = vadd.f32 0.0, %v1075
    %v1077 = vpop.f32.mrf.mxu0
    %1078 = vdwg.mxu0
    %1079 = vmatpush.bf16.msra.mxu0 %v1031
    %1080 = vmatpush.bf16.msra.mxu0 %v1027
    %1081 = vmatpush.bf16.msra.mxu0 %v1023
    %1082 = vmatpush.bf16.msra.mxu0 %v1019
    %1083 = vmatpush.bf16.msra.mxu0 %v1015
    %1084 = vmatpush.bf16.msra.mxu0 %v1011
    %1085 = vmatpush.bf16.msra.mxu0 %v1007
    %1086 = vmatpush.bf16.msra.mxu0 %v1003
    %1087 = vmatmul.bf16.gmra.mxu0 %v873
    %v1088 = vpop.f32.mrf.mxu0
    %v1089 = vadd.f32 0.0, %v1088
    %v1090 = vpop.f32.mrf.mxu0
    %1091 = vdwg.mxu0
    %1092 = vmatpush.bf16.msra.mxu0 %v1032
    %1093 = vmatpush.bf16.msra.mxu0 %v1028
    %1094 = vmatpush.bf16.msra.mxu0 %v1024
    %1095 = vmatpush.bf16.msra.mxu0 %v1020
    %1096 = vmatpush.bf16.msra.mxu0 %v1016
    %1097 = vmatpush.bf16.msra.mxu0 %v1012
    %1098 = vmatpush.bf16.msra.mxu0 %v1008
    %1099 = vmatpush.bf16.msra.mxu0 %v1004
    %1100 = vmatmul.bf16.gmra.mxu0 %v873
    %v1101 = vpop.f32.mrf.mxu0
    %v1102 = vadd.f32 0.0, %v1101
    %v1103 = vpop.f32.mrf.mxu0
    %1104 = vdwg.mxu0
    %1105 = vmatpush.bf16.msra.mxu0 %v1033
    %1106 = vmatpush.bf16.msra.mxu0 %v1029
    %1107 = vmatpush.bf16.msra.mxu0 %v1025
    %1108 = vmatpush.bf16.msra.mxu0 %v1021
    %1109 = vmatpush.bf16.msra.mxu0 %v1017
    %1110 = vmatpush.bf16.msra.mxu0 %v1013
    %1111 = vmatpush.bf16.msra.mxu0 %v1009
    %1112 = vmatpush.bf16.msra.mxu0 %v1005
    %1113 = vmatmul.bf16.gmra.mxu0 %v873
    %v1114 = vpop.f32.mrf.mxu0
    %v1115 = vadd.f32 0.0, %v1114
    %v1116 = vpop.f32.mrf.mxu0
    %1117 = vdwg.mxu0
    %v1118 = vadd.f32 %v869, %v1076
    %v1119 = vadd.f32 %v870, %v1089
    %v1120 = vadd.f32 %v871, %v1102
    %v1121 = vadd.f32 %v872, %v1115
    %v1122 = vxor.u32 %v1118, 2147483648
    %v1123 = vmul.f32 %v1122, 1.442695
    %v1124 = vpow.pop %v1123
    %v1125 = vadd.f32 %v1124, 1.0
    %v1126 = vrcp.pop %v1125
    %v1127 = vmul.f32 %v1125, %v1126
    %v1128 = vsub.f32 1.0, %v1127
    %v1129 = vmul.f32 %v1126, %v1128
    %v1130 = vadd.f32 %v1126, %v1129
    %vm1131 = vweird.f32 %v1125
    %vm1132 = vweird.f32 %v1126
    %vm1133 = vmor %vm1131, %vm1132
    %v1134 = vsel %vm1133, %v1126, %v1130
    %v1135 = vand.u32 2147483647, %v1125
    %vm1136 = vcmp.eq.f32.partialorder %v1135, 8.507059e+37
    %v1137 = vand.u32 %v1125, 2147483648
    %v1138 = vor.u32 1.1754944e-38, %v1137
    %v1139 = vsel %vm1136, %v1138, %v1134
    %v1140 = vmul.f32 1.0, %v1139
    %v1141 = vxor.u32 %v1119, 2147483648
    %v1142 = vmul.f32 %v1141, 1.442695
    %v1143 = vpow.pop %v1142
    %v1144 = vadd.f32 %v1143, 1.0
    %v1145 = vrcp.pop %v1144
    %v1146 = vmul.f32 %v1144, %v1145
    %v1147 = vsub.f32 1.0, %v1146
    %v1148 = vmul.f32 %v1145, %v1147
    %v1149 = vadd.f32 %v1145, %v1148
    %vm1150 = vweird.f32 %v1144
    %vm1151 = vweird.f32 %v1145
    %vm1152 = vmor %vm1150, %vm1151
    %v1153 = vsel %vm1152, %v1145, %v1149
    %v1154 = vand.u32 2147483647, %v1144
    %vm1155 = vcmp.eq.f32.partialorder %v1154, 8.507059e+37
    %v1156 = vand.u32 %v1144, 2147483648
    %v1157 = vor.u32 1.1754944e-38, %v1156
    %v1158 = vsel %vm1155, %v1157, %v1153
    %v1159 = vmul.f32 1.0, %v1158
    %v1160 = vtanh.pop %v1120
    %v1161 = vxor.u32 %v1121, 2147483648
    %v1162 = vmul.f32 %v1161, 1.442695
    %v1163 = vpow.pop %v1162
    %v1164 = vadd.f32 %v1163, 1.0
    %v1165 = vrcp.pop %v1164
    %v1166 = vmul.f32 %v1164, %v1165
    %v1167 = vsub.f32 1.0, %v1166
    %v1168 = vmul.f32 %v1165, %v1167
    %v1169 = vadd.f32 %v1165, %v1168
    %vm1170 = vweird.f32 %v1164
    %vm1171 = vweird.f32 %v1165
    %vm1172 = vmor %vm1170, %vm1171
    %v1173 = vsel %vm1172, %v1165, %v1169
    %v1174 = vand.u32 2147483647, %v1164
    %vm1175 = vcmp.eq.f32.partialorder %v1174, 8.507059e+37
    %v1176 = vand.u32 %v1164, 2147483648
    %v1177 = vor.u32 1.1754944e-38, %v1176
    %v1178 = vsel %vm1175, %v1177, %v1173
    %v1179 = vmul.f32 1.0, %v1178
    %v1180 = vmul.f32 %v1159, %v868
    %v1181 = vmul.f32 %v1140, %v1160
    %v1182 = vadd.f32 %v1180, %v1181
    %v1183 = vtanh.pop %v1182
    %v1184 = vmul.f32 %v1179, %v1183
    %1185 = vst [vmem:[#allocation4] sm:$0xff] %v1182
    %1186 = vst [vmem:[#allocation3] sm:$0xff] %v1184
    %v1187 = vpack.c.bf16 %v1184, %v1184
    %v1188 = vld [vmem:[#allocation13] sm:$0xf]
    %v1189 = vld [vmem:[#allocation13 + $0x4] sm:$0xf]
    %v1190 = vld [vmem:[#allocation13 + $0x8] sm:$0xf]
    %v1191 = vld [vmem:[#allocation13 + $0xc] sm:$0xf]
    %v1192 = vld [vmem:[#allocation13 + $0x10] sm:$0xf]
    %v1193 = vld [vmem:[#allocation13 + $0x14] sm:$0xf]
    %v1194 = vld [vmem:[#allocation13 + $0x18] sm:$0xf]
    %v1195 = vld [vmem:[#allocation13 + $0x1c] sm:$0xf]
    %v1196 = vld [vmem:[#allocation13 + $0x20] sm:$0xf]
    %v1197 = vld [vmem:[#allocation13 + $0x24] sm:$0xf]
    %v1198 = vld [vmem:[#allocation13 + $0x28] sm:$0xf]
    %v1199 = vld [vmem:[#allocation13 + $0x2c] sm:$0xf]
    %v1200 = vld [vmem:[#allocation13 + $0x30] sm:$0xf]
    %v1201 = vld [vmem:[#allocation13 + $0x34] sm:$0xf]
    %v1202 = vld [vmem:[#allocation13 + $0x38] sm:$0xf]
    %v1203 = vld [vmem:[#allocation13 + $0x3c] sm:$0xf]
    %v1204 = vld [vmem:[%s5] sm:$0x1]
    %v1206 = vperm.slane %v1204, 0
    %v1224 = vunpack.c.l.b16 %v1188
    %v1225 = vunpack.c.l.b16 %v1189
    %v1226 = vunpack.c.l.b16 %v1190
    %v1227 = vunpack.c.l.b16 %v1191
    %v1228 = vunpack.c.l.b16 %v1192
    %v1229 = vunpack.c.l.b16 %v1193
    %v1230 = vunpack.c.l.b16 %v1194
    %v1231 = vunpack.c.l.b16 %v1195
    %v1232 = vunpack.c.l.b16 %v1196
    %v1233 = vunpack.c.l.b16 %v1197
    %v1234 = vunpack.c.l.b16 %v1198
    %v1235 = vunpack.c.l.b16 %v1199
    %v1236 = vunpack.c.l.b16 %v1200
    %v1237 = vunpack.c.l.b16 %v1201
    %v1238 = vunpack.c.l.b16 %v1202
    %v1239 = vunpack.c.l.b16 %v1203
    %v1240 = vpack.c.b16 %v1225, %v1224
    %v1241 = vpack.c.b16 %v1227, %v1226
    %v1242 = vpack.c.b16 %v1229, %v1228
    %v1243 = vpack.c.b16 %v1231, %v1230
    %v1244 = vpack.c.b16 %v1233, %v1232
    %v1245 = vpack.c.b16 %v1235, %v1234
    %v1246 = vpack.c.b16 %v1237, %v1236
    %v1247 = vpack.c.b16 %v1239, %v1238
    %1256 = vmatpush.bf16.msra.mxu0 %v1247
    %1257 = vmatpush.bf16.msra.mxu0 %v1246
    %1258 = vmatpush.bf16.msra.mxu0 %v1245
    %1259 = vmatpush.bf16.msra.mxu0 %v1244
    %1260 = vmatpush.bf16.msra.mxu0 %v1243
    %1261 = vmatpush.bf16.msra.mxu0 %v1242
    %1262 = vmatpush.bf16.msra.mxu0 %v1241
    %1263 = vmatpush.bf16.msra.mxu0 %v1240
    %1264 = vmatmul.bf16.gmra.mxu0 %v1187
    %v1265 = vpop.f32.mrf.mxu0
    %v1266 = vadd.f32 %v1206, %v1265
    %v1267 = vpop.f32.mrf.mxu0
    %1268 = vdwg.mxu0
    %1269 = vst [vmem:[#allocation14 + $0x8] sm:$0xff] %v1266
    %v1270 = vld [vmem:[#allocation3] sm:$0xff]
    %v1271 = vld [vmem:[#allocation4] sm:$0xff]
    %v1272 = vld [vmem:[#allocation2 + $0x40] sm:$0xff]
    %v1273 = vld [vmem:[#allocation2 + $0x48] sm:$0xff]
    %v1274 = vld [vmem:[#allocation2 + $0x50] sm:$0xff]
    %v1275 = vld [vmem:[#allocation2 + $0x58] sm:$0xff]
    %v1276 = vpack.c.bf16 %v1270, %v1270
    %v1277 = vld [vmem:[#allocation11] sm:$0xff]
    %v1278 = vld [vmem:[#allocation11 + $0x8] sm:$0xff]
    %v1279 = vld [vmem:[#allocation11 + $0x10] sm:$0xff]
    %v1280 = vld [vmem:[#allocation11 + $0x18] sm:$0xff]
    %v1281 = vld [vmem:[#allocation11 + $0x20] sm:$0xff]
    %v1282 = vld [vmem:[#allocation11 + $0x28] sm:$0xff]
    %v1283 = vld [vmem:[#allocation11 + $0x30] sm:$0xff]
    %v1284 = vld [vmem:[#allocation11 + $0x38] sm:$0xff]
    %v1285 = vld [vmem:[#allocation11 + $0x40] sm:$0xff]
    %v1286 = vld [vmem:[#allocation11 + $0x48] sm:$0xff]
    %v1287 = vld [vmem:[#allocation11 + $0x50] sm:$0xff]
    %v1288 = vld [vmem:[#allocation11 + $0x58] sm:$0xff]
    %v1289 = vld [vmem:[#allocation11 + $0x60] sm:$0xff]
    %v1290 = vld [vmem:[#allocation11 + $0x68] sm:$0xff]
    %v1291 = vld [vmem:[#allocation11 + $0x70] sm:$0xff]
    %v1292 = vld [vmem:[#allocation11 + $0x78] sm:$0xff]
    %v1293 = vld [vmem:[#allocation11 + $0x80] sm:$0xff]
    %v1294 = vld [vmem:[#allocation11 + $0x88] sm:$0xff]
    %v1295 = vld [vmem:[#allocation11 + $0x90] sm:$0xff]
    %v1296 = vld [vmem:[#allocation11 + $0x98] sm:$0xff]
    %v1297 = vld [vmem:[#allocation11 + $0xa0] sm:$0xff]
    %v1298 = vld [vmem:[#allocation11 + $0xa8] sm:$0xff]
    %v1299 = vld [vmem:[#allocation11 + $0xb0] sm:$0xff]
    %v1300 = vld [vmem:[#allocation11 + $0xb8] sm:$0xff]
    %v1301 = vld [vmem:[#allocation11 + $0xc0] sm:$0xff]
    %v1302 = vld [vmem:[#allocation11 + $0xc8] sm:$0xff]
    %v1303 = vld [vmem:[#allocation11 + $0xd0] sm:$0xff]
    %v1304 = vld [vmem:[#allocation11 + $0xd8] sm:$0xff]
    %v1305 = vld [vmem:[#allocation11 + $0xe0] sm:$0xff]
    %v1306 = vld [vmem:[#allocation11 + $0xe8] sm:$0xff]
    %v1307 = vld [vmem:[#allocation11 + $0xf0] sm:$0xff]
    %v1308 = vld [vmem:[#allocation11 + $0xf8] sm:$0xff]
    %v1341 = vunpack.c.l.b16 %v1277
    %v1342 = vunpack.c.h.b16 %v1277
    %v1343 = vunpack.c.l.b16 %v1278
    %v1344 = vunpack.c.h.b16 %v1278
    %v1345 = vunpack.c.l.b16 %v1279
    %v1346 = vunpack.c.h.b16 %v1279
    %v1347 = vunpack.c.l.b16 %v1280
    %v1348 = vunpack.c.h.b16 %v1280
    %v1349 = vunpack.c.l.b16 %v1281
    %v1350 = vunpack.c.h.b16 %v1281
    %v1351 = vunpack.c.l.b16 %v1282
    %v1352 = vunpack.c.h.b16 %v1282
    %v1353 = vunpack.c.l.b16 %v1283
    %v1354 = vunpack.c.h.b16 %v1283
    %v1355 = vunpack.c.l.b16 %v1284
    %v1356 = vunpack.c.h.b16 %v1284
    %v1357 = vunpack.c.l.b16 %v1285
    %v1358 = vunpack.c.h.b16 %v1285
    %v1359 = vunpack.c.l.b16 %v1286
    %v1360 = vunpack.c.h.b16 %v1286
    %v1361 = vunpack.c.l.b16 %v1287
    %v1362 = vunpack.c.h.b16 %v1287
    %v1363 = vunpack.c.l.b16 %v1288
    %v1364 = vunpack.c.h.b16 %v1288
    %v1365 = vunpack.c.l.b16 %v1289
    %v1366 = vunpack.c.h.b16 %v1289
    %v1367 = vunpack.c.l.b16 %v1290
    %v1368 = vunpack.c.h.b16 %v1290
    %v1369 = vunpack.c.l.b16 %v1291
    %v1370 = vunpack.c.h.b16 %v1291
    %v1371 = vunpack.c.l.b16 %v1292
    %v1372 = vunpack.c.h.b16 %v1292
    %v1373 = vunpack.c.l.b16 %v1293
    %v1374 = vunpack.c.h.b16 %v1293
    %v1375 = vunpack.c.l.b16 %v1294
    %v1376 = vunpack.c.h.b16 %v1294
    %v1377 = vunpack.c.l.b16 %v1295
    %v1378 = vunpack.c.h.b16 %v1295
    %v1379 = vunpack.c.l.b16 %v1296
    %v1380 = vunpack.c.h.b16 %v1296
    %v1381 = vunpack.c.l.b16 %v1297
    %v1382 = vunpack.c.h.b16 %v1297
    %v1383 = vunpack.c.l.b16 %v1298
    %v1384 = vunpack.c.h.b16 %v1298
    %v1385 = vunpack.c.l.b16 %v1299
    %v1386 = vunpack.c.h.b16 %v1299
    %v1387 = vunpack.c.l.b16 %v1300
    %v1388 = vunpack.c.h.b16 %v1300
    %v1389 = vunpack.c.l.b16 %v1301
    %v1390 = vunpack.c.h.b16 %v1301
    %v1391 = vunpack.c.l.b16 %v1302
    %v1392 = vunpack.c.h.b16 %v1302
    %v1393 = vunpack.c.l.b16 %v1303
    %v1394 = vunpack.c.h.b16 %v1303
    %v1395 = vunpack.c.l.b16 %v1304
    %v1396 = vunpack.c.h.b16 %v1304
    %v1397 = vunpack.c.l.b16 %v1305
    %v1398 = vunpack.c.h.b16 %v1305
    %v1399 = vunpack.c.l.b16 %v1306
    %v1400 = vunpack.c.h.b16 %v1306
    %v1401 = vunpack.c.l.b16 %v1307
    %v1402 = vunpack.c.h.b16 %v1307
    %v1403 = vunpack.c.l.b16 %v1308
    %v1404 = vunpack.c.h.b16 %v1308
    %v1405 = vpack.c.b16 %v1345, %v1341
    %v1406 = vpack.c.b16 %v1346, %v1342
    %v1407 = vpack.c.b16 %v1347, %v1343
    %v1408 = vpack.c.b16 %v1348, %v1344
    %v1409 = vpack.c.b16 %v1353, %v1349
    %v1410 = vpack.c.b16 %v1354, %v1350
    %v1411 = vpack.c.b16 %v1355, %v1351
    %v1412 = vpack.c.b16 %v1356, %v1352
    %v1413 = vpack.c.b16 %v1361, %v1357
    %v1414 = vpack.c.b16 %v1362, %v1358
    %v1415 = vpack.c.b16 %v1363, %v1359
    %v1416 = vpack.c.b16 %v1364, %v1360
    %v1417 = vpack.c.b16 %v1369, %v1365
    %v1418 = vpack.c.b16 %v1370, %v1366
    %v1419 = vpack.c.b16 %v1371, %v1367
    %v1420 = vpack.c.b16 %v1372, %v1368
    %v1421 = vpack.c.b16 %v1377, %v1373
    %v1422 = vpack.c.b16 %v1378, %v1374
    %v1423 = vpack.c.b16 %v1379, %v1375
    %v1424 = vpack.c.b16 %v1380, %v1376
    %v1425 = vpack.c.b16 %v1385, %v1381
    %v1426 = vpack.c.b16 %v1386, %v1382
    %v1427 = vpack.c.b16 %v1387, %v1383
    %v1428 = vpack.c.b16 %v1388, %v1384
    %v1429 = vpack.c.b16 %v1393, %v1389
    %v1430 = vpack.c.b16 %v1394, %v1390
    %v1431 = vpack.c.b16 %v1395, %v1391
    %v1432 = vpack.c.b16 %v1396, %v1392
    %v1433 = vpack.c.b16 %v1401, %v1397
    %v1434 = vpack.c.b16 %v1402, %v1398
    %v1435 = vpack.c.b16 %v1403, %v1399
    %v1436 = vpack.c.b16 %v1404, %v1400
    %1469 = vmatpush.bf16.msra.mxu0 %v1433
    %1470 = vmatpush.bf16.msra.mxu0 %v1429
    %1471 = vmatpush.bf16.msra.mxu0 %v1425
    %1472 = vmatpush.bf16.msra.mxu0 %v1421
    %1473 = vmatpush.bf16.msra.mxu0 %v1417
    %1474 = vmatpush.bf16.msra.mxu0 %v1413
    %1475 = vmatpush.bf16.msra.mxu0 %v1409
    %1476 = vmatpush.bf16.msra.mxu0 %v1405
    %1477 = vmatmul.bf16.gmra.mxu0 %v1276
    %v1478 = vpop.f32.mrf.mxu0
    %v1479 = vadd.f32 0.0, %v1478
    %v1480 = vpop.f32.mrf.mxu0
    %1481 = vdwg.mxu0
    %1482 = vmatpush.bf16.msra.mxu0 %v1434
    %1483 = vmatpush.bf16.msra.mxu0 %v1430
    %1484 = vmatpush.bf16.msra.mxu0 %v1426
    %1485 = vmatpush.bf16.msra.mxu0 %v1422
    %1486 = vmatpush.bf16.msra.mxu0 %v1418
    %1487 = vmatpush.bf16.msra.mxu0 %v1414
    %1488 = vmatpush.bf16.msra.mxu0 %v1410
    %1489 = vmatpush.bf16.msra.mxu0 %v1406
    %1490 = vmatmul.bf16.gmra.mxu0 %v1276
    %v1491 = vpop.f32.mrf.mxu0
    %v1492 = vadd.f32 0.0, %v1491
    %v1493 = vpop.f32.mrf.mxu0
    %1494 = vdwg.mxu0
    %1495 = vmatpush.bf16.msra.mxu0 %v1435
    %1496 = vmatpush.bf16.msra.mxu0 %v1431
    %1497 = vmatpush.bf16.msra.mxu0 %v1427
    %1498 = vmatpush.bf16.msra.mxu0 %v1423
    %1499 = vmatpush.bf16.msra.mxu0 %v1419
    %1500 = vmatpush.bf16.msra.mxu0 %v1415
    %1501 = vmatpush.bf16.msra.mxu0 %v1411
    %1502 = vmatpush.bf16.msra.mxu0 %v1407
    %1503 = vmatmul.bf16.gmra.mxu0 %v1276
    %v1504 = vpop.f32.mrf.mxu0
    %v1505 = vadd.f32 0.0, %v1504
    %v1506 = vpop.f32.mrf.mxu0
    %1507 = vdwg.mxu0
    %1508 = vmatpush.bf16.msra.mxu0 %v1436
    %1509 = vmatpush.bf16.msra.mxu0 %v1432
    %1510 = vmatpush.bf16.msra.mxu0 %v1428
    %1511 = vmatpush.bf16.msra.mxu0 %v1424
    %1512 = vmatpush.bf16.msra.mxu0 %v1420
    %1513 = vmatpush.bf16.msra.mxu0 %v1416
    %1514 = vmatpush.bf16.msra.mxu0 %v1412
    %1515 = vmatpush.bf16.msra.mxu0 %v1408
    %1516 = vmatmul.bf16.gmra.mxu0 %v1276
    %v1517 = vpop.f32.mrf.mxu0
    %v1518 = vadd.f32 0.0, %v1517
    %v1519 = vpop.f32.mrf.mxu0
    %1520 = vdwg.mxu0
    %v1521 = vadd.f32 %v1272, %v1479
    %v1522 = vadd.f32 %v1273, %v1492
    %v1523 = vadd.f32 %v1274, %v1505
    %v1524 = vadd.f32 %v1275, %v1518
    %v1525 = vxor.u32 %v1521, 2147483648
    %v1526 = vmul.f32 %v1525, 1.442695
    %v1527 = vpow.pop %v1526
    %v1528 = vadd.f32 %v1527, 1.0
    %v1529 = vrcp.pop %v1528
    %v1530 = vmul.f32 %v1528, %v1529
    %v1531 = vsub.f32 1.0, %v1530
    %v1532 = vmul.f32 %v1529, %v1531
    %v1533 = vadd.f32 %v1529, %v1532
    %vm1534 = vweird.f32 %v1528
    %vm1535 = vweird.f32 %v1529
    %vm1536 = vmor %vm1534, %vm1535
    %v1537 = vsel %vm1536, %v1529, %v1533
    %v1538 = vand.u32 2147483647, %v1528
    %vm1539 = vcmp.eq.f32.partialorder %v1538, 8.507059e+37
    %v1540 = vand.u32 %v1528, 2147483648
    %v1541 = vor.u32 1.1754944e-38, %v1540
    %v1542 = vsel %vm1539, %v1541, %v1537
    %v1543 = vmul.f32 1.0, %v1542
    %v1544 = vxor.u32 %v1522, 2147483648
    %v1545 = vmul.f32 %v1544, 1.442695
    %v1546 = vpow.pop %v1545
    %v1547 = vadd.f32 %v1546, 1.0
    %v1548 = vrcp.pop %v1547
    %v1549 = vmul.f32 %v1547, %v1548
    %v1550 = vsub.f32 1.0, %v1549
    %v1551 = vmul.f32 %v1548, %v1550
    %v1552 = vadd.f32 %v1548, %v1551
    %vm1553 = vweird.f32 %v1547
    %vm1554 = vweird.f32 %v1548
    %vm1555 = vmor %vm1553, %vm1554
    %v1556 = vsel %vm1555, %v1548, %v1552
    %v1557 = vand.u32 2147483647, %v1547
    %vm1558 = vcmp.eq.f32.partialorder %v1557, 8.507059e+37
    %v1559 = vand.u32 %v1547, 2147483648
    %v1560 = vor.u32 1.1754944e-38, %v1559
    %v1561 = vsel %vm1558, %v1560, %v1556
    %v1562 = vmul.f32 1.0, %v1561
    %v1563 = vtanh.pop %v1523
    %v1564 = vxor.u32 %v1524, 2147483648
    %v1565 = vmul.f32 %v1564, 1.442695
    %v1566 = vpow.pop %v1565
    %v1567 = vadd.f32 %v1566, 1.0
    %v1568 = vrcp.pop %v1567
    %v1569 = vmul.f32 %v1567, %v1568
    %v1570 = vsub.f32 1.0, %v1569
    %v1571 = vmul.f32 %v1568, %v1570
    %v1572 = vadd.f32 %v1568, %v1571
    %vm1573 = vweird.f32 %v1567
    %vm1574 = vweird.f32 %v1568
    %vm1575 = vmor %vm1573, %vm1574
    %v1576 = vsel %vm1575, %v1568, %v1572
    %v1577 = vand.u32 2147483647, %v1567
    %vm1578 = vcmp.eq.f32.partialorder %v1577, 8.507059e+37
    %v1579 = vand.u32 %v1567, 2147483648
    %v1580 = vor.u32 1.1754944e-38, %v1579
    %v1581 = vsel %vm1578, %v1580, %v1576
    %v1582 = vmul.f32 1.0, %v1581
    %v1583 = vmul.f32 %v1562, %v1271
    %v1584 = vmul.f32 %v1543, %v1563
    %v1585 = vadd.f32 %v1583, %v1584
    %v1586 = vtanh.pop %v1585
    %v1587 = vmul.f32 %v1582, %v1586
    %1588 = vst [vmem:[#allocation4] sm:$0xff] %v1585
    %1589 = vst [vmem:[#allocation3] sm:$0xff] %v1587
    %v1590 = vpack.c.bf16 %v1587, %v1587
    %v1591 = vld [vmem:[#allocation13] sm:$0xf]
    %v1592 = vld [vmem:[#allocation13 + $0x4] sm:$0xf]
    %v1593 = vld [vmem:[#allocation13 + $0x8] sm:$0xf]
    %v1594 = vld [vmem:[#allocation13 + $0xc] sm:$0xf]
    %v1595 = vld [vmem:[#allocation13 + $0x10] sm:$0xf]
    %v1596 = vld [vmem:[#allocation13 + $0x14] sm:$0xf]
    %v1597 = vld [vmem:[#allocation13 + $0x18] sm:$0xf]
    %v1598 = vld [vmem:[#allocation13 + $0x1c] sm:$0xf]
    %v1599 = vld [vmem:[#allocation13 + $0x20] sm:$0xf]
    %v1600 = vld [vmem:[#allocation13 + $0x24] sm:$0xf]
    %v1601 = vld [vmem:[#allocation13 + $0x28] sm:$0xf]
    %v1602 = vld [vmem:[#allocation13 + $0x2c] sm:$0xf]
    %v1603 = vld [vmem:[#allocation13 + $0x30] sm:$0xf]
    %v1604 = vld [vmem:[#allocation13 + $0x34] sm:$0xf]
    %v1605 = vld [vmem:[#allocation13 + $0x38] sm:$0xf]
    %v1606 = vld [vmem:[#allocation13 + $0x3c] sm:$0xf]
    %v1607 = vld [vmem:[%s5] sm:$0x1]
    %v1609 = vperm.slane %v1607, 0
    %v1627 = vunpack.c.l.b16 %v1591
    %v1628 = vunpack.c.l.b16 %v1592
    %v1629 = vunpack.c.l.b16 %v1593
    %v1630 = vunpack.c.l.b16 %v1594
    %v1631 = vunpack.c.l.b16 %v1595
    %v1632 = vunpack.c.l.b16 %v1596
    %v1633 = vunpack.c.l.b16 %v1597
    %v1634 = vunpack.c.l.b16 %v1598
    %v1635 = vunpack.c.l.b16 %v1599
    %v1636 = vunpack.c.l.b16 %v1600
    %v1637 = vunpack.c.l.b16 %v1601
    %v1638 = vunpack.c.l.b16 %v1602
    %v1639 = vunpack.c.l.b16 %v1603
    %v1640 = vunpack.c.l.b16 %v1604
    %v1641 = vunpack.c.l.b16 %v1605
    %v1642 = vunpack.c.l.b16 %v1606
    %v1643 = vpack.c.b16 %v1628, %v1627
    %v1644 = vpack.c.b16 %v1630, %v1629
    %v1645 = vpack.c.b16 %v1632, %v1631
    %v1646 = vpack.c.b16 %v1634, %v1633
    %v1647 = vpack.c.b16 %v1636, %v1635
    %v1648 = vpack.c.b16 %v1638, %v1637
    %v1649 = vpack.c.b16 %v1640, %v1639
    %v1650 = vpack.c.b16 %v1642, %v1641
    %1659 = vmatpush.bf16.msra.mxu0 %v1650
    %1660 = vmatpush.bf16.msra.mxu0 %v1649
    %1661 = vmatpush.bf16.msra.mxu0 %v1648
    %1662 = vmatpush.bf16.msra.mxu0 %v1647
    %1663 = vmatpush.bf16.msra.mxu0 %v1646
    %1664 = vmatpush.bf16.msra.mxu0 %v1645
    %1665 = vmatpush.bf16.msra.mxu0 %v1644
    %1666 = vmatpush.bf16.msra.mxu0 %v1643
    %1667 = vmatmul.bf16.gmra.mxu0 %v1590
    %v1668 = vpop.f32.mrf.mxu0
    %v1669 = vadd.f32 %v1609, %v1668
    %v1670 = vpop.f32.mrf.mxu0
    %1671 = vdwg.mxu0
    %1672 = vst [vmem:[#allocation14 + $0x10] sm:$0xff] %v1669
    %v1673 = vld [vmem:[#allocation3] sm:$0xff]
    %v1674 = vld [vmem:[#allocation4] sm:$0xff]
    %v1675 = vld [vmem:[#allocation2 + $0x60] sm:$0xff]
    %v1676 = vld [vmem:[#allocation2 + $0x68] sm:$0xff]
    %v1677 = vld [vmem:[#allocation2 + $0x70] sm:$0xff]
    %v1678 = vld [vmem:[#allocation2 + $0x78] sm:$0xff]
    %v1679 = vpack.c.bf16 %v1673, %v1673
    %v1680 = vld [vmem:[#allocation11] sm:$0xff]
    %v1681 = vld [vmem:[#allocation11 + $0x8] sm:$0xff]
    %v1682 = vld [vmem:[#allocation11 + $0x10] sm:$0xff]
    %v1683 = vld [vmem:[#allocation11 + $0x18] sm:$0xff]
    %v1684 = vld [vmem:[#allocation11 + $0x20] sm:$0xff]
    %v1685 = vld [vmem:[#allocation11 + $0x28] sm:$0xff]
    %v1686 = vld [vmem:[#allocation11 + $0x30] sm:$0xff]
    %v1687 = vld [vmem:[#allocation11 + $0x38] sm:$0xff]
    %v1688 = vld [vmem:[#allocation11 + $0x40] sm:$0xff]
    %v1689 = vld [vmem:[#allocation11 + $0x48] sm:$0xff]
    %v1690 = vld [vmem:[#allocation11 + $0x50] sm:$0xff]
    %v1691 = vld [vmem:[#allocation11 + $0x58] sm:$0xff]
    %v1692 = vld [vmem:[#allocation11 + $0x60] sm:$0xff]
    %v1693 = vld [vmem:[#allocation11 + $0x68] sm:$0xff]
    %v1694 = vld [vmem:[#allocation11 + $0x70] sm:$0xff]
    %v1695 = vld [vmem:[#allocation11 + $0x78] sm:$0xff]
    %v1696 = vld [vmem:[#allocation11 + $0x80] sm:$0xff]
    %v1697 = vld [vmem:[#allocation11 + $0x88] sm:$0xff]
    %v1698 = vld [vmem:[#allocation11 + $0x90] sm:$0xff]
    %v1699 = vld [vmem:[#allocation11 + $0x98] sm:$0xff]
    %v1700 = vld [vmem:[#allocation11 + $0xa0] sm:$0xff]
    %v1701 = vld [vmem:[#allocation11 + $0xa8] sm:$0xff]
    %v1702 = vld [vmem:[#allocation11 + $0xb0] sm:$0xff]
    %v1703 = vld [vmem:[#allocation11 + $0xb8] sm:$0xff]
    %v1704 = vld [vmem:[#allocation11 + $0xc0] sm:$0xff]
    %v1705 = vld [vmem:[#allocation11 + $0xc8] sm:$0xff]
    %v1706 = vld [vmem:[#allocation11 + $0xd0] sm:$0xff]
    %v1707 = vld [vmem:[#allocation11 + $0xd8] sm:$0xff]
    %v1708 = vld [vmem:[#allocation11 + $0xe0] sm:$0xff]
    %v1709 = vld [vmem:[#allocation11 + $0xe8] sm:$0xff]
    %v1710 = vld [vmem:[#allocation11 + $0xf0] sm:$0xff]
    %v1711 = vld [vmem:[#allocation11 + $0xf8] sm:$0xff]
    %v1744 = vunpack.c.l.b16 %v1680
    %v1745 = vunpack.c.h.b16 %v1680
    %v1746 = vunpack.c.l.b16 %v1681
    %v1747 = vunpack.c.h.b16 %v1681
    %v1748 = vunpack.c.l.b16 %v1682
    %v1749 = vunpack.c.h.b16 %v1682
    %v1750 = vunpack.c.l.b16 %v1683
    %v1751 = vunpack.c.h.b16 %v1683
    %v1752 = vunpack.c.l.b16 %v1684
    %v1753 = vunpack.c.h.b16 %v1684
    %v1754 = vunpack.c.l.b16 %v1685
    %v1755 = vunpack.c.h.b16 %v1685
    %v1756 = vunpack.c.l.b16 %v1686
    %v1757 = vunpack.c.h.b16 %v1686
    %v1758 = vunpack.c.l.b16 %v1687
    %v1759 = vunpack.c.h.b16 %v1687
    %v1760 = vunpack.c.l.b16 %v1688
    %v1761 = vunpack.c.h.b16 %v1688
    %v1762 = vunpack.c.l.b16 %v1689
    %v1763 = vunpack.c.h.b16 %v1689
    %v1764 = vunpack.c.l.b16 %v1690
    %v1765 = vunpack.c.h.b16 %v1690
    %v1766 = vunpack.c.l.b16 %v1691
    %v1767 = vunpack.c.h.b16 %v1691
    %v1768 = vunpack.c.l.b16 %v1692
    %v1769 = vunpack.c.h.b16 %v1692
    %v1770 = vunpack.c.l.b16 %v1693
    %v1771 = vunpack.c.h.b16 %v1693
    %v1772 = vunpack.c.l.b16 %v1694
    %v1773 = vunpack.c.h.b16 %v1694
    %v1774 = vunpack.c.l.b16 %v1695
    %v1775 = vunpack.c.h.b16 %v1695
    %v1776 = vunpack.c.l.b16 %v1696
    %v1777 = vunpack.c.h.b16 %v1696
    %v1778 = vunpack.c.l.b16 %v1697
    %v1779 = vunpack.c.h.b16 %v1697
    %v1780 = vunpack.c.l.b16 %v1698
    %v1781 = vunpack.c.h.b16 %v1698
    %v1782 = vunpack.c.l.b16 %v1699
    %v1783 = vunpack.c.h.b16 %v1699
    %v1784 = vunpack.c.l.b16 %v1700
    %v1785 = vunpack.c.h.b16 %v1700
    %v1786 = vunpack.c.l.b16 %v1701
    %v1787 = vunpack.c.h.b16 %v1701
    %v1788 = vunpack.c.l.b16 %v1702
    %v1789 = vunpack.c.h.b16 %v1702
    %v1790 = vunpack.c.l.b16 %v1703
    %v1791 = vunpack.c.h.b16 %v1703
    %v1792 = vunpack.c.l.b16 %v1704
    %v1793 = vunpack.c.h.b16 %v1704
    %v1794 = vunpack.c.l.b16 %v1705
    %v1795 = vunpack.c.h.b16 %v1705
    %v1796 = vunpack.c.l.b16 %v1706
    %v1797 = vunpack.c.h.b16 %v1706
    %v1798 = vunpack.c.l.b16 %v1707
    %v1799 = vunpack.c.h.b16 %v1707
    %v1800 = vunpack.c.l.b16 %v1708
    %v1801 = vunpack.c.h.b16 %v1708
    %v1802 = vunpack.c.l.b16 %v1709
    %v1803 = vunpack.c.h.b16 %v1709
    %v1804 = vunpack.c.l.b16 %v1710
    %v1805 = vunpack.c.h.b16 %v1710
    %v1806 = vunpack.c.l.b16 %v1711
    %v1807 = vunpack.c.h.b16 %v1711
    %v1808 = vpack.c.b16 %v1748, %v1744
    %v1809 = vpack.c.b16 %v1749, %v1745
    %v1810 = vpack.c.b16 %v1750, %v1746
    %v1811 = vpack.c.b16 %v1751, %v1747
    %v1812 = vpack.c.b16 %v1756, %v1752
    %v1813 = vpack.c.b16 %v1757, %v1753
    %v1814 = vpack.c.b16 %v1758, %v1754
    %v1815 = vpack.c.b16 %v1759, %v1755
    %v1816 = vpack.c.b16 %v1764, %v1760
    %v1817 = vpack.c.b16 %v1765, %v1761
    %v1818 = vpack.c.b16 %v1766, %v1762
    %v1819 = vpack.c.b16 %v1767, %v1763
    %v1820 = vpack.c.b16 %v1772, %v1768
    %v1821 = vpack.c.b16 %v1773, %v1769
    %v1822 = vpack.c.b16 %v1774, %v1770
    %v1823 = vpack.c.b16 %v1775, %v1771
    %v1824 = vpack.c.b16 %v1780, %v1776
    %v1825 = vpack.c.b16 %v1781, %v1777
    %v1826 = vpack.c.b16 %v1782, %v1778
    %v1827 = vpack.c.b16 %v1783, %v1779
    %v1828 = vpack.c.b16 %v1788, %v1784
    %v1829 = vpack.c.b16 %v1789, %v1785
    %v1830 = vpack.c.b16 %v1790, %v1786
    %v1831 = vpack.c.b16 %v1791, %v1787
    %v1832 = vpack.c.b16 %v1796, %v1792
    %v1833 = vpack.c.b16 %v1797, %v1793
    %v1834 = vpack.c.b16 %v1798, %v1794
    %v1835 = vpack.c.b16 %v1799, %v1795
    %v1836 = vpack.c.b16 %v1804, %v1800
    %v1837 = vpack.c.b16 %v1805, %v1801
    %v1838 = vpack.c.b16 %v1806, %v1802
    %v1839 = vpack.c.b16 %v1807, %v1803
    %1872 = vmatpush.bf16.msra.mxu0 %v1836
    %1873 = vmatpush.bf16.msra.mxu0 %v1832
    %1874 = vmatpush.bf16.msra.mxu0 %v1828
    %1875 = vmatpush.bf16.msra.mxu0 %v1824
    %1876 = vmatpush.bf16.msra.mxu0 %v1820
    %1877 = vmatpush.bf16.msra.mxu0 %v1816
    %1878 = vmatpush.bf16.msra.mxu0 %v1812
    %1879 = vmatpush.bf16.msra.mxu0 %v1808
    %1880 = vmatmul.bf16.gmra.mxu0 %v1679
    %v1881 = vpop.f32.mrf.mxu0
    %v1882 = vadd.f32 0.0, %v1881
    %v1883 = vpop.f32.mrf.mxu0
    %1884 = vdwg.mxu0
    %1885 = vmatpush.bf16.msra.mxu0 %v1837
    %1886 = vmatpush.bf16.msra.mxu0 %v1833
    %1887 = vmatpush.bf16.msra.mxu0 %v1829
    %1888 = vmatpush.bf16.msra.mxu0 %v1825
    %1889 = vmatpush.bf16.msra.mxu0 %v1821
    %1890 = vmatpush.bf16.msra.mxu0 %v1817
    %1891 = vmatpush.bf16.msra.mxu0 %v1813
    %1892 = vmatpush.bf16.msra.mxu0 %v1809
    %1893 = vmatmul.bf16.gmra.mxu0 %v1679
    %v1894 = vpop.f32.mrf.mxu0
    %v1895 = vadd.f32 0.0, %v1894
    %v1896 = vpop.f32.mrf.mxu0
    %1897 = vdwg.mxu0
    %1898 = vmatpush.bf16.msra.mxu0 %v1838
    %1899 = vmatpush.bf16.msra.mxu0 %v1834
    %1900 = vmatpush.bf16.msra.mxu0 %v1830
    %1901 = vmatpush.bf16.msra.mxu0 %v1826
    %1902 = vmatpush.bf16.msra.mxu0 %v1822
    %1903 = vmatpush.bf16.msra.mxu0 %v1818
    %1904 = vmatpush.bf16.msra.mxu0 %v1814
    %1905 = vmatpush.bf16.msra.mxu0 %v1810
    %1906 = vmatmul.bf16.gmra.mxu0 %v1679
    %v1907 = vpop.f32.mrf.mxu0
    %v1908 = vadd.f32 0.0, %v1907
    %v1909 = vpop.f32.mrf.mxu0
    %1910 = vdwg.mxu0
    %1911 = vmatpush.bf16.msra.mxu0 %v1839
    %1912 = vmatpush.bf16.msra.mxu0 %v1835
    %1913 = vmatpush.bf16.msra.mxu0 %v1831
    %1914 = vmatpush.bf16.msra.mxu0 %v1827
    %1915 = vmatpush.bf16.msra.mxu0 %v1823
    %1916 = vmatpush.bf16.msra.mxu0 %v1819
    %1917 = vmatpush.bf16.msra.mxu0 %v1815
    %1918 = vmatpush.bf16.msra.mxu0 %v1811
    %1919 = vmatmul.bf16.gmra.mxu0 %v1679
    %v1920 = vpop.f32.mrf.mxu0
    %v1921 = vadd.f32 0.0, %v1920
    %v1922 = vpop.f32.mrf.mxu0
    %1923 = vdwg.mxu0
    %v1924 = vadd.f32 %v1675, %v1882
    %v1925 = vadd.f32 %v1676, %v1895
    %v1926 = vadd.f32 %v1677, %v1908
    %v1927 = vadd.f32 %v1678, %v1921
    %v1928 = vxor.u32 %v1924, 2147483648
    %v1929 = vmul.f32 %v1928, 1.442695
    %v1930 = vpow.pop %v1929
    %v1931 = vadd.f32 %v1930, 1.0
    %v1932 = vrcp.pop %v1931
    %v1933 = vmul.f32 %v1931, %v1932
    %v1934 = vsub.f32 1.0, %v1933
    %v1935 = vmul.f32 %v1932, %v1934
    %v1936 = vadd.f32 %v1932, %v1935
    %vm1937 = vweird.f32 %v1931
    %vm1938 = vweird.f32 %v1932
    %vm1939 = vmor %vm1937, %vm1938
    %v1940 = vsel %vm1939, %v1932, %v1936
    %v1941 = vand.u32 2147483647, %v1931
    %vm1942 = vcmp.eq.f32.partialorder %v1941, 8.507059e+37
    %v1943 = vand.u32 %v1931, 2147483648
    %v1944 = vor.u32 1.1754944e-38, %v1943
    %v1945 = vsel %vm1942, %v1944, %v1940
    %v1946 = vmul.f32 1.0, %v1945
    %v1947 = vxor.u32 %v1925, 2147483648
    %v1948 = vmul.f32 %v1947, 1.442695
    %v1949 = vpow.pop %v1948
    %v1950 = vadd.f32 %v1949, 1.0
    %v1951 = vrcp.pop %v1950
    %v1952 = vmul.f32 %v1950, %v1951
    %v1953 = vsub.f32 1.0, %v1952
    %v1954 = vmul.f32 %v1951, %v1953
    %v1955 = vadd.f32 %v1951, %v1954
    %vm1956 = vweird.f32 %v1950
    %vm1957 = vweird.f32 %v1951
    %vm1958 = vmor %vm1956, %vm1957
    %v1959 = vsel %vm1958, %v1951, %v1955
    %v1960 = vand.u32 2147483647, %v1950
    %vm1961 = vcmp.eq.f32.partialorder %v1960, 8.507059e+37
    %v1962 = vand.u32 %v1950, 2147483648
    %v1963 = vor.u32 1.1754944e-38, %v1962
    %v1964 = vsel %vm1961, %v1963, %v1959
    %v1965 = vmul.f32 1.0, %v1964
    %v1966 = vtanh.pop %v1926
    %v1967 = vxor.u32 %v1927, 2147483648
    %v1968 = vmul.f32 %v1967, 1.442695
    %v1969 = vpow.pop %v1968
    %v1970 = vadd.f32 %v1969, 1.0
    %v1971 = vrcp.pop %v1970
    %v1972 = vmul.f32 %v1970, %v1971
    %v1973 = vsub.f32 1.0, %v1972
    %v1974 = vmul.f32 %v1971, %v1973
    %v1975 = vadd.f32 %v1971, %v1974
    %vm1976 = vweird.f32 %v1970
    %vm1977 = vweird.f32 %v1971
    %vm1978 = vmor %vm1976, %vm1977
    %v1979 = vsel %vm1978, %v1971, %v1975
    %v1980 = vand.u32 2147483647, %v1970
    %vm1981 = vcmp.eq.f32.partialorder %v1980, 8.507059e+37
    %v1982 = vand.u32 %v1970, 2147483648
    %v1983 = vor.u32 1.1754944e-38, %v1982
    %v1984 = vsel %vm1981, %v1983, %v1979
    %v1985 = vmul.f32 1.0, %v1984
    %v1986 = vmul.f32 %v1965, %v1674
    %v1987 = vmul.f32 %v1946, %v1966
    %v1988 = vadd.f32 %v1986, %v1987
    %v1989 = vtanh.pop %v1988
    %v1990 = vmul.f32 %v1985, %v1989
    %1991 = vst [vmem:[#allocation4] sm:$0xff] %v1988
    %1992 = vst [vmem:[#allocation3] sm:$0xff] %v1990
    %v1993 = vpack.c.bf16 %v1990, %v1990
    %v1994 = vld [vmem:[#allocation13] sm:$0xf]
    %v1995 = vld [vmem:[#allocation13 + $0x4] sm:$0xf]
    %v1996 = vld [vmem:[#allocation13 + $0x8] sm:$0xf]
    %v1997 = vld [vmem:[#allocation13 + $0xc] sm:$0xf]
    %v1998 = vld [vmem:[#allocation13 + $0x10] sm:$0xf]
    %v1999 = vld [vmem:[#allocation13 + $0x14] sm:$0xf]
    %v2000 = vld [vmem:[#allocation13 + $0x18] sm:$0xf]
    %v2001 = vld [vmem:[#allocation13 + $0x1c] sm:$0xf]
    %v2002 = vld [vmem:[#allocation13 + $0x20] sm:$0xf]
    %v2003 = vld [vmem:[#allocation13 + $0x24] sm:$0xf]
    %v2004 = vld [vmem:[#allocation13 + $0x28] sm:$0xf]
    %v2005 = vld [vmem:[#allocation13 + $0x2c] sm:$0xf]
    %v2006 = vld [vmem:[#allocation13 + $0x30] sm:$0xf]
    %v2007 = vld [vmem:[#allocation13 + $0x34] sm:$0xf]
    %v2008 = vld [vmem:[#allocation13 + $0x38] sm:$0xf]
    %v2009 = vld [vmem:[#allocation13 + $0x3c] sm:$0xf]
    %v2010 = vld [vmem:[%s5] sm:$0x1]
    %v2012 = vperm.slane %v2010, 0
    %v2030 = vunpack.c.l.b16 %v1994
    %v2031 = vunpack.c.l.b16 %v1995
    %v2032 = vunpack.c.l.b16 %v1996
    %v2033 = vunpack.c.l.b16 %v1997
    %v2034 = vunpack.c.l.b16 %v1998
    %v2035 = vunpack.c.l.b16 %v1999
    %v2036 = vunpack.c.l.b16 %v2000
    %v2037 = vunpack.c.l.b16 %v2001
    %v2038 = vunpack.c.l.b16 %v2002
    %v2039 = vunpack.c.l.b16 %v2003
    %v2040 = vunpack.c.l.b16 %v2004
    %v2041 = vunpack.c.l.b16 %v2005
    %v2042 = vunpack.c.l.b16 %v2006
    %v2043 = vunpack.c.l.b16 %v2007
    %v2044 = vunpack.c.l.b16 %v2008
    %v2045 = vunpack.c.l.b16 %v2009
    %v2046 = vpack.c.b16 %v2031, %v2030
    %v2047 = vpack.c.b16 %v2033, %v2032
    %v2048 = vpack.c.b16 %v2035, %v2034
    %v2049 = vpack.c.b16 %v2037, %v2036
    %v2050 = vpack.c.b16 %v2039, %v2038
    %v2051 = vpack.c.b16 %v2041, %v2040
    %v2052 = vpack.c.b16 %v2043, %v2042
    %v2053 = vpack.c.b16 %v2045, %v2044
    %2062 = vmatpush.bf16.msra.mxu0 %v2053
    %2063 = vmatpush.bf16.msra.mxu0 %v2052
    %2064 = vmatpush.bf16.msra.mxu0 %v2051
    %2065 = vmatpush.bf16.msra.mxu0 %v2050
    %2066 = vmatpush.bf16.msra.mxu0 %v2049
    %2067 = vmatpush.bf16.msra.mxu0 %v2048
    %2068 = vmatpush.bf16.msra.mxu0 %v2047
    %2069 = vmatpush.bf16.msra.mxu0 %v2046
    %2070 = vmatmul.bf16.gmra.mxu0 %v1993
    %v2071 = vpop.f32.mrf.mxu0
    %v2072 = vadd.f32 %v2012, %v2071
    %v2073 = vpop.f32.mrf.mxu0
    %2074 = vdwg.mxu0
    %2075 = vst [vmem:[#allocation14 + $0x18] sm:$0xff] %v2072
    %v2076 = vld [vmem:[#allocation3] sm:$0xff]
    %v2077 = vld [vmem:[#allocation4] sm:$0xff]
    %v2078 = vld [vmem:[#allocation2 + $0x80] sm:$0xff]
    %v2079 = vld [vmem:[#allocation2 + $0x88] sm:$0xff]
    %v2080 = vld [vmem:[#allocation2 + $0x90] sm:$0xff]
    %v2081 = vld [vmem:[#allocation2 + $0x98] sm:$0xff]
    %v2082 = vpack.c.bf16 %v2076, %v2076
    %v2083 = vld [vmem:[#allocation11] sm:$0xff]
    %v2084 = vld [vmem:[#allocation11 + $0x8] sm:$0xff]
    %v2085 = vld [vmem:[#allocation11 + $0x10] sm:$0xff]
    %v2086 = vld [vmem:[#allocation11 + $0x18] sm:$0xff]
    %v2087 = vld [vmem:[#allocation11 + $0x20] sm:$0xff]
    %v2088 = vld [vmem:[#allocation11 + $0x28] sm:$0xff]
    %v2089 = vld [vmem:[#allocation11 + $0x30] sm:$0xff]
    %v2090 = vld [vmem:[#allocation11 + $0x38] sm:$0xff]
    %v2091 = vld [vmem:[#allocation11 + $0x40] sm:$0xff]
    %v2092 = vld [vmem:[#allocation11 + $0x48] sm:$0xff]
    %v2093 = vld [vmem:[#allocation11 + $0x50] sm:$0xff]
    %v2094 = vld [vmem:[#allocation11 + $0x58] sm:$0xff]
    %v2095 = vld [vmem:[#allocation11 + $0x60] sm:$0xff]
    %v2096 = vld [vmem:[#allocation11 + $0x68] sm:$0xff]
    %v2097 = vld [vmem:[#allocation11 + $0x70] sm:$0xff]
    %v2098 = vld [vmem:[#allocation11 + $0x78] sm:$0xff]
    %v2099 = vld [vmem:[#allocation11 + $0x80] sm:$0xff]
    %v2100 = vld [vmem:[#allocation11 + $0x88] sm:$0xff]
    %v2101 = vld [vmem:[#allocation11 + $0x90] sm:$0xff]
    %v2102 = vld [vmem:[#allocation11 + $0x98] sm:$0xff]
    %v2103 = vld [vmem:[#allocation11 + $0xa0] sm:$0xff]
    %v2104 = vld [vmem:[#allocation11 + $0xa8] sm:$0xff]
    %v2105 = vld [vmem:[#allocation11 + $0xb0] sm:$0xff]
    %v2106 = vld [vmem:[#allocation11 + $0xb8] sm:$0xff]
    %v2107 = vld [vmem:[#allocation11 + $0xc0] sm:$0xff]
    %v2108 = vld [vmem:[#allocation11 + $0xc8] sm:$0xff]
    %v2109 = vld [vmem:[#allocation11 + $0xd0] sm:$0xff]
    %v2110 = vld [vmem:[#allocation11 + $0xd8] sm:$0xff]
    %v2111 = vld [vmem:[#allocation11 + $0xe0] sm:$0xff]
    %v2112 = vld [vmem:[#allocation11 + $0xe8] sm:$0xff]
    %v2113 = vld [vmem:[#allocation11 + $0xf0] sm:$0xff]
    %v2114 = vld [vmem:[#allocation11 + $0xf8] sm:$0xff]
    %v2147 = vunpack.c.l.b16 %v2083
    %v2148 = vunpack.c.h.b16 %v2083
    %v2149 = vunpack.c.l.b16 %v2084
    %v2150 = vunpack.c.h.b16 %v2084
    %v2151 = vunpack.c.l.b16 %v2085
    %v2152 = vunpack.c.h.b16 %v2085
    %v2153 = vunpack.c.l.b16 %v2086
    %v2154 = vunpack.c.h.b16 %v2086
    %v2155 = vunpack.c.l.b16 %v2087
    %v2156 = vunpack.c.h.b16 %v2087
    %v2157 = vunpack.c.l.b16 %v2088
    %v2158 = vunpack.c.h.b16 %v2088
    %v2159 = vunpack.c.l.b16 %v2089
    %v2160 = vunpack.c.h.b16 %v2089
    %v2161 = vunpack.c.l.b16 %v2090
    %v2162 = vunpack.c.h.b16 %v2090
    %v2163 = vunpack.c.l.b16 %v2091
    %v2164 = vunpack.c.h.b16 %v2091
    %v2165 = vunpack.c.l.b16 %v2092
    %v2166 = vunpack.c.h.b16 %v2092
    %v2167 = vunpack.c.l.b16 %v2093
    %v2168 = vunpack.c.h.b16 %v2093
    %v2169 = vunpack.c.l.b16 %v2094
    %v2170 = vunpack.c.h.b16 %v2094
    %v2171 = vunpack.c.l.b16 %v2095
    %v2172 = vunpack.c.h.b16 %v2095
    %v2173 = vunpack.c.l.b16 %v2096
    %v2174 = vunpack.c.h.b16 %v2096
    %v2175 = vunpack.c.l.b16 %v2097
    %v2176 = vunpack.c.h.b16 %v2097
    %v2177 = vunpack.c.l.b16 %v2098
    %v2178 = vunpack.c.h.b16 %v2098
    %v2179 = vunpack.c.l.b16 %v2099
    %v2180 = vunpack.c.h.b16 %v2099
    %v2181 = vunpack.c.l.b16 %v2100
    %v2182 = vunpack.c.h.b16 %v2100
    %v2183 = vunpack.c.l.b16 %v2101
    %v2184 = vunpack.c.h.b16 %v2101
    %v2185 = vunpack.c.l.b16 %v2102
    %v2186 = vunpack.c.h.b16 %v2102
    %v2187 = vunpack.c.l.b16 %v2103
    %v2188 = vunpack.c.h.b16 %v2103
    %v2189 = vunpack.c.l.b16 %v2104
    %v2190 = vunpack.c.h.b16 %v2104
    %v2191 = vunpack.c.l.b16 %v2105
    %v2192 = vunpack.c.h.b16 %v2105
    %v2193 = vunpack.c.l.b16 %v2106
    %v2194 = vunpack.c.h.b16 %v2106
    %v2195 = vunpack.c.l.b16 %v2107
    %v2196 = vunpack.c.h.b16 %v2107
    %v2197 = vunpack.c.l.b16 %v2108
    %v2198 = vunpack.c.h.b16 %v2108
    %v2199 = vunpack.c.l.b16 %v2109
    %v2200 = vunpack.c.h.b16 %v2109
    %v2201 = vunpack.c.l.b16 %v2110
    %v2202 = vunpack.c.h.b16 %v2110
    %v2203 = vunpack.c.l.b16 %v2111
    %v2204 = vunpack.c.h.b16 %v2111
    %v2205 = vunpack.c.l.b16 %v2112
    %v2206 = vunpack.c.h.b16 %v2112
    %v2207 = vunpack.c.l.b16 %v2113
    %v2208 = vunpack.c.h.b16 %v2113
    %v2209 = vunpack.c.l.b16 %v2114
    %v2210 = vunpack.c.h.b16 %v2114
    %v2211 = vpack.c.b16 %v2151, %v2147
    %v2212 = vpack.c.b16 %v2152, %v2148
    %v2213 = vpack.c.b16 %v2153, %v2149
    %v2214 = vpack.c.b16 %v2154, %v2150
    %v2215 = vpack.c.b16 %v2159, %v2155
    %v2216 = vpack.c.b16 %v2160, %v2156
    %v2217 = vpack.c.b16 %v2161, %v2157
    %v2218 = vpack.c.b16 %v2162, %v2158
    %v2219 = vpack.c.b16 %v2167, %v2163
    %v2220 = vpack.c.b16 %v2168, %v2164
    %v2221 = vpack.c.b16 %v2169, %v2165
    %v2222 = vpack.c.b16 %v2170, %v2166
    %v2223 = vpack.c.b16 %v2175, %v2171
    %v2224 = vpack.c.b16 %v2176, %v2172
    %v2225 = vpack.c.b16 %v2177, %v2173
    %v2226 = vpack.c.b16 %v2178, %v2174
    %v2227 = vpack.c.b16 %v2183, %v2179
    %v2228 = vpack.c.b16 %v2184, %v2180
    %v2229 = vpack.c.b16 %v2185, %v2181
    %v2230 = vpack.c.b16 %v2186, %v2182
    %v2231 = vpack.c.b16 %v2191, %v2187
    %v2232 = vpack.c.b16 %v2192, %v2188
    %v2233 = vpack.c.b16 %v2193, %v2189
    %v2234 = vpack.c.b16 %v2194, %v2190
    %v2235 = vpack.c.b16 %v2199, %v2195
    %v2236 = vpack.c.b16 %v2200, %v2196
    %v2237 = vpack.c.b16 %v2201, %v2197
    %v2238 = vpack.c.b16 %v2202, %v2198
    %v2239 = vpack.c.b16 %v2207, %v2203
    %v2240 = vpack.c.b16 %v2208, %v2204
    %v2241 = vpack.c.b16 %v2209, %v2205
    %v2242 = vpack.c.b16 %v2210, %v2206
    %2275 = vmatpush.bf16.msra.mxu0 %v2239
    %2276 = vmatpush.bf16.msra.mxu0 %v2235
    %2277 = vmatpush.bf16.msra.mxu0 %v2231
    %2278 = vmatpush.bf16.msra.mxu0 %v2227
    %2279 = vmatpush.bf16.msra.mxu0 %v2223
    %2280 = vmatpush.bf16.msra.mxu0 %v2219
    %2281 = vmatpush.bf16.msra.mxu0 %v2215
    %2282 = vmatpush.bf16.msra.mxu0 %v2211
    %2283 = vmatmul.bf16.gmra.mxu0 %v2082
    %v2284 = vpop.f32.mrf.mxu0
    %v2285 = vadd.f32 0.0, %v2284
    %v2286 = vpop.f32.mrf.mxu0
    %2287 = vdwg.mxu0
    %2288 = vmatpush.bf16.msra.mxu0 %v2240
    %2289 = vmatpush.bf16.msra.mxu0 %v2236
    %2290 = vmatpush.bf16.msra.mxu0 %v2232
    %2291 = vmatpush.bf16.msra.mxu0 %v2228
    %2292 = vmatpush.bf16.msra.mxu0 %v2224
    %2293 = vmatpush.bf16.msra.mxu0 %v2220
    %2294 = vmatpush.bf16.msra.mxu0 %v2216
    %2295 = vmatpush.bf16.msra.mxu0 %v2212
    %2296 = vmatmul.bf16.gmra.mxu0 %v2082
    %v2297 = vpop.f32.mrf.mxu0
    %v2298 = vadd.f32 0.0, %v2297
    %v2299 = vpop.f32.mrf.mxu0
    %2300 = vdwg.mxu0
    %2301 = vmatpush.bf16.msra.mxu0 %v2241
    %2302 = vmatpush.bf16.msra.mxu0 %v2237
    %2303 = vmatpush.bf16.msra.mxu0 %v2233
    %2304 = vmatpush.bf16.msra.mxu0 %v2229
    %2305 = vmatpush.bf16.msra.mxu0 %v2225
    %2306 = vmatpush.bf16.msra.mxu0 %v2221
    %2307 = vmatpush.bf16.msra.mxu0 %v2217
    %2308 = vmatpush.bf16.msra.mxu0 %v2213
    %2309 = vmatmul.bf16.gmra.mxu0 %v2082
    %v2310 = vpop.f32.mrf.mxu0
    %v2311 = vadd.f32 0.0, %v2310
    %v2312 = vpop.f32.mrf.mxu0
    %2313 = vdwg.mxu0
    %2314 = vmatpush.bf16.msra.mxu0 %v2242
    %2315 = vmatpush.bf16.msra.mxu0 %v2238
    %2316 = vmatpush.bf16.msra.mxu0 %v2234
    %2317 = vmatpush.bf16.msra.mxu0 %v2230
    %2318 = vmatpush.bf16.msra.mxu0 %v2226
    %2319 = vmatpush.bf16.msra.mxu0 %v2222
    %2320 = vmatpush.bf16.msra.mxu0 %v2218
    %2321 = vmatpush.bf16.msra.mxu0 %v2214
    %2322 = vmatmul.bf16.gmra.mxu0 %v2082
    %v2323 = vpop.f32.mrf.mxu0
    %v2324 = vadd.f32 0.0, %v2323
    %v2325 = vpop.f32.mrf.mxu0
    %2326 = vdwg.mxu0
    %v2327 = vadd.f32 %v2078, %v2285
    %v2328 = vadd.f32 %v2079, %v2298
    %v2329 = vadd.f32 %v2080, %v2311
    %v2330 = vadd.f32 %v2081, %v2324
    %v2331 = vxor.u32 %v2327, 2147483648
    %v2332 = vmul.f32 %v2331, 1.442695
    %v2333 = vpow.pop %v2332
    %v2334 = vadd.f32 %v2333, 1.0
    %v2335 = vrcp.pop %v2334
    %v2336 = vmul.f32 %v2334, %v2335
    %v2337 = vsub.f32 1.0, %v2336
    %v2338 = vmul.f32 %v2335, %v2337
    %v2339 = vadd.f32 %v2335, %v2338
    %vm2340 = vweird.f32 %v2334
    %vm2341 = vweird.f32 %v2335
    %vm2342 = vmor %vm2340, %vm2341
    %v2343 = vsel %vm2342, %v2335, %v2339
    %v2344 = vand.u32 2147483647, %v2334
    %vm2345 = vcmp.eq.f32.partialorder %v2344, 8.507059e+37
    %v2346 = vand.u32 %v2334, 2147483648
    %v2347 = vor.u32 1.1754944e-38, %v2346
    %v2348 = vsel %vm2345, %v2347, %v2343
    %v2349 = vmul.f32 1.0, %v2348
    %v2350 = vxor.u32 %v2328, 2147483648
    %v2351 = vmul.f32 %v2350, 1.442695
    %v2352 = vpow.pop %v2351
    %v2353 = vadd.f32 %v2352, 1.0
    %v2354 = vrcp.pop %v2353
    %v2355 = vmul.f32 %v2353, %v2354
    %v2356 = vsub.f32 1.0, %v2355
    %v2357 = vmul.f32 %v2354, %v2356
    %v2358 = vadd.f32 %v2354, %v2357
    %vm2359 = vweird.f32 %v2353
    %vm2360 = vweird.f32 %v2354
    %vm2361 = vmor %vm2359, %vm2360
    %v2362 = vsel %vm2361, %v2354, %v2358
    %v2363 = vand.u32 2147483647, %v2353
    %vm2364 = vcmp.eq.f32.partialorder %v2363, 8.507059e+37
    %v2365 = vand.u32 %v2353, 2147483648
    %v2366 = vor.u32 1.1754944e-38, %v2365
    %v2367 = vsel %vm2364, %v2366, %v2362
    %v2368 = vmul.f32 1.0, %v2367
    %v2369 = vtanh.pop %v2329
    %v2370 = vxor.u32 %v2330, 2147483648
    %v2371 = vmul.f32 %v2370, 1.442695
    %v2372 = vpow.pop %v2371
    %v2373 = vadd.f32 %v2372, 1.0
    %v2374 = vrcp.pop %v2373
    %v2375 = vmul.f32 %v2373, %v2374
    %v2376 = vsub.f32 1.0, %v2375
    %v2377 = vmul.f32 %v2374, %v2376
    %v2378 = vadd.f32 %v2374, %v2377
    %vm2379 = vweird.f32 %v2373
    %vm2380 = vweird.f32 %v2374
    %vm2381 = vmor %vm2379, %vm2380
    %v2382 = vsel %vm2381, %v2374, %v2378
    %v2383 = vand.u32 2147483647, %v2373
    %vm2384 = vcmp.eq.f32.partialorder %v2383, 8.507059e+37
    %v2385 = vand.u32 %v2373, 2147483648
    %v2386 = vor.u32 1.1754944e-38, %v2385
    %v2387 = vsel %vm2384, %v2386, %v2382
    %v2388 = vmul.f32 1.0, %v2387
    %v2389 = vmul.f32 %v2368, %v2077
    %v2390 = vmul.f32 %v2349, %v2369
    %v2391 = vadd.f32 %v2389, %v2390
    %v2392 = vtanh.pop %v2391
    %v2393 = vmul.f32 %v2388, %v2392
    %2394 = vst [vmem:[#allocation4] sm:$0xff] %v2391
    %2395 = vst [vmem:[#allocation3] sm:$0xff] %v2393
    %v2396 = vpack.c.bf16 %v2393, %v2393
    %v2397 = vld [vmem:[#allocation13] sm:$0xf]
    %v2398 = vld [vmem:[#allocation13 + $0x4] sm:$0xf]
    %v2399 = vld [vmem:[#allocation13 + $0x8] sm:$0xf]
    %v2400 = vld [vmem:[#allocation13 + $0xc] sm:$0xf]
    %v2401 = vld [vmem:[#allocation13 + $0x10] sm:$0xf]
    %v2402 = vld [vmem:[#allocation13 + $0x14] sm:$0xf]
    %v2403 = vld [vmem:[#allocation13 + $0x18] sm:$0xf]
    %v2404 = vld [vmem:[#allocation13 + $0x1c] sm:$0xf]
    %v2405 = vld [vmem:[#allocation13 + $0x20] sm:$0xf]
    %v2406 = vld [vmem:[#allocation13 + $0x24] sm:$0xf]
    %v2407 = vld [vmem:[#allocation13 + $0x28] sm:$0xf]
    %v2408 = vld [vmem:[#allocation13 + $0x2c] sm:$0xf]
    %v2409 = vld [vmem:[#allocation13 + $0x30] sm:$0xf]
    %v2410 = vld [vmem:[#allocation13 + $0x34] sm:$0xf]
    %v2411 = vld [vmem:[#allocation13 + $0x38] sm:$0xf]
    %v2412 = vld [vmem:[#allocation13 + $0x3c] sm:$0xf]
    %v2413 = vld [vmem:[%s5] sm:$0x1]
    %v2415 = vperm.slane %v2413, 0
    %v2433 = vunpack.c.l.b16 %v2397
    %v2434 = vunpack.c.l.b16 %v2398
    %v2435 = vunpack.c.l.b16 %v2399
    %v2436 = vunpack.c.l.b16 %v2400
    %v2437 = vunpack.c.l.b16 %v2401
    %v2438 = vunpack.c.l.b16 %v2402
    %v2439 = vunpack.c.l.b16 %v2403
    %v2440 = vunpack.c.l.b16 %v2404
    %v2441 = vunpack.c.l.b16 %v2405
    %v2442 = vunpack.c.l.b16 %v2406
    %v2443 = vunpack.c.l.b16 %v2407
    %v2444 = vunpack.c.l.b16 %v2408
    %v2445 = vunpack.c.l.b16 %v2409
    %v2446 = vunpack.c.l.b16 %v2410
    %v2447 = vunpack.c.l.b16 %v2411
    %v2448 = vunpack.c.l.b16 %v2412
    %v2449 = vpack.c.b16 %v2434, %v2433
    %v2450 = vpack.c.b16 %v2436, %v2435
    %v2451 = vpack.c.b16 %v2438, %v2437
    %v2452 = vpack.c.b16 %v2440, %v2439
    %v2453 = vpack.c.b16 %v2442, %v2441
    %v2454 = vpack.c.b16 %v2444, %v2443
    %v2455 = vpack.c.b16 %v2446, %v2445
    %v2456 = vpack.c.b16 %v2448, %v2447
    %2465 = vmatpush.bf16.msra.mxu0 %v2456
    %2466 = vmatpush.bf16.msra.mxu0 %v2455
    %2467 = vmatpush.bf16.msra.mxu0 %v2454
    %2468 = vmatpush.bf16.msra.mxu0 %v2453
    %2469 = vmatpush.bf16.msra.mxu0 %v2452
    %2470 = vmatpush.bf16.msra.mxu0 %v2451
    %2471 = vmatpush.bf16.msra.mxu0 %v2450
    %2472 = vmatpush.bf16.msra.mxu0 %v2449
    %2473 = vmatmul.bf16.gmra.mxu0 %v2396
    %v2474 = vpop.f32.mrf.mxu0
    %v2475 = vadd.f32 %v2415, %v2474
    %v2476 = vpop.f32.mrf.mxu0
    %2477 = vdwg.mxu0
    %2478 = vst [vmem:[#allocation14 + $0x20] sm:$0xff] %v2475
    %v2479 = vld [vmem:[#allocation3] sm:$0xff]
    %v2480 = vld [vmem:[#allocation4] sm:$0xff]
    %v2481 = vld [vmem:[#allocation2 + $0xa0] sm:$0xff]
    %v2482 = vld [vmem:[#allocation2 + $0xa8] sm:$0xff]
    %v2483 = vld [vmem:[#allocation2 + $0xb0] sm:$0xff]
    %v2484 = vld [vmem:[#allocation2 + $0xb8] sm:$0xff]
    %v2485 = vpack.c.bf16 %v2479, %v2479
    %v2486 = vld [vmem:[#allocation11] sm:$0xff]
    %v2487 = vld [vmem:[#allocation11 + $0x8] sm:$0xff]
    %v2488 = vld [vmem:[#allocation11 + $0x10] sm:$0xff]
    %v2489 = vld [vmem:[#allocation11 + $0x18] sm:$0xff]
    %v2490 = vld [vmem:[#allocation11 + $0x20] sm:$0xff]
    %v2491 = vld [vmem:[#allocation11 + $0x28] sm:$0xff]
    %v2492 = vld [vmem:[#allocation11 + $0x30] sm:$0xff]
    %v2493 = vld [vmem:[#allocation11 + $0x38] sm:$0xff]
    %v2494 = vld [vmem:[#allocation11 + $0x40] sm:$0xff]
    %v2495 = vld [vmem:[#allocation11 + $0x48] sm:$0xff]
    %v2496 = vld [vmem:[#allocation11 + $0x50] sm:$0xff]
    %v2497 = vld [vmem:[#allocation11 + $0x58] sm:$0xff]
    %v2498 = vld [vmem:[#allocation11 + $0x60] sm:$0xff]
    %v2499 = vld [vmem:[#allocation11 + $0x68] sm:$0xff]
    %v2500 = vld [vmem:[#allocation11 + $0x70] sm:$0xff]
    %v2501 = vld [vmem:[#allocation11 + $0x78] sm:$0xff]
    %v2502 = vld [vmem:[#allocation11 + $0x80] sm:$0xff]
    %v2503 = vld [vmem:[#allocation11 + $0x88] sm:$0xff]
    %v2504 = vld [vmem:[#allocation11 + $0x90] sm:$0xff]
    %v2505 = vld [vmem:[#allocation11 + $0x98] sm:$0xff]
    %v2506 = vld [vmem:[#allocation11 + $0xa0] sm:$0xff]
    %v2507 = vld [vmem:[#allocation11 + $0xa8] sm:$0xff]
    %v2508 = vld [vmem:[#allocation11 + $0xb0] sm:$0xff]
    %v2509 = vld [vmem:[#allocation11 + $0xb8] sm:$0xff]
    %v2510 = vld [vmem:[#allocation11 + $0xc0] sm:$0xff]
    %v2511 = vld [vmem:[#allocation11 + $0xc8] sm:$0xff]
    %v2512 = vld [vmem:[#allocation11 + $0xd0] sm:$0xff]
    %v2513 = vld [vmem:[#allocation11 + $0xd8] sm:$0xff]
    %v2514 = vld [vmem:[#allocation11 + $0xe0] sm:$0xff]
    %v2515 = vld [vmem:[#allocation11 + $0xe8] sm:$0xff]
    %v2516 = vld [vmem:[#allocation11 + $0xf0] sm:$0xff]
    %v2517 = vld [vmem:[#allocation11 + $0xf8] sm:$0xff]
    %v2550 = vunpack.c.l.b16 %v2486
    %v2551 = vunpack.c.h.b16 %v2486
    %v2552 = vunpack.c.l.b16 %v2487
    %v2553 = vunpack.c.h.b16 %v2487
    %v2554 = vunpack.c.l.b16 %v2488
    %v2555 = vunpack.c.h.b16 %v2488
    %v2556 = vunpack.c.l.b16 %v2489
    %v2557 = vunpack.c.h.b16 %v2489
    %v2558 = vunpack.c.l.b16 %v2490
    %v2559 = vunpack.c.h.b16 %v2490
    %v2560 = vunpack.c.l.b16 %v2491
    %v2561 = vunpack.c.h.b16 %v2491
    %v2562 = vunpack.c.l.b16 %v2492
    %v2563 = vunpack.c.h.b16 %v2492
    %v2564 = vunpack.c.l.b16 %v2493
    %v2565 = vunpack.c.h.b16 %v2493
    %v2566 = vunpack.c.l.b16 %v2494
    %v2567 = vunpack.c.h.b16 %v2494
    %v2568 = vunpack.c.l.b16 %v2495
    %v2569 = vunpack.c.h.b16 %v2495
    %v2570 = vunpack.c.l.b16 %v2496
    %v2571 = vunpack.c.h.b16 %v2496
    %v2572 = vunpack.c.l.b16 %v2497
    %v2573 = vunpack.c.h.b16 %v2497
    %v2574 = vunpack.c.l.b16 %v2498
    %v2575 = vunpack.c.h.b16 %v2498
    %v2576 = vunpack.c.l.b16 %v2499
    %v2577 = vunpack.c.h.b16 %v2499
    %v2578 = vunpack.c.l.b16 %v2500
    %v2579 = vunpack.c.h.b16 %v2500
    %v2580 = vunpack.c.l.b16 %v2501
    %v2581 = vunpack.c.h.b16 %v2501
    %v2582 = vunpack.c.l.b16 %v2502
    %v2583 = vunpack.c.h.b16 %v2502
    %v2584 = vunpack.c.l.b16 %v2503
    %v2585 = vunpack.c.h.b16 %v2503
    %v2586 = vunpack.c.l.b16 %v2504
    %v2587 = vunpack.c.h.b16 %v2504
    %v2588 = vunpack.c.l.b16 %v2505
    %v2589 = vunpack.c.h.b16 %v2505
    %v2590 = vunpack.c.l.b16 %v2506
    %v2591 = vunpack.c.h.b16 %v2506
    %v2592 = vunpack.c.l.b16 %v2507
    %v2593 = vunpack.c.h.b16 %v2507
    %v2594 = vunpack.c.l.b16 %v2508
    %v2595 = vunpack.c.h.b16 %v2508
    %v2596 = vunpack.c.l.b16 %v2509
    %v2597 = vunpack.c.h.b16 %v2509
    %v2598 = vunpack.c.l.b16 %v2510
    %v2599 = vunpack.c.h.b16 %v2510
    %v2600 = vunpack.c.l.b16 %v2511
    %v2601 = vunpack.c.h.b16 %v2511
    %v2602 = vunpack.c.l.b16 %v2512
    %v2603 = vunpack.c.h.b16 %v2512
    %v2604 = vunpack.c.l.b16 %v2513
    %v2605 = vunpack.c.h.b16 %v2513
    %v2606 = vunpack.c.l.b16 %v2514
    %v2607 = vunpack.c.h.b16 %v2514
    %v2608 = vunpack.c.l.b16 %v2515
    %v2609 = vunpack.c.h.b16 %v2515
    %v2610 = vunpack.c.l.b16 %v2516
    %v2611 = vunpack.c.h.b16 %v2516
    %v2612 = vunpack.c.l.b16 %v2517
    %v2613 = vunpack.c.h.b16 %v2517
    %v2614 = vpack.c.b16 %v2554, %v2550
    %v2615 = vpack.c.b16 %v2555, %v2551
    %v2616 = vpack.c.b16 %v2556, %v2552
    %v2617 = vpack.c.b16 %v2557, %v2553
    %v2618 = vpack.c.b16 %v2562, %v2558
    %v2619 = vpack.c.b16 %v2563, %v2559
    %v2620 = vpack.c.b16 %v2564, %v2560
    %v2621 = vpack.c.b16 %v2565, %v2561
    %v2622 = vpack.c.b16 %v2570, %v2566
    %v2623 = vpack.c.b16 %v2571, %v2567
    %v2624 = vpack.c.b16 %v2572, %v2568
    %v2625 = vpack.c.b16 %v2573, %v2569
    %v2626 = vpack.c.b16 %v2578, %v2574
    %v2627 = vpack.c.b16 %v2579, %v2575
    %v2628 = vpack.c.b16 %v2580, %v2576
    %v2629 = vpack.c.b16 %v2581, %v2577
    %v2630 = vpack.c.b16 %v2586, %v2582
    %v2631 = vpack.c.b16 %v2587, %v2583
    %v2632 = vpack.c.b16 %v2588, %v2584
    %v2633 = vpack.c.b16 %v2589, %v2585
    %v2634 = vpack.c.b16 %v2594, %v2590
    %v2635 = vpack.c.b16 %v2595, %v2591
    %v2636 = vpack.c.b16 %v2596, %v2592
    %v2637 = vpack.c.b16 %v2597, %v2593
    %v2638 = vpack.c.b16 %v2602, %v2598
    %v2639 = vpack.c.b16 %v2603, %v2599
    %v2640 = vpack.c.b16 %v2604, %v2600
    %v2641 = vpack.c.b16 %v2605, %v2601
    %v2642 = vpack.c.b16 %v2610, %v2606
    %v2643 = vpack.c.b16 %v2611, %v2607
    %v2644 = vpack.c.b16 %v2612, %v2608
    %v2645 = vpack.c.b16 %v2613, %v2609
    %2678 = vmatpush.bf16.msra.mxu0 %v2642
    %2679 = vmatpush.bf16.msra.mxu0 %v2638
    %2680 = vmatpush.bf16.msra.mxu0 %v2634
    %2681 = vmatpush.bf16.msra.mxu0 %v2630
    %2682 = vmatpush.bf16.msra.mxu0 %v2626
    %2683 = vmatpush.bf16.msra.mxu0 %v2622
    %2684 = vmatpush.bf16.msra.mxu0 %v2618
    %2685 = vmatpush.bf16.msra.mxu0 %v2614
    %2686 = vmatmul.bf16.gmra.mxu0 %v2485
    %v2687 = vpop.f32.mrf.mxu0
    %v2688 = vadd.f32 0.0, %v2687
    %v2689 = vpop.f32.mrf.mxu0
    %2690 = vdwg.mxu0
    %2691 = vmatpush.bf16.msra.mxu0 %v2643
    %2692 = vmatpush.bf16.msra.mxu0 %v2639
    %2693 = vmatpush.bf16.msra.mxu0 %v2635
    %2694 = vmatpush.bf16.msra.mxu0 %v2631
    %2695 = vmatpush.bf16.msra.mxu0 %v2627
    %2696 = vmatpush.bf16.msra.mxu0 %v2623
    %2697 = vmatpush.bf16.msra.mxu0 %v2619
    %2698 = vmatpush.bf16.msra.mxu0 %v2615
    %2699 = vmatmul.bf16.gmra.mxu0 %v2485
    %v2700 = vpop.f32.mrf.mxu0
    %v2701 = vadd.f32 0.0, %v2700
    %v2702 = vpop.f32.mrf.mxu0
    %2703 = vdwg.mxu0
    %2704 = vmatpush.bf16.msra.mxu0 %v2644
    %2705 = vmatpush.bf16.msra.mxu0 %v2640
    %2706 = vmatpush.bf16.msra.mxu0 %v2636
    %2707 = vmatpush.bf16.msra.mxu0 %v2632
    %2708 = vmatpush.bf16.msra.mxu0 %v2628
    %2709 = vmatpush.bf16.msra.mxu0 %v2624
    %2710 = vmatpush.bf16.msra.mxu0 %v2620
    %2711 = vmatpush.bf16.msra.mxu0 %v2616
    %2712 = vmatmul.bf16.gmra.mxu0 %v2485
    %v2713 = vpop.f32.mrf.mxu0
    %v2714 = vadd.f32 0.0, %v2713
    %v2715 = vpop.f32.mrf.mxu0
    %2716 = vdwg.mxu0
    %2717 = vmatpush.bf16.msra.mxu0 %v2645
    %2718 = vmatpush.bf16.msra.mxu0 %v2641
    %2719 = vmatpush.bf16.msra.mxu0 %v2637
    %2720 = vmatpush.bf16.msra.mxu0 %v2633
    %2721 = vmatpush.bf16.msra.mxu0 %v2629
    %2722 = vmatpush.bf16.msra.mxu0 %v2625
    %2723 = vmatpush.bf16.msra.mxu0 %v2621
    %2724 = vmatpush.bf16.msra.mxu0 %v2617
    %2725 = vmatmul.bf16.gmra.mxu0 %v2485
    %v2726 = vpop.f32.mrf.mxu0
    %v2727 = vadd.f32 0.0, %v2726
    %v2728 = vpop.f32.mrf.mxu0
    %2729 = vdwg.mxu0
    %v2730 = vadd.f32 %v2481, %v2688
    %v2731 = vadd.f32 %v2482, %v2701
    %v2732 = vadd.f32 %v2483, %v2714
    %v2733 = vadd.f32 %v2484, %v2727
    %v2734 = vxor.u32 %v2730, 2147483648
    %v2735 = vmul.f32 %v2734, 1.442695
    %v2736 = vpow.pop %v2735
    %v2737 = vadd.f32 %v2736, 1.0
    %v2738 = vrcp.pop %v2737
    %v2739 = vmul.f32 %v2737, %v2738
    %v2740 = vsub.f32 1.0, %v2739
    %v2741 = vmul.f32 %v2738, %v2740
    %v2742 = vadd.f32 %v2738, %v2741
    %vm2743 = vweird.f32 %v2737
    %vm2744 = vweird.f32 %v2738
    %vm2745 = vmor %vm2743, %vm2744
    %v2746 = vsel %vm2745, %v2738, %v2742
    %v2747 = vand.u32 2147483647, %v2737
    %vm2748 = vcmp.eq.f32.partialorder %v2747, 8.507059e+37
    %v2749 = vand.u32 %v2737, 2147483648
    %v2750 = vor.u32 1.1754944e-38, %v2749
    %v2751 = vsel %vm2748, %v2750, %v2746
    %v2752 = vmul.f32 1.0, %v2751
    %v2753 = vxor.u32 %v2731, 2147483648
    %v2754 = vmul.f32 %v2753, 1.442695
    %v2755 = vpow.pop %v2754
    %v2756 = vadd.f32 %v2755, 1.0
    %v2757 = vrcp.pop %v2756
    %v2758 = vmul.f32 %v2756, %v2757
    %v2759 = vsub.f32 1.0, %v2758
    %v2760 = vmul.f32 %v2757, %v2759
    %v2761 = vadd.f32 %v2757, %v2760
    %vm2762 = vweird.f32 %v2756
    %vm2763 = vweird.f32 %v2757
    %vm2764 = vmor %vm2762, %vm2763
    %v2765 = vsel %vm2764, %v2757, %v2761
    %v2766 = vand.u32 2147483647, %v2756
    %vm2767 = vcmp.eq.f32.partialorder %v2766, 8.507059e+37
    %v2768 = vand.u32 %v2756, 2147483648
    %v2769 = vor.u32 1.1754944e-38, %v2768
    %v2770 = vsel %vm2767, %v2769, %v2765
    %v2771 = vmul.f32 1.0, %v2770
    %v2772 = vtanh.pop %v2732
    %v2773 = vxor.u32 %v2733, 2147483648
    %v2774 = vmul.f32 %v2773, 1.442695
    %v2775 = vpow.pop %v2774
    %v2776 = vadd.f32 %v2775, 1.0
    %v2777 = vrcp.pop %v2776
    %v2778 = vmul.f32 %v2776, %v2777
    %v2779 = vsub.f32 1.0, %v2778
    %v2780 = vmul.f32 %v2777, %v2779
    %v2781 = vadd.f32 %v2777, %v2780
    %vm2782 = vweird.f32 %v2776
    %vm2783 = vweird.f32 %v2777
    %vm2784 = vmor %vm2782, %vm2783
    %v2785 = vsel %vm2784, %v2777, %v2781
    %v2786 = vand.u32 2147483647, %v2776
    %vm2787 = vcmp.eq.f32.partialorder %v2786, 8.507059e+37
    %v2788 = vand.u32 %v2776, 2147483648
    %v2789 = vor.u32 1.1754944e-38, %v2788
    %v2790 = vsel %vm2787, %v2789, %v2785
    %v2791 = vmul.f32 1.0, %v2790
    %v2792 = vmul.f32 %v2771, %v2480
    %v2793 = vmul.f32 %v2752, %v2772
    %v2794 = vadd.f32 %v2792, %v2793
    %v2795 = vtanh.pop %v2794
    %v2796 = vmul.f32 %v2791, %v2795
    %2797 = vst [vmem:[#allocation4] sm:$0xff] %v2794
    %2798 = vst [vmem:[#allocation3] sm:$0xff] %v2796
    %v2799 = vpack.c.bf16 %v2796, %v2796
    %v2800 = vld [vmem:[#allocation13] sm:$0xf]
    %v2801 = vld [vmem:[#allocation13 + $0x4] sm:$0xf]
    %v2802 = vld [vmem:[#allocation13 + $0x8] sm:$0xf]
    %v2803 = vld [vmem:[#allocation13 + $0xc] sm:$0xf]
    %v2804 = vld [vmem:[#allocation13 + $0x10] sm:$0xf]
    %v2805 = vld [vmem:[#allocation13 + $0x14] sm:$0xf]
    %v2806 = vld [vmem:[#allocation13 + $0x18] sm:$0xf]
    %v2807 = vld [vmem:[#allocation13 + $0x1c] sm:$0xf]
    %v2808 = vld [vmem:[#allocation13 + $0x20] sm:$0xf]
    %v2809 = vld [vmem:[#allocation13 + $0x24] sm:$0xf]
    %v2810 = vld [vmem:[#allocation13 + $0x28] sm:$0xf]
    %v2811 = vld [vmem:[#allocation13 + $0x2c] sm:$0xf]
    %v2812 = vld [vmem:[#allocation13 + $0x30] sm:$0xf]
    %v2813 = vld [vmem:[#allocation13 + $0x34] sm:$0xf]
    %v2814 = vld [vmem:[#allocation13 + $0x38] sm:$0xf]
    %v2815 = vld [vmem:[#allocation13 + $0x3c] sm:$0xf]
    %v2816 = vld [vmem:[%s5] sm:$0x1]
    %v2818 = vperm.slane %v2816, 0
    %v2836 = vunpack.c.l.b16 %v2800
    %v2837 = vunpack.c.l.b16 %v2801
    %v2838 = vunpack.c.l.b16 %v2802
    %v2839 = vunpack.c.l.b16 %v2803
    %v2840 = vunpack.c.l.b16 %v2804
    %v2841 = vunpack.c.l.b16 %v2805
    %v2842 = vunpack.c.l.b16 %v2806
    %v2843 = vunpack.c.l.b16 %v2807
    %v2844 = vunpack.c.l.b16 %v2808
    %v2845 = vunpack.c.l.b16 %v2809
    %v2846 = vunpack.c.l.b16 %v2810
    %v2847 = vunpack.c.l.b16 %v2811
    %v2848 = vunpack.c.l.b16 %v2812
    %v2849 = vunpack.c.l.b16 %v2813
    %v2850 = vunpack.c.l.b16 %v2814
    %v2851 = vunpack.c.l.b16 %v2815
    %v2852 = vpack.c.b16 %v2837, %v2836
    %v2853 = vpack.c.b16 %v2839, %v2838
    %v2854 = vpack.c.b16 %v2841, %v2840
    %v2855 = vpack.c.b16 %v2843, %v2842
    %v2856 = vpack.c.b16 %v2845, %v2844
    %v2857 = vpack.c.b16 %v2847, %v2846
    %v2858 = vpack.c.b16 %v2849, %v2848
    %v2859 = vpack.c.b16 %v2851, %v2850
    %2868 = vmatpush.bf16.msra.mxu0 %v2859
    %2869 = vmatpush.bf16.msra.mxu0 %v2858
    %2870 = vmatpush.bf16.msra.mxu0 %v2857
    %2871 = vmatpush.bf16.msra.mxu0 %v2856
    %2872 = vmatpush.bf16.msra.mxu0 %v2855
    %2873 = vmatpush.bf16.msra.mxu0 %v2854
    %2874 = vmatpush.bf16.msra.mxu0 %v2853
    %2875 = vmatpush.bf16.msra.mxu0 %v2852
    %2876 = vmatmul.bf16.gmra.mxu0 %v2799
    %v2877 = vpop.f32.mrf.mxu0
    %v2878 = vadd.f32 %v2818, %v2877
    %v2879 = vpop.f32.mrf.mxu0
    %2880 = vdwg.mxu0
    %2881 = vst [vmem:[#allocation14 + $0x28] sm:$0xff] %v2878
    %v2882 = vld [vmem:[#allocation3] sm:$0xff]
    %v2883 = vld [vmem:[#allocation4] sm:$0xff]
    %v2884 = vld [vmem:[#allocation2 + $0xc0] sm:$0xff]
    %v2885 = vld [vmem:[#allocation2 + $0xc8] sm:$0xff]
    %v2886 = vld [vmem:[#allocation2 + $0xd0] sm:$0xff]
    %v2887 = vld [vmem:[#allocation2 + $0xd8] sm:$0xff]
    %v2888 = vpack.c.bf16 %v2882, %v2882
    %v2889 = vld [vmem:[#allocation11] sm:$0xff]
    %v2890 = vld [vmem:[#allocation11 + $0x8] sm:$0xff]
    %v2891 = vld [vmem:[#allocation11 + $0x10] sm:$0xff]
    %v2892 = vld [vmem:[#allocation11 + $0x18] sm:$0xff]
    %v2893 = vld [vmem:[#allocation11 + $0x20] sm:$0xff]
    %v2894 = vld [vmem:[#allocation11 + $0x28] sm:$0xff]
    %v2895 = vld [vmem:[#allocation11 + $0x30] sm:$0xff]
    %v2896 = vld [vmem:[#allocation11 + $0x38] sm:$0xff]
    %v2897 = vld [vmem:[#allocation11 + $0x40] sm:$0xff]
    %v2898 = vld [vmem:[#allocation11 + $0x48] sm:$0xff]
    %v2899 = vld [vmem:[#allocation11 + $0x50] sm:$0xff]
    %v2900 = vld [vmem:[#allocation11 + $0x58] sm:$0xff]
    %v2901 = vld [vmem:[#allocation11 + $0x60] sm:$0xff]
    %v2902 = vld [vmem:[#allocation11 + $0x68] sm:$0xff]
    %v2903 = vld [vmem:[#allocation11 + $0x70] sm:$0xff]
    %v2904 = vld [vmem:[#allocation11 + $0x78] sm:$0xff]
    %v2905 = vld [vmem:[#allocation11 + $0x80] sm:$0xff]
    %v2906 = vld [vmem:[#allocation11 + $0x88] sm:$0xff]
    %v2907 = vld [vmem:[#allocation11 + $0x90] sm:$0xff]
    %v2908 = vld [vmem:[#allocation11 + $0x98] sm:$0xff]
    %v2909 = vld [vmem:[#allocation11 + $0xa0] sm:$0xff]
    %v2910 = vld [vmem:[#allocation11 + $0xa8] sm:$0xff]
    %v2911 = vld [vmem:[#allocation11 + $0xb0] sm:$0xff]
    %v2912 = vld [vmem:[#allocation11 + $0xb8] sm:$0xff]
    %v2913 = vld [vmem:[#allocation11 + $0xc0] sm:$0xff]
    %v2914 = vld [vmem:[#allocation11 + $0xc8] sm:$0xff]
    %v2915 = vld [vmem:[#allocation11 + $0xd0] sm:$0xff]
    %v2916 = vld [vmem:[#allocation11 + $0xd8] sm:$0xff]
    %v2917 = vld [vmem:[#allocation11 + $0xe0] sm:$0xff]
    %v2918 = vld [vmem:[#allocation11 + $0xe8] sm:$0xff]
    %v2919 = vld [vmem:[#allocation11 + $0xf0] sm:$0xff]
    %v2920 = vld [vmem:[#allocation11 + $0xf8] sm:$0xff]
    %v2953 = vunpack.c.l.b16 %v2889
    %v2954 = vunpack.c.h.b16 %v2889
    %v2955 = vunpack.c.l.b16 %v2890
    %v2956 = vunpack.c.h.b16 %v2890
    %v2957 = vunpack.c.l.b16 %v2891
    %v2958 = vunpack.c.h.b16 %v2891
    %v2959 = vunpack.c.l.b16 %v2892
    %v2960 = vunpack.c.h.b16 %v2892
    %v2961 = vunpack.c.l.b16 %v2893
    %v2962 = vunpack.c.h.b16 %v2893
    %v2963 = vunpack.c.l.b16 %v2894
    %v2964 = vunpack.c.h.b16 %v2894
    %v2965 = vunpack.c.l.b16 %v2895
    %v2966 = vunpack.c.h.b16 %v2895
    %v2967 = vunpack.c.l.b16 %v2896
    %v2968 = vunpack.c.h.b16 %v2896
    %v2969 = vunpack.c.l.b16 %v2897
    %v2970 = vunpack.c.h.b16 %v2897
    %v2971 = vunpack.c.l.b16 %v2898
    %v2972 = vunpack.c.h.b16 %v2898
    %v2973 = vunpack.c.l.b16 %v2899
    %v2974 = vunpack.c.h.b16 %v2899
    %v2975 = vunpack.c.l.b16 %v2900
    %v2976 = vunpack.c.h.b16 %v2900
    %v2977 = vunpack.c.l.b16 %v2901
    %v2978 = vunpack.c.h.b16 %v2901
    %v2979 = vunpack.c.l.b16 %v2902
    %v2980 = vunpack.c.h.b16 %v2902
    %v2981 = vunpack.c.l.b16 %v2903
    %v2982 = vunpack.c.h.b16 %v2903
    %v2983 = vunpack.c.l.b16 %v2904
    %v2984 = vunpack.c.h.b16 %v2904
    %v2985 = vunpack.c.l.b16 %v2905
    %v2986 = vunpack.c.h.b16 %v2905
    %v2987 = vunpack.c.l.b16 %v2906
    %v2988 = vunpack.c.h.b16 %v2906
    %v2989 = vunpack.c.l.b16 %v2907
    %v2990 = vunpack.c.h.b16 %v2907
    %v2991 = vunpack.c.l.b16 %v2908
    %v2992 = vunpack.c.h.b16 %v2908
    %v2993 = vunpack.c.l.b16 %v2909
    %v2994 = vunpack.c.h.b16 %v2909
    %v2995 = vunpack.c.l.b16 %v2910
    %v2996 = vunpack.c.h.b16 %v2910
    %v2997 = vunpack.c.l.b16 %v2911
    %v2998 = vunpack.c.h.b16 %v2911
    %v2999 = vunpack.c.l.b16 %v2912
    %v3000 = vunpack.c.h.b16 %v2912
    %v3001 = vunpack.c.l.b16 %v2913
    %v3002 = vunpack.c.h.b16 %v2913
    %v3003 = vunpack.c.l.b16 %v2914
    %v3004 = vunpack.c.h.b16 %v2914
    %v3005 = vunpack.c.l.b16 %v2915
    %v3006 = vunpack.c.h.b16 %v2915
    %v3007 = vunpack.c.l.b16 %v2916
    %v3008 = vunpack.c.h.b16 %v2916
    %v3009 = vunpack.c.l.b16 %v2917
    %v3010 = vunpack.c.h.b16 %v2917
    %v3011 = vunpack.c.l.b16 %v2918
    %v3012 = vunpack.c.h.b16 %v2918
    %v3013 = vunpack.c.l.b16 %v2919
    %v3014 = vunpack.c.h.b16 %v2919
    %v3015 = vunpack.c.l.b16 %v2920
    %v3016 = vunpack.c.h.b16 %v2920
    %v3017 = vpack.c.b16 %v2957, %v2953
    %v3018 = vpack.c.b16 %v2958, %v2954
    %v3019 = vpack.c.b16 %v2959, %v2955
    %v3020 = vpack.c.b16 %v2960, %v2956
    %v3021 = vpack.c.b16 %v2965, %v2961
    %v3022 = vpack.c.b16 %v2966, %v2962
    %v3023 = vpack.c.b16 %v2967, %v2963
    %v3024 = vpack.c.b16 %v2968, %v2964
    %v3025 = vpack.c.b16 %v2973, %v2969
    %v3026 = vpack.c.b16 %v2974, %v2970
    %v3027 = vpack.c.b16 %v2975, %v2971
    %v3028 = vpack.c.b16 %v2976, %v2972
    %v3029 = vpack.c.b16 %v2981, %v2977
    %v3030 = vpack.c.b16 %v2982, %v2978
    %v3031 = vpack.c.b16 %v2983, %v2979
    %v3032 = vpack.c.b16 %v2984, %v2980
    %v3033 = vpack.c.b16 %v2989, %v2985
    %v3034 = vpack.c.b16 %v2990, %v2986
    %v3035 = vpack.c.b16 %v2991, %v2987
    %v3036 = vpack.c.b16 %v2992, %v2988
    %v3037 = vpack.c.b16 %v2997, %v2993
    %v3038 = vpack.c.b16 %v2998, %v2994
    %v3039 = vpack.c.b16 %v2999, %v2995
    %v3040 = vpack.c.b16 %v3000, %v2996
    %v3041 = vpack.c.b16 %v3005, %v3001
    %v3042 = vpack.c.b16 %v3006, %v3002
    %v3043 = vpack.c.b16 %v3007, %v3003
    %v3044 = vpack.c.b16 %v3008, %v3004
    %v3045 = vpack.c.b16 %v3013, %v3009
    %v3046 = vpack.c.b16 %v3014, %v3010
    %v3047 = vpack.c.b16 %v3015, %v3011
    %v3048 = vpack.c.b16 %v3016, %v3012
    %3081 = vmatpush.bf16.msra.mxu0 %v3045
    %3082 = vmatpush.bf16.msra.mxu0 %v3041
    %3083 = vmatpush.bf16.msra.mxu0 %v3037
    %3084 = vmatpush.bf16.msra.mxu0 %v3033
    %3085 = vmatpush.bf16.msra.mxu0 %v3029
    %3086 = vmatpush.bf16.msra.mxu0 %v3025
    %3087 = vmatpush.bf16.msra.mxu0 %v3021
    %3088 = vmatpush.bf16.msra.mxu0 %v3017
    %3089 = vmatmul.bf16.gmra.mxu0 %v2888
    %v3090 = vpop.f32.mrf.mxu0
    %v3091 = vadd.f32 0.0, %v3090
    %v3092 = vpop.f32.mrf.mxu0
    %3093 = vdwg.mxu0
    %3094 = vmatpush.bf16.msra.mxu0 %v3046
    %3095 = vmatpush.bf16.msra.mxu0 %v3042
    %3096 = vmatpush.bf16.msra.mxu0 %v3038
    %3097 = vmatpush.bf16.msra.mxu0 %v3034
    %3098 = vmatpush.bf16.msra.mxu0 %v3030
    %3099 = vmatpush.bf16.msra.mxu0 %v3026
    %3100 = vmatpush.bf16.msra.mxu0 %v3022
    %3101 = vmatpush.bf16.msra.mxu0 %v3018
    %3102 = vmatmul.bf16.gmra.mxu0 %v2888
    %v3103 = vpop.f32.mrf.mxu0
    %v3104 = vadd.f32 0.0, %v3103
    %v3105 = vpop.f32.mrf.mxu0
    %3106 = vdwg.mxu0
    %3107 = vmatpush.bf16.msra.mxu0 %v3047
    %3108 = vmatpush.bf16.msra.mxu0 %v3043
    %3109 = vmatpush.bf16.msra.mxu0 %v3039
    %3110 = vmatpush.bf16.msra.mxu0 %v3035
    %3111 = vmatpush.bf16.msra.mxu0 %v3031
    %3112 = vmatpush.bf16.msra.mxu0 %v3027
    %3113 = vmatpush.bf16.msra.mxu0 %v3023
    %3114 = vmatpush.bf16.msra.mxu0 %v3019
    %3115 = vmatmul.bf16.gmra.mxu0 %v2888
    %v3116 = vpop.f32.mrf.mxu0
    %v3117 = vadd.f32 0.0, %v3116
    %v3118 = vpop.f32.mrf.mxu0
    %3119 = vdwg.mxu0
    %3120 = vmatpush.bf16.msra.mxu0 %v3048
    %3121 = vmatpush.bf16.msra.mxu0 %v3044
    %3122 = vmatpush.bf16.msra.mxu0 %v3040
    %3123 = vmatpush.bf16.msra.mxu0 %v3036
    %3124 = vmatpush.bf16.msra.mxu0 %v3032
    %3125 = vmatpush.bf16.msra.mxu0 %v3028
    %3126 = vmatpush.bf16.msra.mxu0 %v3024
    %3127 = vmatpush.bf16.msra.mxu0 %v3020
    %3128 = vmatmul.bf16.gmra.mxu0 %v2888
    %v3129 = vpop.f32.mrf.mxu0
    %v3130 = vadd.f32 0.0, %v3129
    %v3131 = vpop.f32.mrf.mxu0
    %3132 = vdwg.mxu0
    %v3133 = vadd.f32 %v2884, %v3091
    %v3134 = vadd.f32 %v2885, %v3104
    %v3135 = vadd.f32 %v2886, %v3117
    %v3136 = vadd.f32 %v2887, %v3130
    %v3137 = vxor.u32 %v3133, 2147483648
    %v3138 = vmul.f32 %v3137, 1.442695
    %v3139 = vpow.pop %v3138
    %v3140 = vadd.f32 %v3139, 1.0
    %v3141 = vrcp.pop %v3140
    %v3142 = vmul.f32 %v3140, %v3141
    %v3143 = vsub.f32 1.0, %v3142
    %v3144 = vmul.f32 %v3141, %v3143
    %v3145 = vadd.f32 %v3141, %v3144
    %vm3146 = vweird.f32 %v3140
    %vm3147 = vweird.f32 %v3141
    %vm3148 = vmor %vm3146, %vm3147
    %v3149 = vsel %vm3148, %v3141, %v3145
    %v3150 = vand.u32 2147483647, %v3140
    %vm3151 = vcmp.eq.f32.partialorder %v3150, 8.507059e+37
    %v3152 = vand.u32 %v3140, 2147483648
    %v3153 = vor.u32 1.1754944e-38, %v3152
    %v3154 = vsel %vm3151, %v3153, %v3149
    %v3155 = vmul.f32 1.0, %v3154
    %v3156 = vxor.u32 %v3134, 2147483648
    %v3157 = vmul.f32 %v3156, 1.442695
    %v3158 = vpow.pop %v3157
    %v3159 = vadd.f32 %v3158, 1.0
    %v3160 = vrcp.pop %v3159
    %v3161 = vmul.f32 %v3159, %v3160
    %v3162 = vsub.f32 1.0, %v3161
    %v3163 = vmul.f32 %v3160, %v3162
    %v3164 = vadd.f32 %v3160, %v3163
    %vm3165 = vweird.f32 %v3159
    %vm3166 = vweird.f32 %v3160
    %vm3167 = vmor %vm3165, %vm3166
    %v3168 = vsel %vm3167, %v3160, %v3164
    %v3169 = vand.u32 2147483647, %v3159
    %vm3170 = vcmp.eq.f32.partialorder %v3169, 8.507059e+37
    %v3171 = vand.u32 %v3159, 2147483648
    %v3172 = vor.u32 1.1754944e-38, %v3171
    %v3173 = vsel %vm3170, %v3172, %v3168
    %v3174 = vmul.f32 1.0, %v3173
    %v3175 = vtanh.pop %v3135
    %v3176 = vxor.u32 %v3136, 2147483648
    %v3177 = vmul.f32 %v3176, 1.442695
    %v3178 = vpow.pop %v3177
    %v3179 = vadd.f32 %v3178, 1.0
    %v3180 = vrcp.pop %v3179
    %v3181 = vmul.f32 %v3179, %v3180
    %v3182 = vsub.f32 1.0, %v3181
    %v3183 = vmul.f32 %v3180, %v3182
    %v3184 = vadd.f32 %v3180, %v3183
    %vm3185 = vweird.f32 %v3179
    %vm3186 = vweird.f32 %v3180
    %vm3187 = vmor %vm3185, %vm3186
    %v3188 = vsel %vm3187, %v3180, %v3184
    %v3189 = vand.u32 2147483647, %v3179
    %vm3190 = vcmp.eq.f32.partialorder %v3189, 8.507059e+37
    %v3191 = vand.u32 %v3179, 2147483648
    %v3192 = vor.u32 1.1754944e-38, %v3191
    %v3193 = vsel %vm3190, %v3192, %v3188
    %v3194 = vmul.f32 1.0, %v3193
    %v3195 = vmul.f32 %v3174, %v2883
    %v3196 = vmul.f32 %v3155, %v3175
    %v3197 = vadd.f32 %v3195, %v3196
    %v3198 = vtanh.pop %v3197
    %v3199 = vmul.f32 %v3194, %v3198
    %3200 = vst [vmem:[#allocation4] sm:$0xff] %v3197
    %3201 = vst [vmem:[#allocation3] sm:$0xff] %v3199
    %v3202 = vpack.c.bf16 %v3199, %v3199
    %v3203 = vld [vmem:[#allocation13] sm:$0xf]
    %v3204 = vld [vmem:[#allocation13 + $0x4] sm:$0xf]
    %v3205 = vld [vmem:[#allocation13 + $0x8] sm:$0xf]
    %v3206 = vld [vmem:[#allocation13 + $0xc] sm:$0xf]
    %v3207 = vld [vmem:[#allocation13 + $0x10] sm:$0xf]
    %v3208 = vld [vmem:[#allocation13 + $0x14] sm:$0xf]
    %v3209 = vld [vmem:[#allocation13 + $0x18] sm:$0xf]
    %v3210 = vld [vmem:[#allocation13 + $0x1c] sm:$0xf]
    %v3211 = vld [vmem:[#allocation13 + $0x20] sm:$0xf]
    %v3212 = vld [vmem:[#allocation13 + $0x24] sm:$0xf]
    %v3213 = vld [vmem:[#allocation13 + $0x28] sm:$0xf]
    %v3214 = vld [vmem:[#allocation13 + $0x2c] sm:$0xf]
    %v3215 = vld [vmem:[#allocation13 + $0x30] sm:$0xf]
    %v3216 = vld [vmem:[#allocation13 + $0x34] sm:$0xf]
    %v3217 = vld [vmem:[#allocation13 + $0x38] sm:$0xf]
    %v3218 = vld [vmem:[#allocation13 + $0x3c] sm:$0xf]
    %v3219 = vld [vmem:[%s5] sm:$0x1]
    %v3221 = vperm.slane %v3219, 0
    %v3239 = vunpack.c.l.b16 %v3203
    %v3240 = vunpack.c.l.b16 %v3204
    %v3241 = vunpack.c.l.b16 %v3205
    %v3242 = vunpack.c.l.b16 %v3206
    %v3243 = vunpack.c.l.b16 %v3207
    %v3244 = vunpack.c.l.b16 %v3208
    %v3245 = vunpack.c.l.b16 %v3209
    %v3246 = vunpack.c.l.b16 %v3210
    %v3247 = vunpack.c.l.b16 %v3211
    %v3248 = vunpack.c.l.b16 %v3212
    %v3249 = vunpack.c.l.b16 %v3213
    %v3250 = vunpack.c.l.b16 %v3214
    %v3251 = vunpack.c.l.b16 %v3215
    %v3252 = vunpack.c.l.b16 %v3216
    %v3253 = vunpack.c.l.b16 %v3217
    %v3254 = vunpack.c.l.b16 %v3218
    %v3255 = vpack.c.b16 %v3240, %v3239
    %v3256 = vpack.c.b16 %v3242, %v3241
    %v3257 = vpack.c.b16 %v3244, %v3243
    %v3258 = vpack.c.b16 %v3246, %v3245
    %v3259 = vpack.c.b16 %v3248, %v3247
    %v3260 = vpack.c.b16 %v3250, %v3249
    %v3261 = vpack.c.b16 %v3252, %v3251
    %v3262 = vpack.c.b16 %v3254, %v3253
    %3271 = vmatpush.bf16.msra.mxu0 %v3262
    %3272 = vmatpush.bf16.msra.mxu0 %v3261
    %3273 = vmatpush.bf16.msra.mxu0 %v3260
    %3274 = vmatpush.bf16.msra.mxu0 %v3259
    %3275 = vmatpush.bf16.msra.mxu0 %v3258
    %3276 = vmatpush.bf16.msra.mxu0 %v3257
    %3277 = vmatpush.bf16.msra.mxu0 %v3256
    %3278 = vmatpush.bf16.msra.mxu0 %v3255
    %3279 = vmatmul.bf16.gmra.mxu0 %v3202
    %v3280 = vpop.f32.mrf.mxu0
    %v3281 = vadd.f32 %v3221, %v3280
    %v3282 = vpop.f32.mrf.mxu0
    %3283 = vdwg.mxu0
    %3284 = vst [vmem:[#allocation14 + $0x30] sm:$0xff] %v3281
    %v3285 = vld [vmem:[#allocation3] sm:$0xff]
    %v3286 = vld [vmem:[#allocation4] sm:$0xff]
    %v3287 = vld [vmem:[#allocation2 + $0xe0] sm:$0xff]
    %v3288 = vld [vmem:[#allocation2 + $0xe8] sm:$0xff]
    %v3289 = vld [vmem:[#allocation2 + $0xf0] sm:$0xff]
    %v3290 = vld [vmem:[#allocation2 + $0xf8] sm:$0xff]
    %v3291 = vpack.c.bf16 %v3285, %v3285
    %v3292 = vld [vmem:[#allocation11] sm:$0xff]
    %v3293 = vld [vmem:[#allocation11 + $0x8] sm:$0xff]
    %v3294 = vld [vmem:[#allocation11 + $0x10] sm:$0xff]
    %v3295 = vld [vmem:[#allocation11 + $0x18] sm:$0xff]
    %v3296 = vld [vmem:[#allocation11 + $0x20] sm:$0xff]
    %v3297 = vld [vmem:[#allocation11 + $0x28] sm:$0xff]
    %v3298 = vld [vmem:[#allocation11 + $0x30] sm:$0xff]
    %v3299 = vld [vmem:[#allocation11 + $0x38] sm:$0xff]
    %v3300 = vld [vmem:[#allocation11 + $0x40] sm:$0xff]
    %v3301 = vld [vmem:[#allocation11 + $0x48] sm:$0xff]
    %v3302 = vld [vmem:[#allocation11 + $0x50] sm:$0xff]
    %v3303 = vld [vmem:[#allocation11 + $0x58] sm:$0xff]
    %v3304 = vld [vmem:[#allocation11 + $0x60] sm:$0xff]
    %v3305 = vld [vmem:[#allocation11 + $0x68] sm:$0xff]
    %v3306 = vld [vmem:[#allocation11 + $0x70] sm:$0xff]
    %v3307 = vld [vmem:[#allocation11 + $0x78] sm:$0xff]
    %v3308 = vld [vmem:[#allocation11 + $0x80] sm:$0xff]
    %v3309 = vld [vmem:[#allocation11 + $0x88] sm:$0xff]
    %v3310 = vld [vmem:[#allocation11 + $0x90] sm:$0xff]
    %v3311 = vld [vmem:[#allocation11 + $0x98] sm:$0xff]
    %v3312 = vld [vmem:[#allocation11 + $0xa0] sm:$0xff]
    %v3313 = vld [vmem:[#allocation11 + $0xa8] sm:$0xff]
    %v3314 = vld [vmem:[#allocation11 + $0xb0] sm:$0xff]
    %v3315 = vld [vmem:[#allocation11 + $0xb8] sm:$0xff]
    %v3316 = vld [vmem:[#allocation11 + $0xc0] sm:$0xff]
    %v3317 = vld [vmem:[#allocation11 + $0xc8] sm:$0xff]
    %v3318 = vld [vmem:[#allocation11 + $0xd0] sm:$0xff]
    %v3319 = vld [vmem:[#allocation11 + $0xd8] sm:$0xff]
    %v3320 = vld [vmem:[#allocation11 + $0xe0] sm:$0xff]
    %v3321 = vld [vmem:[#allocation11 + $0xe8] sm:$0xff]
    %v3322 = vld [vmem:[#allocation11 + $0xf0] sm:$0xff]
    %v3323 = vld [vmem:[#allocation11 + $0xf8] sm:$0xff]
    %v3356 = vunpack.c.l.b16 %v3292
    %v3357 = vunpack.c.h.b16 %v3292
    %v3358 = vunpack.c.l.b16 %v3293
    %v3359 = vunpack.c.h.b16 %v3293
    %v3360 = vunpack.c.l.b16 %v3294
    %v3361 = vunpack.c.h.b16 %v3294
    %v3362 = vunpack.c.l.b16 %v3295
    %v3363 = vunpack.c.h.b16 %v3295
    %v3364 = vunpack.c.l.b16 %v3296
    %v3365 = vunpack.c.h.b16 %v3296
    %v3366 = vunpack.c.l.b16 %v3297
    %v3367 = vunpack.c.h.b16 %v3297
    %v3368 = vunpack.c.l.b16 %v3298
    %v3369 = vunpack.c.h.b16 %v3298
    %v3370 = vunpack.c.l.b16 %v3299
    %v3371 = vunpack.c.h.b16 %v3299
    %v3372 = vunpack.c.l.b16 %v3300
    %v3373 = vunpack.c.h.b16 %v3300
    %v3374 = vunpack.c.l.b16 %v3301
    %v3375 = vunpack.c.h.b16 %v3301
    %v3376 = vunpack.c.l.b16 %v3302
    %v3377 = vunpack.c.h.b16 %v3302
    %v3378 = vunpack.c.l.b16 %v3303
    %v3379 = vunpack.c.h.b16 %v3303
    %v3380 = vunpack.c.l.b16 %v3304
    %v3381 = vunpack.c.h.b16 %v3304
    %v3382 = vunpack.c.l.b16 %v3305
    %v3383 = vunpack.c.h.b16 %v3305
    %v3384 = vunpack.c.l.b16 %v3306
    %v3385 = vunpack.c.h.b16 %v3306
    %v3386 = vunpack.c.l.b16 %v3307
    %v3387 = vunpack.c.h.b16 %v3307
    %v3388 = vunpack.c.l.b16 %v3308
    %v3389 = vunpack.c.h.b16 %v3308
    %v3390 = vunpack.c.l.b16 %v3309
    %v3391 = vunpack.c.h.b16 %v3309
    %v3392 = vunpack.c.l.b16 %v3310
    %v3393 = vunpack.c.h.b16 %v3310
    %v3394 = vunpack.c.l.b16 %v3311
    %v3395 = vunpack.c.h.b16 %v3311
    %v3396 = vunpack.c.l.b16 %v3312
    %v3397 = vunpack.c.h.b16 %v3312
    %v3398 = vunpack.c.l.b16 %v3313
    %v3399 = vunpack.c.h.b16 %v3313
    %v3400 = vunpack.c.l.b16 %v3314
    %v3401 = vunpack.c.h.b16 %v3314
    %v3402 = vunpack.c.l.b16 %v3315
    %v3403 = vunpack.c.h.b16 %v3315
    %v3404 = vunpack.c.l.b16 %v3316
    %v3405 = vunpack.c.h.b16 %v3316
    %v3406 = vunpack.c.l.b16 %v3317
    %v3407 = vunpack.c.h.b16 %v3317
    %v3408 = vunpack.c.l.b16 %v3318
    %v3409 = vunpack.c.h.b16 %v3318
    %v3410 = vunpack.c.l.b16 %v3319
    %v3411 = vunpack.c.h.b16 %v3319
    %v3412 = vunpack.c.l.b16 %v3320
    %v3413 = vunpack.c.h.b16 %v3320
    %v3414 = vunpack.c.l.b16 %v3321
    %v3415 = vunpack.c.h.b16 %v3321
    %v3416 = vunpack.c.l.b16 %v3322
    %v3417 = vunpack.c.h.b16 %v3322
    %v3418 = vunpack.c.l.b16 %v3323
    %v3419 = vunpack.c.h.b16 %v3323
    %v3420 = vpack.c.b16 %v3360, %v3356
    %v3421 = vpack.c.b16 %v3361, %v3357
    %v3422 = vpack.c.b16 %v3362, %v3358
    %v3423 = vpack.c.b16 %v3363, %v3359
    %v3424 = vpack.c.b16 %v3368, %v3364
    %v3425 = vpack.c.b16 %v3369, %v3365
    %v3426 = vpack.c.b16 %v3370, %v3366
    %v3427 = vpack.c.b16 %v3371, %v3367
    %v3428 = vpack.c.b16 %v3376, %v3372
    %v3429 = vpack.c.b16 %v3377, %v3373
    %v3430 = vpack.c.b16 %v3378, %v3374
    %v3431 = vpack.c.b16 %v3379, %v3375
    %v3432 = vpack.c.b16 %v3384, %v3380
    %v3433 = vpack.c.b16 %v3385, %v3381
    %v3434 = vpack.c.b16 %v3386, %v3382
    %v3435 = vpack.c.b16 %v3387, %v3383
    %v3436 = vpack.c.b16 %v3392, %v3388
    %v3437 = vpack.c.b16 %v3393, %v3389
    %v3438 = vpack.c.b16 %v3394, %v3390
    %v3439 = vpack.c.b16 %v3395, %v3391
    %v3440 = vpack.c.b16 %v3400, %v3396
    %v3441 = vpack.c.b16 %v3401, %v3397
    %v3442 = vpack.c.b16 %v3402, %v3398
    %v3443 = vpack.c.b16 %v3403, %v3399
    %v3444 = vpack.c.b16 %v3408, %v3404
    %v3445 = vpack.c.b16 %v3409, %v3405
    %v3446 = vpack.c.b16 %v3410, %v3406
    %v3447 = vpack.c.b16 %v3411, %v3407
    %v3448 = vpack.c.b16 %v3416, %v3412
    %v3449 = vpack.c.b16 %v3417, %v3413
    %v3450 = vpack.c.b16 %v3418, %v3414
    %v3451 = vpack.c.b16 %v3419, %v3415
    %3484 = vmatpush.bf16.msra.mxu0 %v3448
    %3485 = vmatpush.bf16.msra.mxu0 %v3444
    %3486 = vmatpush.bf16.msra.mxu0 %v3440
    %3487 = vmatpush.bf16.msra.mxu0 %v3436
    %3488 = vmatpush.bf16.msra.mxu0 %v3432
    %3489 = vmatpush.bf16.msra.mxu0 %v3428
    %3490 = vmatpush.bf16.msra.mxu0 %v3424
    %3491 = vmatpush.bf16.msra.mxu0 %v3420
    %3492 = vmatmul.bf16.gmra.mxu0 %v3291
    %v3493 = vpop.f32.mrf.mxu0
    %v3494 = vadd.f32 0.0, %v3493
    %v3495 = vpop.f32.mrf.mxu0
    %3496 = vdwg.mxu0
    %3497 = vmatpush.bf16.msra.mxu0 %v3449
    %3498 = vmatpush.bf16.msra.mxu0 %v3445
    %3499 = vmatpush.bf16.msra.mxu0 %v3441
    %3500 = vmatpush.bf16.msra.mxu0 %v3437
    %3501 = vmatpush.bf16.msra.mxu0 %v3433
    %3502 = vmatpush.bf16.msra.mxu0 %v3429
    %3503 = vmatpush.bf16.msra.mxu0 %v3425
    %3504 = vmatpush.bf16.msra.mxu0 %v3421
    %3505 = vmatmul.bf16.gmra.mxu0 %v3291
    %v3506 = vpop.f32.mrf.mxu0
    %v3507 = vadd.f32 0.0, %v3506
    %v3508 = vpop.f32.mrf.mxu0
    %3509 = vdwg.mxu0
    %3510 = vmatpush.bf16.msra.mxu0 %v3450
    %3511 = vmatpush.bf16.msra.mxu0 %v3446
    %3512 = vmatpush.bf16.msra.mxu0 %v3442
    %3513 = vmatpush.bf16.msra.mxu0 %v3438
    %3514 = vmatpush.bf16.msra.mxu0 %v3434
    %3515 = vmatpush.bf16.msra.mxu0 %v3430
    %3516 = vmatpush.bf16.msra.mxu0 %v3426
    %3517 = vmatpush.bf16.msra.mxu0 %v3422
    %3518 = vmatmul.bf16.gmra.mxu0 %v3291
    %v3519 = vpop.f32.mrf.mxu0
    %v3520 = vadd.f32 0.0, %v3519
    %v3521 = vpop.f32.mrf.mxu0
    %3522 = vdwg.mxu0
    %3523 = vmatpush.bf16.msra.mxu0 %v3451
    %3524 = vmatpush.bf16.msra.mxu0 %v3447
    %3525 = vmatpush.bf16.msra.mxu0 %v3443
    %3526 = vmatpush.bf16.msra.mxu0 %v3439
    %3527 = vmatpush.bf16.msra.mxu0 %v3435
    %3528 = vmatpush.bf16.msra.mxu0 %v3431
    %3529 = vmatpush.bf16.msra.mxu0 %v3427
    %3530 = vmatpush.bf16.msra.mxu0 %v3423
    %3531 = vmatmul.bf16.gmra.mxu0 %v3291
    %v3532 = vpop.f32.mrf.mxu0
    %v3533 = vadd.f32 0.0, %v3532
    %v3534 = vpop.f32.mrf.mxu0
    %3535 = vdwg.mxu0
    %v3536 = vadd.f32 %v3287, %v3494
    %v3537 = vadd.f32 %v3288, %v3507
    %v3538 = vadd.f32 %v3289, %v3520
    %v3539 = vadd.f32 %v3290, %v3533
    %v3540 = vxor.u32 %v3536, 2147483648
    %v3541 = vmul.f32 %v3540, 1.442695
    %v3542 = vpow.pop %v3541
    %v3543 = vadd.f32 %v3542, 1.0
    %v3544 = vrcp.pop %v3543
    %v3545 = vmul.f32 %v3543, %v3544
    %v3546 = vsub.f32 1.0, %v3545
    %v3547 = vmul.f32 %v3544, %v3546
    %v3548 = vadd.f32 %v3544, %v3547
    %vm3549 = vweird.f32 %v3543
    %vm3550 = vweird.f32 %v3544
    %vm3551 = vmor %vm3549, %vm3550
    %v3552 = vsel %vm3551, %v3544, %v3548
    %v3553 = vand.u32 2147483647, %v3543
    %vm3554 = vcmp.eq.f32.partialorder %v3553, 8.507059e+37
    %v3555 = vand.u32 %v3543, 2147483648
    %v3556 = vor.u32 1.1754944e-38, %v3555
    %v3557 = vsel %vm3554, %v3556, %v3552
    %v3558 = vmul.f32 1.0, %v3557
    %v3559 = vxor.u32 %v3537, 2147483648
    %v3560 = vmul.f32 %v3559, 1.442695
    %v3561 = vpow.pop %v3560
    %v3562 = vadd.f32 %v3561, 1.0
    %v3563 = vrcp.pop %v3562
    %v3564 = vmul.f32 %v3562, %v3563
    %v3565 = vsub.f32 1.0, %v3564
    %v3566 = vmul.f32 %v3563, %v3565
    %v3567 = vadd.f32 %v3563, %v3566
    %vm3568 = vweird.f32 %v3562
    %vm3569 = vweird.f32 %v3563
    %vm3570 = vmor %vm3568, %vm3569
    %v3571 = vsel %vm3570, %v3563, %v3567
    %v3572 = vand.u32 2147483647, %v3562
    %vm3573 = vcmp.eq.f32.partialorder %v3572, 8.507059e+37
    %v3574 = vand.u32 %v3562, 2147483648
    %v3575 = vor.u32 1.1754944e-38, %v3574
    %v3576 = vsel %vm3573, %v3575, %v3571
    %v3577 = vmul.f32 1.0, %v3576
    %v3578 = vtanh.pop %v3538
    %v3579 = vxor.u32 %v3539, 2147483648
    %v3580 = vmul.f32 %v3579, 1.442695
    %v3581 = vpow.pop %v3580
    %v3582 = vadd.f32 %v3581, 1.0
    %v3583 = vrcp.pop %v3582
    %v3584 = vmul.f32 %v3582, %v3583
    %v3585 = vsub.f32 1.0, %v3584
    %v3586 = vmul.f32 %v3583, %v3585
    %v3587 = vadd.f32 %v3583, %v3586
    %vm3588 = vweird.f32 %v3582
    %vm3589 = vweird.f32 %v3583
    %vm3590 = vmor %vm3588, %vm3589
    %v3591 = vsel %vm3590, %v3583, %v3587
    %v3592 = vand.u32 2147483647, %v3582
    %vm3593 = vcmp.eq.f32.partialorder %v3592, 8.507059e+37
    %v3594 = vand.u32 %v3582, 2147483648
    %v3595 = vor.u32 1.1754944e-38, %v3594
    %v3596 = vsel %vm3593, %v3595, %v3591
    %v3597 = vmul.f32 1.0, %v3596
    %v3598 = vmul.f32 %v3577, %v3286
    %v3599 = vmul.f32 %v3558, %v3578
    %v3600 = vadd.f32 %v3598, %v3599
    %v3601 = vtanh.pop %v3600
    %v3602 = vmul.f32 %v3597, %v3601
    %3603 = vst [vmem:[#allocation4] sm:$0xff] %v3600
    %3604 = vst [vmem:[#allocation3] sm:$0xff] %v3602
    %v3605 = vpack.c.bf16 %v3602, %v3602
    %v3606 = vld [vmem:[#allocation13] sm:$0xf]
    %v3607 = vld [vmem:[#allocation13 + $0x4] sm:$0xf]
    %v3608 = vld [vmem:[#allocation13 + $0x8] sm:$0xf]
    %v3609 = vld [vmem:[#allocation13 + $0xc] sm:$0xf]
    %v3610 = vld [vmem:[#allocation13 + $0x10] sm:$0xf]
    %v3611 = vld [vmem:[#allocation13 + $0x14] sm:$0xf]
    %v3612 = vld [vmem:[#allocation13 + $0x18] sm:$0xf]
    %v3613 = vld [vmem:[#allocation13 + $0x1c] sm:$0xf]
    %v3614 = vld [vmem:[#allocation13 + $0x20] sm:$0xf]
    %v3615 = vld [vmem:[#allocation13 + $0x24] sm:$0xf]
    %v3616 = vld [vmem:[#allocation13 + $0x28] sm:$0xf]
    %v3617 = vld [vmem:[#allocation13 + $0x2c] sm:$0xf]
    %v3618 = vld [vmem:[#allocation13 + $0x30] sm:$0xf]
    %v3619 = vld [vmem:[#allocation13 + $0x34] sm:$0xf]
    %v3620 = vld [vmem:[#allocation13 + $0x38] sm:$0xf]
    %v3621 = vld [vmem:[#allocation13 + $0x3c] sm:$0xf]
    %v3622 = vld [vmem:[%s5] sm:$0x1]
    %v3624 = vperm.slane %v3622, 0
    %v3642 = vunpack.c.l.b16 %v3606
    %v3643 = vunpack.c.l.b16 %v3607
    %v3644 = vunpack.c.l.b16 %v3608
    %v3645 = vunpack.c.l.b16 %v3609
    %v3646 = vunpack.c.l.b16 %v3610
    %v3647 = vunpack.c.l.b16 %v3611
    %v3648 = vunpack.c.l.b16 %v3612
    %v3649 = vunpack.c.l.b16 %v3613
    %v3650 = vunpack.c.l.b16 %v3614
    %v3651 = vunpack.c.l.b16 %v3615
    %v3652 = vunpack.c.l.b16 %v3616
    %v3653 = vunpack.c.l.b16 %v3617
    %v3654 = vunpack.c.l.b16 %v3618
    %v3655 = vunpack.c.l.b16 %v3619
    %v3656 = vunpack.c.l.b16 %v3620
    %v3657 = vunpack.c.l.b16 %v3621
    %v3658 = vpack.c.b16 %v3643, %v3642
    %v3659 = vpack.c.b16 %v3645, %v3644
    %v3660 = vpack.c.b16 %v3647, %v3646
    %v3661 = vpack.c.b16 %v3649, %v3648
    %v3662 = vpack.c.b16 %v3651, %v3650
    %v3663 = vpack.c.b16 %v3653, %v3652
    %v3664 = vpack.c.b16 %v3655, %v3654
    %v3665 = vpack.c.b16 %v3657, %v3656
    %3674 = vmatpush.bf16.msra.mxu0 %v3665
    %3675 = vmatpush.bf16.msra.mxu0 %v3664
    %3676 = vmatpush.bf16.msra.mxu0 %v3663
    %3677 = vmatpush.bf16.msra.mxu0 %v3662
    %3678 = vmatpush.bf16.msra.mxu0 %v3661
    %3679 = vmatpush.bf16.msra.mxu0 %v3660
    %3680 = vmatpush.bf16.msra.mxu0 %v3659
    %3681 = vmatpush.bf16.msra.mxu0 %v3658
    %3682 = vmatmul.bf16.gmra.mxu0 %v3605
    %v3683 = vpop.f32.mrf.mxu0
    %v3684 = vadd.f32 %v3624, %v3683
    %v3685 = vpop.f32.mrf.mxu0
    %3686 = vdwg.mxu0
    %3687 = vst [vmem:[#allocation14 + $0x38] sm:$0xff] %v3684
    // Predicated region
    $region46: #{tpu_custom_call.1} parent=1 // pred_check
      _
    $region47: #{tpu_custom_call.1} parent=1 // pred_check_branch
      %3689 = sbr.rel (0) target = $region49
    $region48: #{tpu_custom_call.1} parent=1 // pred_region
      %3691 = vsyncadd [#allocation7], 0
      %s3692 = sshll.u32 [#allocation14], 4
      %s3693 = int_to_ptr.vmem [resolvable:$true] %s3692
      %s3694 = sshll.u32 %s6, 4
      %s3695 = int_to_ptr.hbm [resolvable:$true] %s3694
      %3700 = dma.vmem_to_hbm [thread:$0]  %s3693, 1024, %s3695, [#allocation7], 128, 128, 8
    $region49: #{tpu_custom_call.1} parent=1 // pred_fallthru
      _
    // Predicated region
    $region50: #{tpu_custom_call.1} parent=1 // pred_check
      _
    $region51: #{tpu_custom_call.1} parent=1 // pred_check_branch
      %3702 = sbr.rel (0) target = $region53
    $region52: #{tpu_custom_call.1} parent=1 // pred_region
      %3704 = dma.done [#allocation7], 1024
    $region53: #{tpu_custom_call.1} parent=1 // pred_fallthru
      _
    %3705 = vsyncpa [#allocation6], 1
    %3706 = vsyncpa [#allocation9], 1
    %3707 = vsyncpa [#allocation12], 1
    %3708 = vsyncpa [#allocation7], 1

</llo_original>
